<compile_context>
chip_gen: v5e
topology: v5e:2x2
jax: 0.10.0
libtpu: 0.0.40
codegen_flags: <defaults>
</compile_context>

<pallas_src>
import functools

import jax
import jax.numpy as jnp
from jax import lax
from jax.experimental import pallas as pl
from jax.experimental.pallas import tpu as pltpu

BN_EPS = 1e-3  # matches BatchNorm2d(eps=0.001)

# Set to jnp.bfloat16 on v6e/v7x to halve HBM bytes for the x / W streams and use the
# native bf16 MXU (accumulation and all BN math stay fp32).  Kept fp32 here so the
# output matches the fp32 PyTorch module within 1e-4.
MXU_DTYPE = jnp.float32


def _pick_tk(cin):
    """Largest K-tile (multiple of 128) that divides Cin evenly."""
    for tk in (512, 384, 256, 128):
        if cin % tk == 0:
            return tk
    return cin


def _matmul_stats_kernel(x_ref, w_ref, gamma_ref, beta_ref,
                         y_ref, a_ref, b_ref,
                         acc_ref, sum_ref, sq_ref,
                         *, inv_count, eps):
    # Grid: (N, K_tiles).  K (Cin) is the reduction axis (last / innermost).
    n = pl.program_id(0)
    k = pl.program_id(1)
    last_n = pl.num_programs(0) - 1
    last_k = pl.num_programs(1) - 1

    # Global BN-statistics accumulators: init once at the very first grid step.
    @pl.when(jnp.logical_and(n == 0, k == 0))
    def _():
        sum_ref[...] = jnp.zeros_like(sum_ref)
        sq_ref[...] = jnp.zeros_like(sq_ref)

    # Per-sample matmul accumulator: init at the start of each K sweep.
    @pl.when(k == 0)
    def _():
        acc_ref[...] = jnp.zeros_like(acc_ref)

    # 1x1 conv, NCHW-native: (Cout, TK) @ (TK, HW) on the MXU, fp32 accumulate.
    acc_ref[...] += jnp.dot(w_ref[...], x_ref[0],
                            preferred_element_type=jnp.float32)

    # End of the K sweep: emit raw y for this sample and fold its per-channel
    # sum / sum-of-squares into the global accumulators.
    @pl.when(k == last_k)
    def _():
        y = acc_ref[...]
        y_ref[0] = y.astype(y_ref.dtype)
        sum_ref[...] += jnp.sum(y, axis=1, keepdims=True)
        sq_ref[...] += jnp.sum(y * y, axis=1, keepdims=True)

    # Very last grid step: finalize BN coefficients once per channel
    # (a = gamma*rsqrt(var+eps), b = beta - mean*a) so phase 2 is a single FMA/elem.
    @pl.when(jnp.logical_and(n == last_n, k == last_k))
    def _():
        mean = sum_ref[...] * inv_count
        var = sq_ref[...] * inv_count - mean * mean
        a = gamma_ref[...] * lax.rsqrt(var + eps)
        a_ref[...] = a
        b_ref[...] = beta_ref[...] - mean * a


def _bn_apply_kernel(y_ref, a_ref, b_ref, o_ref):
    # In-place normalize (o aliases y): one FMA per element, per-channel broadcast.
    o_ref[...] = y_ref[...] * a_ref[...] + b_ref[...]


@jax.jit
def fused_mul_conv_bn(x_nchw, scale_nc11, w_oi11, gamma, beta):
    """x_nchw: (N, Cin, H, W); scale_nc11: (1, Cin, 1, 1); w_oi11: (Cout, Cin, 1, 1)."""
    N, Cin, H, W = x_nchw.shape
    Cout = w_oi11.shape[0]
    HW = H * W
    M = N * HW

    # NCHW-native: reshapes only (no HBM-round-trip transposes).
    x3d = x_nchw.reshape(N, Cin, HW)
    # Fold the per-channel multiplier into the conv weight (done once, O(Cin*Cout)).
    w_scaled = w_oi11.reshape(Cout, Cin) * scale_nc11.reshape(1, Cin)

    if MXU_DTYPE != jnp.float32:
        x3d = x3d.astype(MXU_DTYPE)
        w_scaled = w_scaled.astype(MXU_DTYPE)

    g = gamma.reshape(Cout, 1).astype(jnp.float32)
    b = beta.reshape(Cout, 1).astype(jnp.float32)

    TK = _pick_tk(Cin)
    kt = Cin // TK

    kernel_a = functools.partial(_matmul_stats_kernel,
                                 inv_count=1.0 / M, eps=BN_EPS)

    # Phase 1: K-tiled matmul + global BN statistics + BN coefficient finalize.
    y, a_vec, b_vec = pl.pallas_call(
        kernel_a,
        out_shape=(
            jax.ShapeDtypeStruct((N, Cout, HW), jnp.float32),
            jax.ShapeDtypeStruct((Cout, 1), jnp.float32),
            jax.ShapeDtypeStruct((Cout, 1), jnp.float32),
        ),
        grid=(N, kt),
        in_specs=[
            pl.BlockSpec((1, TK, HW), lambda n, k: (n, k, 0)),   # x tile
            pl.BlockSpec((Cout, TK), lambda n, k: (0, k)),       # scale-folded weight tile
            pl.BlockSpec((Cout, 1), lambda n, k: (0, 0)),        # gamma
            pl.BlockSpec((Cout, 1), lambda n, k: (0, 0)),        # beta
        ],
        out_specs=(
            pl.BlockSpec((1, Cout, HW), lambda n, k: (n, 0, 0)),  # raw y (resident over k)
            pl.BlockSpec((Cout, 1), lambda n, k: (0, 0)),         # a = gamma*rsqrt(var+eps)
            pl.BlockSpec((Cout, 1), lambda n, k: (0, 0)),         # b = beta - mean*a
        ),
        scratch_shapes=[
            pltpu.VMEM((Cout, HW), jnp.float32),   # matmul accumulator
            pltpu.VMEM((Cout, 1), jnp.float32),    # global per-channel sum
            pltpu.VMEM((Cout, 1), jnp.float32),    # global per-channel sum of squares
        ],
        compiler_params=pltpu.CompilerParams(
            dimension_semantics=("arbitrary", "arbitrary")),
    )(x3d, w_scaled, g, b)

    # Phase 2: normalize y in place (output aliases the y buffer).
    out3d = pl.pallas_call(
        _bn_apply_kernel,
        out_shape=jax.ShapeDtypeStruct((N, Cout, HW), jnp.float32),
        grid=(N,),
        in_specs=[
            pl.BlockSpec((1, Cout, HW), lambda n: (n, 0, 0)),
            pl.BlockSpec((Cout, 1), lambda n: (0, 0)),
            pl.BlockSpec((Cout, 1), lambda n: (0, 0)),
        ],
        out_specs=pl.BlockSpec((1, Cout, HW), lambda n: (n, 0, 0)),
        input_output_aliases={0: 0},
        compiler_params=pltpu.CompilerParams(
            dimension_semantics=("parallel",)),
    )(y, a_vec, b_vec)

    return out3d.reshape(N, Cout, H, W)


def reference(x_nchw, scale_nc11, w_oi11, gamma, beta):
    """Pure-JAX reference of the PyTorch forward (training-mode BN)."""
    x = x_nchw * scale_nc11
    y = jnp.einsum("nchw,oc->nohw", x, w_oi11[:, :, 0, 0])
    mean = jnp.mean(y, axis=(0, 2, 3), keepdims=True)
    var = jnp.mean((y - mean) ** 2, axis=(0, 2, 3), keepdims=True)
    y_hat = (y - mean) / jnp.sqrt(var + BN_EPS)
    return y_hat * gamma.reshape(1, -1, 1, 1) + beta.reshape(1, -1, 1, 1)


if __name__ == "__main__":
    # Exact module shapes: x497 (1,1536,7,7), x502 (1,1536,1,1), Conv2d 1536->256 1x1.
    N, Cin, Cout, H, W = 1, 1536, 256, 7, 7

    key = jax.random.PRNGKey(0)
    k_x, k_s, k_w = jax.random.split(key, 3)

    x497 = jax.random.normal(k_x, (N, Cin, H, W), dtype=jnp.float32)   # activations
    x502 = jax.random.normal(k_s, (1, Cin, 1, 1), dtype=jnp.float32)   # per-channel multiplier
    conv_w = jax.random.normal(k_w, (Cout, Cin, 1, 1), dtype=jnp.float32) * 0.02
    bn_gamma = jnp.ones((Cout,), dtype=jnp.float32)   # PyTorch BatchNorm2d default init
    bn_beta = jnp.zeros((Cout,), dtype=jnp.float32)

    out = fused_mul_conv_bn(x497, x502, conv_w, bn_gamma, bn_beta)
    out = jax.block_until_ready(out)

    ref = reference(x497, x502, conv_w, bn_gamma, bn_beta)
    assert out.shape == (N, Cout, H, W)
    assert jnp.allclose(out, ref, atol=1e-4, rtol=1e-4), "mismatch vs reference"

    print("KERNEL_OK")
</pallas_src>

<mosaic_0001>
module attributes {stable_mosaic.version = 11 : i64} {
  func.func @_bn_apply_kernel(%arg0: i32, %arg1: memref<1x256x49xf32, #tpu.memory_space<vmem>>, %arg2: memref<256x1xf32, #tpu.memory_space<vmem>>, %arg3: memref<256x1xf32, #tpu.memory_space<vmem>>, %arg4: memref<1x256x49xf32, #tpu.memory_space<vmem>>) attributes {dimension_semantics = [#tpu.dimension_semantics<parallel>], iteration_bounds = array<i64: 1>, scalar_prefetch = 0 : i64, scratch_operands = 0 : i64, tpu.core_type = #tpu.core_type<tc>, window_params = [{transform_indices = @transform_0, window_bounds = array<i64: 1, 256, 49>}, {pipeline_mode = #tpu.pipeline_mode<synchronous>, transform_indices = @transform_1, window_bounds = array<i64: 256, 1>}, {pipeline_mode = #tpu.pipeline_mode<synchronous>, transform_indices = @transform_2, window_bounds = array<i64: 256, 1>}, {transform_indices = @transform_3, window_bounds = array<i64: 1, 256, 49>}]} {
    %c0 = arith.constant 0 : index
    %c0_0 = arith.constant 0 : index
    %c0_1 = arith.constant 0 : index
    %0 = vector.load %arg1[%c0, %c0_0, %c0_1] : memref<1x256x49xf32, #tpu.memory_space<vmem>>, vector<1x256x49xf32>
    %c0_2 = arith.constant 0 : index
    %c0_3 = arith.constant 0 : index
    %1 = vector.load %arg2[%c0_2, %c0_3] : memref<256x1xf32, #tpu.memory_space<vmem>>, vector<256x1xf32>
    %2 = vector.shape_cast %1 : vector<256x1xf32> to vector<1x256x1xf32>
    %3 = vector.broadcast %2 : vector<1x256x1xf32> to vector<1x256x49xf32>
    %4 = arith.mulf %0, %3 : vector<1x256x49xf32>
    %c0_4 = arith.constant 0 : index
    %c0_5 = arith.constant 0 : index
    %5 = vector.load %arg3[%c0_4, %c0_5] : memref<256x1xf32, #tpu.memory_space<vmem>>, vector<256x1xf32>
    %6 = vector.shape_cast %5 : vector<256x1xf32> to vector<1x256x1xf32>
    %7 = vector.broadcast %6 : vector<1x256x1xf32> to vector<1x256x49xf32>
    %8 = arith.addf %4, %7 : vector<1x256x49xf32>
    %c0_6 = arith.constant 0 : index
    %c0_7 = arith.constant 0 : index
    %c0_8 = arith.constant 0 : index
    %9 = vector.load %arg4[%c0_6, %c0_7, %c0_8] : memref<1x256x49xf32, #tpu.memory_space<vmem>>, vector<1x256x49xf32>
    tpu.vector_store %arg4[%c0_6, %c0_7, %c0_8], %8 {strides = array<i32>} : memref<1x256x49xf32, #tpu.memory_space<vmem>>, vector<1x256x49xf32>,
    return
  }
  func.func @transform_0(%arg0: i32) -> (i32, i32, i32) {
    %c0_i32 = arith.constant 0 : i32
    %c0_i32_0 = arith.constant 0 : i32
    %c0_i32_1 = arith.constant 0 : i32
    return %arg0, %c0_i32, %c0_i32_0 : i32, i32, i32
  }
  func.func @transform_1(%arg0: i32) -> (i32, i32) {
    %c0_i32 = arith.constant 0 : i32
    %c0_i32_0 = arith.constant 0 : i32
    %c0_i32_1 = arith.constant 0 : i32
    return %c0_i32, %c0_i32_0 : i32, i32
  }
  func.func @transform_2(%arg0: i32) -> (i32, i32) {
    %c0_i32 = arith.constant 0 : i32
    %c0_i32_0 = arith.constant 0 : i32
    %c0_i32_1 = arith.constant 0 : i32
    return %c0_i32, %c0_i32_0 : i32, i32
  }
  func.func @transform_3(%arg0: i32) -> (i32, i32, i32) {
    %c0_i32 = arith.constant 0 : i32
    %c0_i32_0 = arith.constant 0 : i32
    %c0_i32_1 = arith.constant 0 : i32
    return %arg0, %c0_i32, %c0_i32_0 : i32, i32, i32
  }
}

module attributes {stable_mosaic.version = 11 : i64} {
  func.func @_matmul_stats_kernel(%arg0: i32, %arg1: i32, %arg2: memref<1x512x49xf32, #tpu.memory_space<vmem>>, %arg3: memref<256x512xf32, #tpu.memory_space<vmem>>, %arg4: memref<256x1xf32, #tpu.memory_space<vmem>>, %arg5: memref<256x1xf32, #tpu.memory_space<vmem>>, %arg6: memref<1x256x49xf32, #tpu.memory_space<vmem>>, %arg7: memref<256x1xf32, #tpu.memory_space<vmem>>, %arg8: memref<256x1xf32, #tpu.memory_space<vmem>>, %arg9: memref<256x49xf32, #tpu.memory_space<vmem>>, %arg10: memref<256x1xf32, #tpu.memory_space<vmem>>, %arg11: memref<256x1xf32, #tpu.memory_space<vmem>>) attributes {dimension_semantics = [#tpu.dimension_semantics<arbitrary>, #tpu.dimension_semantics<arbitrary>], iteration_bounds = array<i64: 1, 3>, scalar_prefetch = 0 : i64, scratch_operands = 3 : i64, tpu.core_type = #tpu.core_type<tc>, window_params = [{transform_indices = @transform_0, window_bounds = array<i64: 1, 512, 49>}, {transform_indices = @transform_1, window_bounds = array<i64: 256, 512>}, {pipeline_mode = #tpu.pipeline_mode<synchronous>, transform_indices = @transform_2, window_bounds = array<i64: 256, 1>}, {pipeline_mode = #tpu.pipeline_mode<synchronous>, transform_indices = @transform_3, window_bounds = array<i64: 256, 1>}, {transform_indices = @transform_4, window_bounds = array<i64: 1, 256, 49>}, {pipeline_mode = #tpu.pipeline_mode<synchronous>, transform_indices = @transform_5, window_bounds = array<i64: 256, 1>}, {pipeline_mode = #tpu.pipeline_mode<synchronous>, transform_indices = @transform_6, window_bounds = array<i64: 256, 1>}]} {
    %c0_i32 = arith.constant 0 : i32
    %0 = arith.cmpi eq, %arg0, %c0_i32 : i32
    %c0_i32_0 = arith.constant 0 : i32
    %1 = arith.cmpi eq, %arg1, %c0_i32_0 : i32
    %2 = arith.andi %0, %1 : i1
    %3 = arith.extui %2 : i1 to i32
    %c0_i32_1 = arith.constant 0 : i32
    %4 = arith.cmpi ne, %3, %c0_i32_1 : i32
    scf.if %4 {
      %cst_16 = arith.constant 0.000000e+00 : f32
      %23 = vector.broadcast %cst_16 : f32 to vector<256x1xf32>
      %c0_17 = arith.constant 0 : index
      %c0_18 = arith.constant 0 : index
      %24 = vector.load %arg10[%c0_17, %c0_18] : memref<256x1xf32, #tpu.memory_space<vmem>>, vector<256x1xf32>
      tpu.vector_store %arg10[%c0_17, %c0_18], %23 {strides = array<i32>} : memref<256x1xf32, #tpu.memory_space<vmem>>, vector<256x1xf32>,
      %cst_19 = arith.constant 0.000000e+00 : f32
      %25 = vector.broadcast %cst_19 : f32 to vector<256x1xf32>
      %c0_20 = arith.constant 0 : index
      %c0_21 = arith.constant 0 : index
      %26 = vector.load %arg11[%c0_20, %c0_21] : memref<256x1xf32, #tpu.memory_space<vmem>>, vector<256x1xf32>
      tpu.vector_store %arg11[%c0_20, %c0_21], %25 {strides = array<i32>} : memref<256x1xf32, #tpu.memory_space<vmem>>, vector<256x1xf32>,
    } else {
    }
    %c0_i32_2 = arith.constant 0 : i32
    %5 = arith.cmpi eq, %arg1, %c0_i32_2 : i32
    %6 = arith.extui %5 : i1 to i32
    %c0_i32_3 = arith.constant 0 : i32
    %7 = arith.cmpi ne, %6, %c0_i32_3 : i32
    scf.if %7 {
      %cst_16 = arith.constant 0.000000e+00 : f32
      %23 = vector.broadcast %cst_16 : f32 to vector<256x49xf32>
      %c0_17 = arith.constant 0 : index
      %c0_18 = arith.constant 0 : index
      %24 = vector.load %arg9[%c0_17, %c0_18] : memref<256x49xf32, #tpu.memory_space<vmem>>, vector<256x49xf32>
      tpu.vector_store %arg9[%c0_17, %c0_18], %23 {strides = array<i32>} : memref<256x49xf32, #tpu.memory_space<vmem>>, vector<256x49xf32>,
    } else {
    }
    %c0 = arith.constant 0 : index
    %c0_4 = arith.constant 0 : index
    %8 = vector.load %arg9[%c0, %c0_4] : memref<256x49xf32, #tpu.memory_space<vmem>>, vector<256x49xf32>
    %c0_5 = arith.constant 0 : index
    %c0_6 = arith.constant 0 : index
    %9 = vector.load %arg3[%c0_5, %c0_6] : memref<256x512xf32, #tpu.memory_space<vmem>>, vector<256x512xf32>
    %c0_7 = arith.constant 0 : index
    %c0_8 = arith.constant 0 : index
    %c0_9 = arith.constant 0 : index
    %10 = vector.load %arg2[%c0_7, %c0_8, %c0_9] : memref<1x512x49xf32, #tpu.memory_space<vmem>>, vector<1x512x49xf32>
    %11 = vector.shape_cast %10 : vector<1x512x49xf32> to vector<512x49xf32>
    %cst = arith.constant dense<0.000000e+00> : vector<256x49xf32>
    %12 = tpu.matmul %9, %11, %cst {dimension_numbers = #tpu.dot_dimension_numbers<[1], [0], [0], [1], [0, 0, 1, 1], [], []>} : vector<256x512xf32>, vector<512x49xf32>, vector<256x49xf32> -> vector<256x49xf32>
    %13 = arith.addf %8, %12 : vector<256x49xf32>
    %c0_10 = arith.constant 0 : index
    %c0_11 = arith.constant 0 : index
    %14 = vector.load %arg9[%c0_10, %c0_11] : memref<256x49xf32, #tpu.memory_space<vmem>>, vector<256x49xf32>
    tpu.vector_store %arg9[%c0_10, %c0_11], %13 {strides = array<i32>} : memref<256x49xf32, #tpu.memory_space<vmem>>, vector<256x49xf32>,
    %c2_i32 = arith.constant 2 : i32
    %15 = arith.cmpi eq, %arg1, %c2_i32 : i32
    %16 = arith.extui %15 : i1 to i32
    %c0_i32_12 = arith.constant 0 : i32
    %17 = arith.cmpi ne, %16, %c0_i32_12 : i32
    scf.if %17 {
      %c0_16 = arith.constant 0 : index
      %c0_17 = arith.constant 0 : index
      %23 = vector.load %arg9[%c0_16, %c0_17] : memref<256x49xf32, #tpu.memory_space<vmem>>, vector<256x49xf32>
      %c0_18 = arith.constant 0 : index
      %c0_19 = arith.constant 0 : index
      %c0_20 = arith.constant 0 : index
      %24 = vector.load %arg6[%c0_18, %c0_19, %c0_20] : memref<1x256x49xf32, #tpu.memory_space<vmem>>, vector<1x256x49xf32>
      %25 = vector.shape_cast %24 : vector<1x256x49xf32> to vector<256x49xf32>
      %26 = vector.shape_cast %23 : vector<256x49xf32> to vector<1x256x49xf32>
      tpu.vector_store %arg6[%c0_18, %c0_19, %c0_20], %26 {strides = array<i32>} : memref<1x256x49xf32, #tpu.memory_space<vmem>>, vector<1x256x49xf32>,
      %c0_21 = arith.constant 0 : index
      %c0_22 = arith.constant 0 : index
      %27 = vector.load %arg10[%c0_21, %c0_22] : memref<256x1xf32, #tpu.memory_space<vmem>>, vector<256x1xf32>
      %cst_23 = arith.constant dense<0.000000e+00> : vector<256xf32>
      %28 = vector.multi_reduction <add>, %23, %cst_23 [1] : vector<256x49xf32> to vector<256xf32>
      %29 = vector.shape_cast %28 : vector<256xf32> to vector<256x1xf32>
      %30 = arith.addf %27, %29 : vector<256x1xf32>
      %c0_24 = arith.constant 0 : index
      %c0_25 = arith.constant 0 : index
      %31 = vector.load %arg10[%c0_24, %c0_25] : memref<256x1xf32, #tpu.memory_space<vmem>>, vector<256x1xf32>
      tpu.vector_store %arg10[%c0_24, %c0_25], %30 {strides = array<i32>} : memref<256x1xf32, #tpu.memory_space<vmem>>, vector<256x1xf32>,
      %c0_26 = arith.constant 0 : index
      %c0_27 = arith.constant 0 : index
      %32 = vector.load %arg11[%c0_26, %c0_27] : memref<256x1xf32, #tpu.memory_space<vmem>>, vector<256x1xf32>
      %33 = arith.mulf %23, %23 : vector<256x49xf32>
      %cst_28 = arith.constant dense<0.000000e+00> : vector<256xf32>
      %34 = vector.multi_reduction <add>, %33, %cst_28 [1] : vector<256x49xf32> to vector<256xf32>
      %35 = vector.shape_cast %34 : vector<256xf32> to vector<256x1xf32>
      %36 = arith.addf %32, %35 : vector<256x1xf32>
      %c0_29 = arith.constant 0 : index
      %c0_30 = arith.constant 0 : index
      %37 = vector.load %arg11[%c0_29, %c0_30] : memref<256x1xf32, #tpu.memory_space<vmem>>, vector<256x1xf32>
      tpu.vector_store %arg11[%c0_29, %c0_30], %36 {strides = array<i32>} : memref<256x1xf32, #tpu.memory_space<vmem>>, vector<256x1xf32>,
    } else {
    }
    %c0_i32_13 = arith.constant 0 : i32
    %18 = arith.cmpi eq, %arg0, %c0_i32_13 : i32
    %c2_i32_14 = arith.constant 2 : i32
    %19 = arith.cmpi eq, %arg1, %c2_i32_14 : i32
    %20 = arith.andi %18, %19 : i1
    %21 = arith.extui %20 : i1 to i32
    %c0_i32_15 = arith.constant 0 : i32
    %22 = arith.cmpi ne, %21, %c0_i32_15 : i32
    scf.if %22 {
      %c0_16 = arith.constant 0 : index
      %c0_17 = arith.constant 0 : index
      %23 = vector.load %arg10[%c0_16, %c0_17] : memref<256x1xf32, #tpu.memory_space<vmem>>, vector<256x1xf32>
      %cst_18 = arith.constant 0.0204081628 : f32
      %24 = vector.broadcast %cst_18 : f32 to vector<256x1xf32>
      %25 = arith.mulf %23, %24 : vector<256x1xf32>
      %c0_19 = arith.constant 0 : index
      %c0_20 = arith.constant 0 : index
      %26 = vector.load %arg11[%c0_19, %c0_20] : memref<256x1xf32, #tpu.memory_space<vmem>>, vector<256x1xf32>
      %cst_21 = arith.constant 0.0204081628 : f32
      %27 = vector.broadcast %cst_21 : f32 to vector<256x1xf32>
      %28 = arith.mulf %26, %27 : vector<256x1xf32>
      %29 = arith.mulf %25, %25 : vector<256x1xf32>
      %30 = arith.subf %28, %29 : vector<256x1xf32>
      %c0_22 = arith.constant 0 : index
      %c0_23 = arith.constant 0 : index
      %31 = vector.load %arg4[%c0_22, %c0_23] : memref<256x1xf32, #tpu.memory_space<vmem>>, vector<256x1xf32>
      %cst_24 = arith.constant 1.000000e-03 : f32
      %32 = vector.broadcast %cst_24 : f32 to vector<256x1xf32>
      %33 = arith.addf %30, %32 : vector<256x1xf32>
      %34 = math.rsqrt %33 : vector<256x1xf32>
      %35 = arith.mulf %31, %34 : vector<256x1xf32>
      %c0_25 = arith.constant 0 : index
      %c0_26 = arith.constant 0 : index
      %36 = vector.load %arg7[%c0_25, %c0_26] : memref<256x1xf32, #tpu.memory_space<vmem>>, vector<256x1xf32>
      tpu.vector_store %arg7[%c0_25, %c0_26], %35 {strides = array<i32>} : memref<256x1xf32, #tpu.memory_space<vmem>>, vector<256x1xf32>,
      %c0_27 = arith.constant 0 : index
      %c0_28 = arith.constant 0 : index
      %37 = vector.load %arg5[%c0_27, %c0_28] : memref<256x1xf32, #tpu.memory_space<vmem>>, vector<256x1xf32>
      %38 = arith.mulf %25, %35 : vector<256x1xf32>
      %39 = arith.subf %37, %38 : vector<256x1xf32>
      %c0_29 = arith.constant 0 : index
      %c0_30 = arith.constant 0 : index
      %40 = vector.load %arg8[%c0_29, %c0_30] : memref<256x1xf32, #tpu.memory_space<vmem>>, vector<256x1xf32>
      tpu.vector_store %arg8[%c0_29, %c0_30], %39 {strides = array<i32>} : memref<256x1xf32, #tpu.memory_space<vmem>>, vector<256x1xf32>,
    } else {
    }
    return
  }
  func.func @transform_0(%arg0: i32, %arg1: i32) -> (i32, i32, i32) {
    %c0_i32 = arith.constant 0 : i32
    %c0_i32_0 = arith.constant 0 : i32
    return %arg0, %arg1, %c0_i32 : i32, i32, i32
  }
  func.func @transform_1(%arg0: i32, %arg1: i32) -> (i32, i32) {
    %c0_i32 = arith.constant 0 : i32
    %c0_i32_0 = arith.constant 0 : i32
    return %c0_i32, %arg1 : i32, i32
  }
  func.func @transform_2(%arg0: i32, %arg1: i32) -> (i32, i32) {
    %c0_i32 = arith.constant 0 : i32
    %c0_i32_0 = arith.constant 0 : i32
    %c0_i32_1 = arith.constant 0 : i32
    return %c0_i32, %c0_i32_0 : i32, i32
  }
  func.func @transform_3(%arg0: i32, %arg1: i32) -> (i32, i32) {
    %c0_i32 = arith.constant 0 : i32
    %c0_i32_0 = arith.constant 0 : i32
    %c0_i32_1 = arith.constant 0 : i32
    return %c0_i32, %c0_i32_0 : i32, i32
  }
  func.func @transform_4(%arg0: i32, %arg1: i32) -> (i32, i32, i32) {
    %c0_i32 = arith.constant 0 : i32
    %c0_i32_0 = arith.constant 0 : i32
    %c0_i32_1 = arith.constant 0 : i32
    return %arg0, %c0_i32, %c0_i32_0 : i32, i32, i32
  }
  func.func @transform_5(%arg0: i32, %arg1: i32) -> (i32, i32) {
    %c0_i32 = arith.constant 0 : i32
    %c0_i32_0 = arith.constant 0 : i32
    %c0_i32_1 = arith.constant 0 : i32
    return %c0_i32, %c0_i32_0 : i32, i32
  }
  func.func @transform_6(%arg0: i32, %arg1: i32) -> (i32, i32) {
    %c0_i32 = arith.constant 0 : i32
    %c0_i32_0 = arith.constant 0 : i32
    %c0_i32_1 = arith.constant 0 : i32
    return %c0_i32, %c0_i32_0 : i32, i32
  }
}

</mosaic_0001>

<llo_original>
// kernel: fused_mul_conv_bn.3
$region0: #{fused_mul_conv_bn.3}
  #allocation0 [shape = 'u32[]', space=smem, size = 0x4, offset = 0x4, fixed_abs, tag = 'smem constant byte address 0x4 - core index']
  #allocation1 [shape = 'u32[72,128]{1,0:T(1,128)}', space=vmem, size = 0x9000, scoped, tag = 'internal scratch']
  %s0 = inlined_call_operand.vmem [shape: f32[1,256,49], index: 0, kind: input, shape index: {}, may-alias: {0,3}]
  %s1 = inlined_call_operand.vmem [shape: f32[256,1], index: 1, kind: input, shape index: {}]
  %s2 = inlined_call_operand.vmem [shape: f32[256,1], index: 2, kind: input, shape index: {}]
  %s3 = inlined_call_operand.vmem [shape: f32[1,256,49], index: 3, kind: output, shape index: {}, may-alias: {0,3}]
  %s4 = sld [smem:[#allocation0]]
  $region22: #{fused_mul_conv_bn.3} parent=0
    _
  %s6 = ssub.s32 1, %s4
  %s7 = scalar_select 0, %s6, %s4
  // Predicated region
  $region2: #{fused_mul_conv_bn.3} parent=0 // pred_check
    _
  $region3: #{fused_mul_conv_bn.3} parent=0 // pred_check_branch
    %9 = sbr.rel (0) target = $region5
  $region4: #{fused_mul_conv_bn.3} parent=0 // pred_region
    _
  $region5: #{fused_mul_conv_bn.3} parent=0 // pred_fallthru
    _
  // Predicated region
  $region6: #{fused_mul_conv_bn.3} parent=0 // pred_check
    _
  $region7: #{fused_mul_conv_bn.3} parent=0 // pred_check_branch
    %11 = sbr.rel (0) target = $region9
  $region8: #{fused_mul_conv_bn.3} parent=0 // pred_region
    _
  $region9: #{fused_mul_conv_bn.3} parent=0 // pred_fallthru
    _
  // Predicated region
  $region10: #{fused_mul_conv_bn.3} parent=0 // pred_check
    _
  $region11: #{fused_mul_conv_bn.3} parent=0 // pred_check_branch
    %13 = sbr.rel (0) target = $region13
  $region12: #{fused_mul_conv_bn.3} parent=0 // pred_region
    _
  $region13: #{fused_mul_conv_bn.3} parent=0 // pred_fallthru
    _
  %v14 = vld [vmem:[%s0] sm:$0xff]
  %v15 = vld [vmem:[%s0 + $0x8] sm:$0xff]
  %v16 = vld [vmem:[%s0 + $0x10] sm:$0xff]
  %v17 = vld [vmem:[%s0 + $0x18] sm:$0xff]
  %v18 = vld [vmem:[%s0 + $0x20] sm:$0xff]
  %v19 = vld [vmem:[%s0 + $0x28] sm:$0xff]
  %v20 = vld [vmem:[%s0 + $0x30] sm:$0xff]
  %v21 = vld [vmem:[%s0 + $0x38] sm:$0xff]
  %v22 = vld [vmem:[%s0 + $0x40] sm:$0xff]
  %v23 = vld [vmem:[%s0 + $0x48] sm:$0xff]
  %v24 = vld [vmem:[%s0 + $0x50] sm:$0xff]
  %v25 = vld [vmem:[%s0 + $0x58] sm:$0xff]
  %v26 = vld [vmem:[%s0 + $0x60] sm:$0xff]
  %v27 = vld [vmem:[%s0 + $0x68] sm:$0xff]
  %v28 = vld [vmem:[%s0 + $0x70] sm:$0xff]
  %v29 = vld [vmem:[%s0 + $0x78] sm:$0xff]
  %v30 = vld [vmem:[%s0 + $0x80] sm:$0xff]
  %v31 = vld [vmem:[%s0 + $0x88] sm:$0xff]
  %v32 = vld [vmem:[%s0 + $0x90] sm:$0xff]
  %v33 = vld [vmem:[%s0 + $0x98] sm:$0xff]
  %v34 = vld [vmem:[%s0 + $0xa0] sm:$0xff]
  %v35 = vld [vmem:[%s0 + $0xa8] sm:$0xff]
  %v36 = vld [vmem:[%s0 + $0xb0] sm:$0xff]
  %v37 = vld [vmem:[%s0 + $0xb8] sm:$0xff]
  %v38 = vld [vmem:[%s0 + $0xc0] sm:$0xff]
  %v39 = vld [vmem:[%s0 + $0xc8] sm:$0xff]
  %v40 = vld [vmem:[%s0 + $0xd0] sm:$0xff]
  %v41 = vld [vmem:[%s0 + $0xd8] sm:$0xff]
  %v42 = vld [vmem:[%s0 + $0xe0] sm:$0xff]
  %v43 = vld [vmem:[%s0 + $0xe8] sm:$0xff]
  %v44 = vld [vmem:[%s0 + $0xf0] sm:$0xff]
  %v45 = vld [vmem:[%s0 + $0xf8] sm:$0xff]
  %v46 = vld [vmem:[%s1] sm:$0xff]
  %v47 = vld [vmem:[%s1 + $0x8] sm:$0xff]
  %v48 = vld [vmem:[%s1 + $0x10] sm:$0xff]
  %v49 = vld [vmem:[%s1 + $0x18] sm:$0xff]
  %v50 = vld [vmem:[%s1 + $0x20] sm:$0xff]
  %v51 = vld [vmem:[%s1 + $0x28] sm:$0xff]
  %v52 = vld [vmem:[%s1 + $0x30] sm:$0xff]
  %v53 = vld [vmem:[%s1 + $0x38] sm:$0xff]
  %v54 = vld [vmem:[%s1 + $0x40] sm:$0xff]
  %v55 = vld [vmem:[%s1 + $0x48] sm:$0xff]
  %v56 = vld [vmem:[%s1 + $0x50] sm:$0xff]
  %v57 = vld [vmem:[%s1 + $0x58] sm:$0xff]
  %v58 = vld [vmem:[%s1 + $0x60] sm:$0xff]
  %v59 = vld [vmem:[%s1 + $0x68] sm:$0xff]
  %v60 = vld [vmem:[%s1 + $0x70] sm:$0xff]
  %v61 = vld [vmem:[%s1 + $0x78] sm:$0xff]
  %v62 = vld [vmem:[%s1 + $0x80] sm:$0xff]
  %v63 = vld [vmem:[%s1 + $0x88] sm:$0xff]
  %v64 = vld [vmem:[%s1 + $0x90] sm:$0xff]
  %v65 = vld [vmem:[%s1 + $0x98] sm:$0xff]
  %v66 = vld [vmem:[%s1 + $0xa0] sm:$0xff]
  %v67 = vld [vmem:[%s1 + $0xa8] sm:$0xff]
  %v68 = vld [vmem:[%s1 + $0xb0] sm:$0xff]
  %v69 = vld [vmem:[%s1 + $0xb8] sm:$0xff]
  %v70 = vld [vmem:[%s1 + $0xc0] sm:$0xff]
  %v71 = vld [vmem:[%s1 + $0xc8] sm:$0xff]
  %v72 = vld [vmem:[%s1 + $0xd0] sm:$0xff]
  %v73 = vld [vmem:[%s1 + $0xd8] sm:$0xff]
  %v74 = vld [vmem:[%s1 + $0xe0] sm:$0xff]
  %v75 = vld [vmem:[%s1 + $0xe8] sm:$0xff]
  %v76 = vld [vmem:[%s1 + $0xf0] sm:$0xff]
  %v77 = vld [vmem:[%s1 + $0xf8] sm:$0xff]
  %79 = vset.pattern.permute.xlu0 0
  %80 = vperm.xlu0 %79, %v46
  %v81 = vpop.permute.xlu0 %80
  %84 = vset.pattern.permute.xlu0 0
  %85 = vperm.xlu0 %84, %v47
  %v86 = vpop.permute.xlu0 %85
  %89 = vset.pattern.permute.xlu0 0
  %90 = vperm.xlu0 %89, %v48
  %v91 = vpop.permute.xlu0 %90
  %94 = vset.pattern.permute.xlu0 0
  %95 = vperm.xlu0 %94, %v49
  %v96 = vpop.permute.xlu0 %95
  %99 = vset.pattern.permute.xlu0 0
  %100 = vperm.xlu0 %99, %v50
  %v101 = vpop.permute.xlu0 %100
  %104 = vset.pattern.permute.xlu0 0
  %105 = vperm.xlu0 %104, %v51
  %v106 = vpop.permute.xlu0 %105
  %109 = vset.pattern.permute.xlu0 0
  %110 = vperm.xlu0 %109, %v52
  %v111 = vpop.permute.xlu0 %110
  %114 = vset.pattern.permute.xlu0 0
  %115 = vperm.xlu0 %114, %v53
  %v116 = vpop.permute.xlu0 %115
  %119 = vset.pattern.permute.xlu0 0
  %120 = vperm.xlu0 %119, %v54
  %v121 = vpop.permute.xlu0 %120
  %124 = vset.pattern.permute.xlu0 0
  %125 = vperm.xlu0 %124, %v55
  %v126 = vpop.permute.xlu0 %125
  %129 = vset.pattern.permute.xlu0 0
  %130 = vperm.xlu0 %129, %v56
  %v131 = vpop.permute.xlu0 %130
  %134 = vset.pattern.permute.xlu0 0
  %135 = vperm.xlu0 %134, %v57
  %v136 = vpop.permute.xlu0 %135
  %139 = vset.pattern.permute.xlu0 0
  %140 = vperm.xlu0 %139, %v58
  %v141 = vpop.permute.xlu0 %140
  %144 = vset.pattern.permute.xlu0 0
  %145 = vperm.xlu0 %144, %v59
  %v146 = vpop.permute.xlu0 %145
  %149 = vset.pattern.permute.xlu0 0
  %150 = vperm.xlu0 %149, %v60
  %v151 = vpop.permute.xlu0 %150
  %154 = vset.pattern.permute.xlu0 0
  %155 = vperm.xlu0 %154, %v61
  %v156 = vpop.permute.xlu0 %155
  %159 = vset.pattern.permute.xlu0 0
  %160 = vperm.xlu0 %159, %v62
  %v161 = vpop.permute.xlu0 %160
  %164 = vset.pattern.permute.xlu0 0
  %165 = vperm.xlu0 %164, %v63
  %v166 = vpop.permute.xlu0 %165
  %169 = vset.pattern.permute.xlu0 0
  %170 = vperm.xlu0 %169, %v64
  %v171 = vpop.permute.xlu0 %170
  %174 = vset.pattern.permute.xlu0 0
  %175 = vperm.xlu0 %174, %v65
  %v176 = vpop.permute.xlu0 %175
  %179 = vset.pattern.permute.xlu0 0
  %180 = vperm.xlu0 %179, %v66
  %v181 = vpop.permute.xlu0 %180
  %184 = vset.pattern.permute.xlu0 0
  %185 = vperm.xlu0 %184, %v67
  %v186 = vpop.permute.xlu0 %185
  %189 = vset.pattern.permute.xlu0 0
  %190 = vperm.xlu0 %189, %v68
  %v191 = vpop.permute.xlu0 %190
  %194 = vset.pattern.permute.xlu0 0
  %195 = vperm.xlu0 %194, %v69
  %v196 = vpop.permute.xlu0 %195
  %199 = vset.pattern.permute.xlu0 0
  %200 = vperm.xlu0 %199, %v70
  %v201 = vpop.permute.xlu0 %200
  %204 = vset.pattern.permute.xlu0 0
  %205 = vperm.xlu0 %204, %v71
  %v206 = vpop.permute.xlu0 %205
  %209 = vset.pattern.permute.xlu0 0
  %210 = vperm.xlu0 %209, %v72
  %v211 = vpop.permute.xlu0 %210
  %214 = vset.pattern.permute.xlu0 0
  %215 = vperm.xlu0 %214, %v73
  %v216 = vpop.permute.xlu0 %215
  %219 = vset.pattern.permute.xlu0 0
  %220 = vperm.xlu0 %219, %v74
  %v221 = vpop.permute.xlu0 %220
  %224 = vset.pattern.permute.xlu0 0
  %225 = vperm.xlu0 %224, %v75
  %v226 = vpop.permute.xlu0 %225
  %229 = vset.pattern.permute.xlu0 0
  %230 = vperm.xlu0 %229, %v76
  %v231 = vpop.permute.xlu0 %230
  %234 = vset.pattern.permute.xlu0 0
  %235 = vperm.xlu0 %234, %v77
  %v236 = vpop.permute.xlu0 %235
  %v238 = vmul.f32 %v14, %v81
  %v239 = vmul.f32 %v15, %v86
  %v240 = vmul.f32 %v16, %v91
  %v241 = vmul.f32 %v17, %v96
  %v242 = vmul.f32 %v18, %v101
  %v243 = vmul.f32 %v19, %v106
  %v244 = vmul.f32 %v20, %v111
  %v245 = vmul.f32 %v21, %v116
  %v246 = vmul.f32 %v22, %v121
  %v247 = vmul.f32 %v23, %v126
  %v248 = vmul.f32 %v24, %v131
  %v249 = vmul.f32 %v25, %v136
  %v250 = vmul.f32 %v26, %v141
  %v251 = vmul.f32 %v27, %v146
  %v252 = vmul.f32 %v28, %v151
  %v253 = vmul.f32 %v29, %v156
  %v254 = vmul.f32 %v30, %v161
  %v255 = vmul.f32 %v31, %v166
  %v256 = vmul.f32 %v32, %v171
  %v257 = vmul.f32 %v33, %v176
  %v258 = vmul.f32 %v34, %v181
  %v259 = vmul.f32 %v35, %v186
  %v260 = vmul.f32 %v36, %v191
  %v261 = vmul.f32 %v37, %v196
  %v262 = vmul.f32 %v38, %v201
  %v263 = vmul.f32 %v39, %v206
  %v264 = vmul.f32 %v40, %v211
  %v265 = vmul.f32 %v41, %v216
  %v266 = vmul.f32 %v42, %v221
  %v267 = vmul.f32 %v43, %v226
  %v268 = vmul.f32 %v44, %v231
  %v269 = vmul.f32 %v45, %v236
  %v270 = vld [vmem:[%s2] sm:$0xff]
  %v271 = vld [vmem:[%s2 + $0x8] sm:$0xff]
  %v272 = vld [vmem:[%s2 + $0x10] sm:$0xff]
  %v273 = vld [vmem:[%s2 + $0x18] sm:$0xff]
  %v274 = vld [vmem:[%s2 + $0x20] sm:$0xff]
  %v275 = vld [vmem:[%s2 + $0x28] sm:$0xff]
  %v276 = vld [vmem:[%s2 + $0x30] sm:$0xff]
  %v277 = vld [vmem:[%s2 + $0x38] sm:$0xff]
  %v278 = vld [vmem:[%s2 + $0x40] sm:$0xff]
  %v279 = vld [vmem:[%s2 + $0x48] sm:$0xff]
  %v280 = vld [vmem:[%s2 + $0x50] sm:$0xff]
  %v281 = vld [vmem:[%s2 + $0x58] sm:$0xff]
  %v282 = vld [vmem:[%s2 + $0x60] sm:$0xff]
  %v283 = vld [vmem:[%s2 + $0x68] sm:$0xff]
  %v284 = vld [vmem:[%s2 + $0x70] sm:$0xff]
  %v285 = vld [vmem:[%s2 + $0x78] sm:$0xff]
  %v286 = vld [vmem:[%s2 + $0x80] sm:$0xff]
  %v287 = vld [vmem:[%s2 + $0x88] sm:$0xff]
  %v288 = vld [vmem:[%s2 + $0x90] sm:$0xff]
  %v289 = vld [vmem:[%s2 + $0x98] sm:$0xff]
  %v290 = vld [vmem:[%s2 + $0xa0] sm:$0xff]
  %v291 = vld [vmem:[%s2 + $0xa8] sm:$0xff]
  %v292 = vld [vmem:[%s2 + $0xb0] sm:$0xff]
  %v293 = vld [vmem:[%s2 + $0xb8] sm:$0xff]
  %v294 = vld [vmem:[%s2 + $0xc0] sm:$0xff]
  %v295 = vld [vmem:[%s2 + $0xc8] sm:$0xff]
  %v296 = vld [vmem:[%s2 + $0xd0] sm:$0xff]
  %v297 = vld [vmem:[%s2 + $0xd8] sm:$0xff]
  %v298 = vld [vmem:[%s2 + $0xe0] sm:$0xff]
  %v299 = vld [vmem:[%s2 + $0xe8] sm:$0xff]
  %v300 = vld [vmem:[%s2 + $0xf0] sm:$0xff]
  %v301 = vld [vmem:[%s2 + $0xf8] sm:$0xff]
  %303 = vset.pattern.permute.xlu0 0
  %304 = vperm.xlu0 %303, %v270
  %v305 = vpop.permute.xlu0 %304
  %308 = vset.pattern.permute.xlu0 0
  %309 = vperm.xlu0 %308, %v271
  %v310 = vpop.permute.xlu0 %309
  %313 = vset.pattern.permute.xlu0 0
  %314 = vperm.xlu0 %313, %v272
  %v315 = vpop.permute.xlu0 %314
  %318 = vset.pattern.permute.xlu0 0
  %319 = vperm.xlu0 %318, %v273
  %v320 = vpop.permute.xlu0 %319
  %323 = vset.pattern.permute.xlu0 0
  %324 = vperm.xlu0 %323, %v274
  %v325 = vpop.permute.xlu0 %324
  %328 = vset.pattern.permute.xlu0 0
  %329 = vperm.xlu0 %328, %v275
  %v330 = vpop.permute.xlu0 %329
  %333 = vset.pattern.permute.xlu0 0
  %334 = vperm.xlu0 %333, %v276
  %v335 = vpop.permute.xlu0 %334
  %338 = vset.pattern.permute.xlu0 0
  %339 = vperm.xlu0 %338, %v277
  %v340 = vpop.permute.xlu0 %339
  %343 = vset.pattern.permute.xlu0 0
  %344 = vperm.xlu0 %343, %v278
  %v345 = vpop.permute.xlu0 %344
  %348 = vset.pattern.permute.xlu0 0
  %349 = vperm.xlu0 %348, %v279
  %v350 = vpop.permute.xlu0 %349
  %353 = vset.pattern.permute.xlu0 0
  %354 = vperm.xlu0 %353, %v280
  %v355 = vpop.permute.xlu0 %354
  %358 = vset.pattern.permute.xlu0 0
  %359 = vperm.xlu0 %358, %v281
  %v360 = vpop.permute.xlu0 %359
  %363 = vset.pattern.permute.xlu0 0
  %364 = vperm.xlu0 %363, %v282
  %v365 = vpop.permute.xlu0 %364
  %368 = vset.pattern.permute.xlu0 0
  %369 = vperm.xlu0 %368, %v283
  %v370 = vpop.permute.xlu0 %369
  %373 = vset.pattern.permute.xlu0 0
  %374 = vperm.xlu0 %373, %v284
  %v375 = vpop.permute.xlu0 %374
  %378 = vset.pattern.permute.xlu0 0
  %379 = vperm.xlu0 %378, %v285
  %v380 = vpop.permute.xlu0 %379
  %383 = vset.pattern.permute.xlu0 0
  %384 = vperm.xlu0 %383, %v286
  %v385 = vpop.permute.xlu0 %384
  %388 = vset.pattern.permute.xlu0 0
  %389 = vperm.xlu0 %388, %v287
  %v390 = vpop.permute.xlu0 %389
  %393 = vset.pattern.permute.xlu0 0
  %394 = vperm.xlu0 %393, %v288
  %v395 = vpop.permute.xlu0 %394
  %398 = vset.pattern.permute.xlu0 0
  %399 = vperm.xlu0 %398, %v289
  %v400 = vpop.permute.xlu0 %399
  %403 = vset.pattern.permute.xlu0 0
  %404 = vperm.xlu0 %403, %v290
  %v405 = vpop.permute.xlu0 %404
  %408 = vset.pattern.permute.xlu0 0
  %409 = vperm.xlu0 %408, %v291
  %v410 = vpop.permute.xlu0 %409
  %413 = vset.pattern.permute.xlu0 0
  %414 = vperm.xlu0 %413, %v292
  %v415 = vpop.permute.xlu0 %414
  %418 = vset.pattern.permute.xlu0 0
  %419 = vperm.xlu0 %418, %v293
  %v420 = vpop.permute.xlu0 %419
  %423 = vset.pattern.permute.xlu0 0
  %424 = vperm.xlu0 %423, %v294
  %v425 = vpop.permute.xlu0 %424
  %428 = vset.pattern.permute.xlu0 0
  %429 = vperm.xlu0 %428, %v295
  %v430 = vpop.permute.xlu0 %429
  %433 = vset.pattern.permute.xlu0 0
  %434 = vperm.xlu0 %433, %v296
  %v435 = vpop.permute.xlu0 %434
  %438 = vset.pattern.permute.xlu0 0
  %439 = vperm.xlu0 %438, %v297
  %v440 = vpop.permute.xlu0 %439
  %443 = vset.pattern.permute.xlu0 0
  %444 = vperm.xlu0 %443, %v298
  %v445 = vpop.permute.xlu0 %444
  %448 = vset.pattern.permute.xlu0 0
  %449 = vperm.xlu0 %448, %v299
  %v450 = vpop.permute.xlu0 %449
  %453 = vset.pattern.permute.xlu0 0
  %454 = vperm.xlu0 %453, %v300
  %v455 = vpop.permute.xlu0 %454
  %458 = vset.pattern.permute.xlu0 0
  %459 = vperm.xlu0 %458, %v301
  %v460 = vpop.permute.xlu0 %459
  %v462 = vadd.f32 %v238, %v305
  %v463 = vadd.f32 %v239, %v310
  %v464 = vadd.f32 %v240, %v315
  %v465 = vadd.f32 %v241, %v320
  %v466 = vadd.f32 %v242, %v325
  %v467 = vadd.f32 %v243, %v330
  %v468 = vadd.f32 %v244, %v335
  %v469 = vadd.f32 %v245, %v340
  %v470 = vadd.f32 %v246, %v345
  %v471 = vadd.f32 %v247, %v350
  %v472 = vadd.f32 %v248, %v355
  %v473 = vadd.f32 %v249, %v360
  %v474 = vadd.f32 %v250, %v365
  %v475 = vadd.f32 %v251, %v370
  %v476 = vadd.f32 %v252, %v375
  %v477 = vadd.f32 %v253, %v380
  %v478 = vadd.f32 %v254, %v385
  %v479 = vadd.f32 %v255, %v390
  %v480 = vadd.f32 %v256, %v395
  %v481 = vadd.f32 %v257, %v400
  %v482 = vadd.f32 %v258, %v405
  %v483 = vadd.f32 %v259, %v410
  %v484 = vadd.f32 %v260, %v415
  %v485 = vadd.f32 %v261, %v420
  %v486 = vadd.f32 %v262, %v425
  %v487 = vadd.f32 %v263, %v430
  %v488 = vadd.f32 %v264, %v435
  %v489 = vadd.f32 %v265, %v440
  %v490 = vadd.f32 %v266, %v445
  %v491 = vadd.f32 %v267, %v450
  %v492 = vadd.f32 %v268, %v455
  %v493 = vadd.f32 %v269, %v460
  %vm494 = vcmask 400384
  %495 = vst.msk [vmem:[%s3] sm:$0xff] %vm494, %v462
  %496 = vst.msk [vmem:[%s3 + $0x8] sm:$0xff] %vm494, %v463
  %497 = vst.msk [vmem:[%s3 + $0x10] sm:$0xff] %vm494, %v464
  %498 = vst.msk [vmem:[%s3 + $0x18] sm:$0xff] %vm494, %v465
  %499 = vst.msk [vmem:[%s3 + $0x20] sm:$0xff] %vm494, %v466
  %500 = vst.msk [vmem:[%s3 + $0x28] sm:$0xff] %vm494, %v467
  %501 = vst.msk [vmem:[%s3 + $0x30] sm:$0xff] %vm494, %v468
  %502 = vst.msk [vmem:[%s3 + $0x38] sm:$0xff] %vm494, %v469
  %503 = vst.msk [vmem:[%s3 + $0x40] sm:$0xff] %vm494, %v470
  %504 = vst.msk [vmem:[%s3 + $0x48] sm:$0xff] %vm494, %v471
  %505 = vst.msk [vmem:[%s3 + $0x50] sm:$0xff] %vm494, %v472
  %506 = vst.msk [vmem:[%s3 + $0x58] sm:$0xff] %vm494, %v473
  %507 = vst.msk [vmem:[%s3 + $0x60] sm:$0xff] %vm494, %v474
  %508 = vst.msk [vmem:[%s3 + $0x68] sm:$0xff] %vm494, %v475
  %509 = vst.msk [vmem:[%s3 + $0x70] sm:$0xff] %vm494, %v476
  %510 = vst.msk [vmem:[%s3 + $0x78] sm:$0xff] %vm494, %v477
  %511 = vst.msk [vmem:[%s3 + $0x80] sm:$0xff] %vm494, %v478
  %512 = vst.msk [vmem:[%s3 + $0x88] sm:$0xff] %vm494, %v479
  %513 = vst.msk [vmem:[%s3 + $0x90] sm:$0xff] %vm494, %v480
  %514 = vst.msk [vmem:[%s3 + $0x98] sm:$0xff] %vm494, %v481
  %515 = vst.msk [vmem:[%s3 + $0xa0] sm:$0xff] %vm494, %v482
  %516 = vst.msk [vmem:[%s3 + $0xa8] sm:$0xff] %vm494, %v483
  %517 = vst.msk [vmem:[%s3 + $0xb0] sm:$0xff] %vm494, %v484
  %518 = vst.msk [vmem:[%s3 + $0xb8] sm:$0xff] %vm494, %v485
  %519 = vst.msk [vmem:[%s3 + $0xc0] sm:$0xff] %vm494, %v486
  %520 = vst.msk [vmem:[%s3 + $0xc8] sm:$0xff] %vm494, %v487
  %521 = vst.msk [vmem:[%s3 + $0xd0] sm:$0xff] %vm494, %v488
  %522 = vst.msk [vmem:[%s3 + $0xd8] sm:$0xff] %vm494, %v489
  %523 = vst.msk [vmem:[%s3 + $0xe0] sm:$0xff] %vm494, %v490
  %524 = vst.msk [vmem:[%s3 + $0xe8] sm:$0xff] %vm494, %v491
  %525 = vst.msk [vmem:[%s3 + $0xf0] sm:$0xff] %vm494, %v492
  %526 = vst.msk [vmem:[%s3 + $0xf8] sm:$0xff] %vm494, %v493
  // Predicated region
  $region14: #{fused_mul_conv_bn.3} parent=0 // pred_check
    _
  $region15: #{fused_mul_conv_bn.3} parent=0 // pred_check_branch
    %528 = sbr.rel (0) target = $region17
  $region16: #{fused_mul_conv_bn.3} parent=0 // pred_region
    _
  $region17: #{fused_mul_conv_bn.3} parent=0 // pred_fallthru
    _
  // Predicated region
  $region18: #{fused_mul_conv_bn.3} parent=0 // pred_check
    _
  $region19: #{fused_mul_conv_bn.3} parent=0 // pred_check_branch
    %530 = sbr.rel (0) target = $region21
  $region20: #{fused_mul_conv_bn.3} parent=0 // pred_region
    _
  $region21: #{fused_mul_conv_bn.3} parent=0 // pred_fallthru
    _

// kernel: fused_mul_conv_bn.2
$region0: #{fused_mul_conv_bn.2}
  #allocation0 [shape = 'u32[]', space=smem, size = 0x4, offset = 0x4, fixed_abs, tag = 'smem constant byte address 0x4 - core index']
  #allocation1 [shape = 'u32[72,128]{1,0:T(1,128)}', space=vmem, size = 0x9000, scoped, tag = 'internal scratch']
  #allocation2 [shape = 'f32[256,49]{1,0:T(8,128)}', space=vmem, size = 0x20000, scoped, tag = 'scratch operand']
  #allocation3 [shape = 'f32[256,1]{1,0:T(8,128)}', space=vmem, size = 0x20000, scoped, tag = 'scratch operand']
  #allocation4 [shape = 'f32[256,1]{1,0:T(8,128)}', space=vmem, size = 0x20000, scoped, tag = 'scratch operand']
  %s0 = inlined_call_operand.vmem [shape: f32[1,1536,49], index: 0, kind: input, shape index: {}]
  %s1 = inlined_call_operand.vmem [shape: f32[256,1536], index: 1, kind: input, shape index: {}]
  %s2 = inlined_call_operand.vmem [shape: f32[256,1], index: 2, kind: input, shape index: {}]
  %s3 = inlined_call_operand.vmem [shape: f32[256,1], index: 3, kind: input, shape index: {}]
  %s4 = inlined_call_operand.vmem [shape: f32[1,256,49], index: 4, kind: output, shape index: {0}]
  %s5 = inlined_call_operand.vmem [shape: f32[256,1], index: 5, kind: output, shape index: {1}]
  %s6 = inlined_call_operand.vmem [shape: f32[256,1], index: 6, kind: output, shape index: {2}]
  %7 = xla_tuple %s4, %s5, %s6
  %s8 = sld [smem:[#allocation0]]
  $region104: #{fused_mul_conv_bn.2} parent=0
    _
  %s10 = ssub.s32 1, %s8
  %s11 = scalar_select 0, %s10, %s8
  $region1: #{fused_mul_conv_bn.2} parent=0
    #allocation5 [shape = 'u8[1048576]{0}', space=vmem, size = 0x100000, scoped, tag = 'input window, operand 1']
    loop: start=0, step=1, limit=5
    $region2: #{fused_mul_conv_bn.2} parent=1 // loop_pre_header
      _
    $region3: #{fused_mul_conv_bn.2} parent=1 // loop_header
      %s13 = sphi 0, %s17
      %p14 = scmp.ge.s32.totalorder %s13, 5
      %s20 = sphi 0, %s32
      %s21 = sphi 0, %s28
      %s22 = sphi 0, %s20
      %s23 = sphi 0, %s21
      %s24 = sphi 0, %s22
      %s25 = sphi 0, %s23
      %s37 = sphi 0, %s39
      %s40 = sphi 0, %s37
      %s41 = sphi 0, %s40
      %s57 = sphi 0, %s41
      %s63 = sphi 0, %s65
      %s66 = sphi 0, %s63
      %s67 = sphi 0, %s66
      %s83 = sphi 0, %s67
      %s87 = sphi 0, %s87
      %s89 = sphi 0, %s87
      %s90 = sphi 0, %s89
      %s104 = sphi 0, %s90
      %s108 = sphi 0, %s108
      %s110 = sphi 0, %s108
      %s111 = sphi 0, %s110
      %s125 = sphi 0, %s111
      %s131 = sphi 0, %s133
      %s134 = sphi 0, %s131
      %s135 = sphi 0, %s134
      %s151 = sphi 0, %s135
      %s155 = sphi 0, %s155
      %s157 = sphi 0, %s155
      %s158 = sphi 0, %s157
      %s172 = sphi 0, %s158
      %s176 = sphi 0, %s176
      %s178 = sphi 0, %s176
      %s179 = sphi 0, %s178
      %s193 = sphi 0, %s179
    $region4: #{fused_mul_conv_bn.2} parent=1 // loop_header_branch
      %16 = sbr.rel (%p14) target = $region8
    $region5: #{fused_mul_conv_bn.2} parent=1 // loop_body
      %s18 = ssub.s32 %s13, 1
      %s19 = ssub.s32 %s13, 2
      %s26 = sadd.s32 1, %s21
      %p27 = scmp.ge.s32.totalorder %s26, 3
      %s28 = scalar_select %p27, 0, %s26
      %s29 = sadd.s32 1, %s20
      %s30 = scalar_select %p27, %s29, %s20
      %p31 = scmp.ge.s32.totalorder %s30, 1
      %s32 = scalar_select %p31, 0, %s30
      %s33 = ssub.s32 %s20, %s32
      %s34 = ssub.s32 %s21, %s28
      %s35 = sor.u32 %s33, %s34
      %p36 = scmp.eq.s32.totalorder %s35, 0
      %s38 = sadd.s32 %s37, 1
      %s39 = scalar_select %p36, %s37, %s38
      %p42 = pneg %p36
      %p43 = scmp.eq.s32.totalorder %s13, 2
      %p44 = por %p42, %p43
      %p45 = scmp.ne.s32.totalorder %s37, %s40
      %p46 = scmp.eq.s32.totalorder %s13, 0
      %p47 = por %p45, %p46
      %p48 = scmp.ne.s32.totalorder %s37, %s40
      %p49 = scmp.eq.s32.totalorder %s18, 2
      %p50 = por %p48, %p49
      %p51 = scmp.ne.s32.totalorder %s40, %s41
      %p52 = scmp.eq.s32.totalorder %s18, 0
      %p53 = por %p51, %p52
      %p54 = scmp.ne.s32.totalorder %s40, %s41
      %p55 = scmp.eq.s32.totalorder %s19, 2
      %p56 = por %p54, %p55
      %p58 = scmp.ne.s32.totalorder %s41, %s57
      %p59 = scmp.eq.s32.totalorder %s19, 0
      %p60 = por %p58, %p59
      %s61 = ssub.s32 %s21, %s28
      %p62 = scmp.eq.s32.totalorder %s61, 0
      %s64 = sadd.s32 %s63, 1
      %s65 = scalar_select %p62, %s63, %s64
      %p68 = pneg %p62
      %p69 = scmp.eq.s32.totalorder %s13, 2
      %p70 = por %p68, %p69
      %p71 = scmp.ne.s32.totalorder %s63, %s66
      %p72 = scmp.eq.s32.totalorder %s13, 0
      %p73 = por %p71, %p72
      %p74 = scmp.ne.s32.totalorder %s63, %s66
      %p75 = scmp.eq.s32.totalorder %s18, 2
      %p76 = por %p74, %p75
      %p77 = scmp.ne.s32.totalorder %s66, %s67
      %p78 = scmp.eq.s32.totalorder %s18, 0
      %p79 = por %p77, %p78
      %p80 = scmp.ne.s32.totalorder %s66, %s67
      %p81 = scmp.eq.s32.totalorder %s19, 2
      %p82 = por %p80, %p81
      %p84 = scmp.ne.s32.totalorder %s67, %s83
      %p85 = scmp.eq.s32.totalorder %s19, 0
      %p86 = por %p84, %p85
      %s88 = sadd.s32 %s87, 1
      %p91 = scmp.eq.s32.totalorder %s13, 2
      %p92 = scmp.ne.s32.totalorder %s87, %s89
      %p93 = scmp.eq.s32.totalorder %s13, 0
      %p94 = por %p92, %p93
      %p95 = scmp.ne.s32.totalorder %s87, %s89
      %p96 = scmp.eq.s32.totalorder %s18, 2
      %p97 = por %p95, %p96
      %p98 = scmp.ne.s32.totalorder %s89, %s90
      %p99 = scmp.eq.s32.totalorder %s18, 0
      %p100 = por %p98, %p99
      %p101 = scmp.ne.s32.totalorder %s89, %s90
      %p102 = scmp.eq.s32.totalorder %s19, 2
      %p103 = por %p101, %p102
      %p105 = scmp.ne.s32.totalorder %s90, %s104
      %p106 = scmp.eq.s32.totalorder %s19, 0
      %p107 = por %p105, %p106
      %s109 = sadd.s32 %s108, 1
      %p112 = scmp.eq.s32.totalorder %s13, 2
      %p113 = scmp.ne.s32.totalorder %s108, %s110
      %p114 = scmp.eq.s32.totalorder %s13, 0
      %p115 = por %p113, %p114
      %p116 = scmp.ne.s32.totalorder %s108, %s110
      %p117 = scmp.eq.s32.totalorder %s18, 2
      %p118 = por %p116, %p117
      %p119 = scmp.ne.s32.totalorder %s110, %s111
      %p120 = scmp.eq.s32.totalorder %s18, 0
      %p121 = por %p119, %p120
      %p122 = scmp.ne.s32.totalorder %s110, %s111
      %p123 = scmp.eq.s32.totalorder %s19, 2
      %p124 = por %p122, %p123
      %p126 = scmp.ne.s32.totalorder %s111, %s125
      %p127 = scmp.eq.s32.totalorder %s19, 0
      %p128 = por %p126, %p127
      %s129 = ssub.s32 %s20, %s32
      %p130 = scmp.eq.s32.totalorder %s129, 0
      %s132 = sadd.s32 %s131, 1
      %s133 = scalar_select %p130, %s131, %s132
      %p136 = pneg %p130
      %p137 = scmp.eq.s32.totalorder %s13, 2
      %p138 = por %p136, %p137
      %p139 = scmp.ne.s32.totalorder %s131, %s134
      %p140 = scmp.eq.s32.totalorder %s13, 0
      %p141 = por %p139, %p140
      %p142 = scmp.ne.s32.totalorder %s131, %s134
      %p143 = scmp.eq.s32.totalorder %s18, 2
      %p144 = por %p142, %p143
      %p145 = scmp.ne.s32.totalorder %s134, %s135
      %p146 = scmp.eq.s32.totalorder %s18, 0
      %p147 = por %p145, %p146
      %p148 = scmp.ne.s32.totalorder %s134, %s135
      %p149 = scmp.eq.s32.totalorder %s19, 2
      %p150 = por %p148, %p149
      %p152 = scmp.ne.s32.totalorder %s135, %s151
      %p153 = scmp.eq.s32.totalorder %s19, 0
      %p154 = por %p152, %p153
      %s156 = sadd.s32 %s155, 1
      %p159 = scmp.eq.s32.totalorder %s13, 2
      %p160 = scmp.ne.s32.totalorder %s155, %s157
      %p161 = scmp.eq.s32.totalorder %s13, 0
      %p162 = por %p160, %p161
      %p163 = scmp.ne.s32.totalorder %s155, %s157
      %p164 = scmp.eq.s32.totalorder %s18, 2
      %p165 = por %p163, %p164
      %p166 = scmp.ne.s32.totalorder %s157, %s158
      %p167 = scmp.eq.s32.totalorder %s18, 0
      %p168 = por %p166, %p167
      %p169 = scmp.ne.s32.totalorder %s157, %s158
      %p170 = scmp.eq.s32.totalorder %s19, 2
      %p171 = por %p169, %p170
      %p173 = scmp.ne.s32.totalorder %s158, %s172
      %p174 = scmp.eq.s32.totalorder %s19, 0
      %p175 = por %p173, %p174
      %s177 = sadd.s32 %s176, 1
      %p180 = scmp.eq.s32.totalorder %s13, 2
      %p181 = scmp.ne.s32.totalorder %s176, %s178
      %p182 = scmp.eq.s32.totalorder %s13, 0
      %p183 = por %p181, %p182
      %p184 = scmp.ne.s32.totalorder %s176, %s178
      %p185 = scmp.eq.s32.totalorder %s18, 2
      %p186 = por %p184, %p185
      %p187 = scmp.ne.s32.totalorder %s178, %s179
      %p188 = scmp.eq.s32.totalorder %s18, 0
      %p189 = por %p187, %p188
      %p190 = scmp.ne.s32.totalorder %s178, %s179
      %p191 = scmp.eq.s32.totalorder %s19, 2
      %p192 = por %p190, %p191
      %p194 = scmp.ne.s32.totalorder %s179, %s193
      %p195 = scmp.eq.s32.totalorder %s19, 0
      %p196 = por %p194, %p195
      %p197 = scmp.le.s32.totalorder 1, %s13
      %p198 = scmp.lt.s32.totalorder %s13, 4
      %p199 = pnand %p197, %p198
      %p200 = pneg %p199
      // Predicated region
      $region9: #{fused_mul_conv_bn.2} parent=5 // pred_check
        _
      $region10: #{fused_mul_conv_bn.2} parent=5 // pred_check_branch
        %202 = sbr.rel (%p199) target = $region12
      $region11: #{fused_mul_conv_bn.2} parent=5 // pred_region
        %s203 = ssub.s32 %s13, 1
        // Predicated region
        $region13: #{fused_mul_conv_bn.2} parent=11 // pred_check
          %p204 = pneg %p100
        $region14: #{fused_mul_conv_bn.2} parent=11 // pred_check_branch
          %206 = sbr.rel (%p204) target = $region16
        $region15: #{fused_mul_conv_bn.2} parent=11 // pred_region
          _
        $region16: #{fused_mul_conv_bn.2} parent=11 // pred_fallthru
          _
        // Predicated region
        $region17: #{fused_mul_conv_bn.2} parent=11 // pred_check
          %p207 = pneg %p121
        $region18: #{fused_mul_conv_bn.2} parent=11 // pred_check_branch
          %209 = sbr.rel (%p207) target = $region20
        $region19: #{fused_mul_conv_bn.2} parent=11 // pred_region
          _
        $region20: #{fused_mul_conv_bn.2} parent=11 // pred_fallthru
          _
      $region12: #{fused_mul_conv_bn.2} parent=5 // pred_fallthru
        _
      %p210 = scmp.lt.s32.totalorder %s13, 3
      // Predicated region
      $region21: #{fused_mul_conv_bn.2} parent=5 // pred_check
        %p211 = pneg %p210
      $region22: #{fused_mul_conv_bn.2} parent=5 // pred_check_branch
        %213 = sbr.rel (%p211) target = $region24
      $region23: #{fused_mul_conv_bn.2} parent=5 // pred_region
        // Predicated region
        $region25: #{fused_mul_conv_bn.2} parent=23 // pred_check
          %p214 = pneg %p47
        $region26: #{fused_mul_conv_bn.2} parent=23 // pred_check_branch
          %216 = sbr.rel (%p214) target = $region28
        $region27: #{fused_mul_conv_bn.2} parent=23 // pred_region
          %s217 = smul.u32 64, %s21
          %p218 = scmp.lt.s32.totalorder %s20, 0
          %s219 = scalar_select %p218, %s20, 0
          %p220 = scmp.lt.s32.totalorder %s217, 191
          %s221 = scalar_select %p220, %s217, 191
          %s222 = smul.addr %s219, 192
          %s223 = sadd.s32 %s221, %s222
          %s224 = smul.addr %s223, 8
          %s225 = scalar_lea.vmem %s0, %s224
          %s226 = smul.u32 64, %s21
        $region28: #{fused_mul_conv_bn.2} parent=23 // pred_fallthru
          _
        // Predicated region
        $region29: #{fused_mul_conv_bn.2} parent=23 // pred_check
          %p227 = pneg %p73
        $region30: #{fused_mul_conv_bn.2} parent=23 // pred_check_branch
          %229 = sbr.rel (%p227) target = $region32
        $region31: #{fused_mul_conv_bn.2} parent=23 // pred_region
          %s230 = sand.u32 %s63, 1
          %s231 = sand.u32 %s63, 1
          %s232 = smul.addr %s231, 1024
          %s233 = scalar_lea.vmem [#allocation5], %s232
          %s234 = smul.u32 4, %s21
          %s235 = smul.addr %s234, 8
          %s236 = scalar_lea.vmem %s1, %s235
          // Predicated region
          $region33: #{fused_mul_conv_bn.2} parent=31 // pred_check
            _
          $region34: #{fused_mul_conv_bn.2} parent=31 // pred_check_branch
            %238 = sbr.rel (0) target = $region36
          $region35: #{fused_mul_conv_bn.2} parent=31 // pred_region
            // Predicated region
            $region37: #{fused_mul_conv_bn.2} parent=35 // pred_check
              _
            $region38: #{fused_mul_conv_bn.2} parent=35 // pred_check_branch
              %240 = sbr.rel (0) target = $region40
            $region39: #{fused_mul_conv_bn.2} parent=35 // pred_region
              loop: start=0, step=1, limit=1
              $region41: #{fused_mul_conv_bn.2} parent=39 // loop_pre_header
                _
              $region42: #{fused_mul_conv_bn.2} parent=39 // loop_header
                %s242 = sphi 0, %s246
                %p243 = scmp.ge.s32.totalorder %s242, 1
                %s247 = sphi %s236, %s236
                %s248 = sphi %s233, %s233
              $region43: #{fused_mul_conv_bn.2} parent=39 // loop_header_branch
                %245 = sbr.rel (%p243) target = $region47
              $region44: #{fused_mul_conv_bn.2} parent=39 // loop_body
                %v249 = vld [vmem:[%s247] sm:$0xff]
                %250 = vst [vmem:[%s248] sm:$0xff] %v249
                %v251 = vld [vmem:[%s247 + $0x8] sm:$0xff]
                %252 = vst [vmem:[%s248 + $0x8] sm:$0xff] %v251
                %v253 = vld [vmem:[%s247 + $0x10] sm:$0xff]
                %254 = vst [vmem:[%s248 + $0x10] sm:$0xff] %v253
                %v255 = vld [vmem:[%s247 + $0x18] sm:$0xff]
                %256 = vst [vmem:[%s248 + $0x18] sm:$0xff] %v255
                %v257 = vld [vmem:[%s247 + $0x60] sm:$0xff]
                %258 = vst [vmem:[%s248 + $0x20] sm:$0xff] %v257
                %v259 = vld [vmem:[%s247 + $0x68] sm:$0xff]
                %260 = vst [vmem:[%s248 + $0x28] sm:$0xff] %v259
                %v261 = vld [vmem:[%s247 + $0x70] sm:$0xff]
                %262 = vst [vmem:[%s248 + $0x30] sm:$0xff] %v261
                %v263 = vld [vmem:[%s247 + $0x78] sm:$0xff]
                %264 = vst [vmem:[%s248 + $0x38] sm:$0xff] %v263
                %v265 = vld [vmem:[%s247 + $0xc0] sm:$0xff]
                %266 = vst [vmem:[%s248 + $0x40] sm:$0xff] %v265
                %v267 = vld [vmem:[%s247 + $0xc8] sm:$0xff]
                %268 = vst [vmem:[%s248 + $0x48] sm:$0xff] %v267
                %v269 = vld [vmem:[%s247 + $0xd0] sm:$0xff]
                %270 = vst [vmem:[%s248 + $0x50] sm:$0xff] %v269
                %v271 = vld [vmem:[%s247 + $0xd8] sm:$0xff]
                %272 = vst [vmem:[%s248 + $0x58] sm:$0xff] %v271
                %v273 = vld [vmem:[%s247 + $0x120] sm:$0xff]
                %274 = vst [vmem:[%s248 + $0x60] sm:$0xff] %v273
                %v275 = vld [vmem:[%s247 + $0x128] sm:$0xff]
                %276 = vst [vmem:[%s248 + $0x68] sm:$0xff] %v275
                %v277 = vld [vmem:[%s247 + $0x130] sm:$0xff]
                %278 = vst [vmem:[%s248 + $0x70] sm:$0xff] %v277
                %v279 = vld [vmem:[%s247 + $0x138] sm:$0xff]
                %280 = vst [vmem:[%s248 + $0x78] sm:$0xff] %v279
                %v281 = vld [vmem:[%s247 + $0x180] sm:$0xff]
                %282 = vst [vmem:[%s248 + $0x80] sm:$0xff] %v281
                %v283 = vld [vmem:[%s247 + $0x188] sm:$0xff]
                %284 = vst [vmem:[%s248 + $0x88] sm:$0xff] %v283
                %v285 = vld [vmem:[%s247 + $0x190] sm:$0xff]
                %286 = vst [vmem:[%s248 + $0x90] sm:$0xff] %v285
                %v287 = vld [vmem:[%s247 + $0x198] sm:$0xff]
                %288 = vst [vmem:[%s248 + $0x98] sm:$0xff] %v287
                %v289 = vld [vmem:[%s247 + $0x1e0] sm:$0xff]
                %290 = vst [vmem:[%s248 + $0xa0] sm:$0xff] %v289
                %v291 = vld [vmem:[%s247 + $0x1e8] sm:$0xff]
                %292 = vst [vmem:[%s248 + $0xa8] sm:$0xff] %v291
                %v293 = vld [vmem:[%s247 + $0x1f0] sm:$0xff]
                %294 = vst [vmem:[%s248 + $0xb0] sm:$0xff] %v293
                %v295 = vld [vmem:[%s247 + $0x1f8] sm:$0xff]
                %296 = vst [vmem:[%s248 + $0xb8] sm:$0xff] %v295
                %v297 = vld [vmem:[%s247 + $0x240] sm:$0xff]
                %298 = vst [vmem:[%s248 + $0xc0] sm:$0xff] %v297
                %v299 = vld [vmem:[%s247 + $0x248] sm:$0xff]
                %300 = vst [vmem:[%s248 + $0xc8] sm:$0xff] %v299
                %v301 = vld [vmem:[%s247 + $0x250] sm:$0xff]
                %302 = vst [vmem:[%s248 + $0xd0] sm:$0xff] %v301
                %v303 = vld [vmem:[%s247 + $0x258] sm:$0xff]
                %304 = vst [vmem:[%s248 + $0xd8] sm:$0xff] %v303
                %v305 = vld [vmem:[%s247 + $0x2a0] sm:$0xff]
                %306 = vst [vmem:[%s248 + $0xe0] sm:$0xff] %v305
                %v307 = vld [vmem:[%s247 + $0x2a8] sm:$0xff]
                %308 = vst [vmem:[%s248 + $0xe8] sm:$0xff] %v307
                %v309 = vld [vmem:[%s247 + $0x2b0] sm:$0xff]
                %310 = vst [vmem:[%s248 + $0xf0] sm:$0xff] %v309
                %v311 = vld [vmem:[%s247 + $0x2b8] sm:$0xff]
                %312 = vst [vmem:[%s248 + $0xf8] sm:$0xff] %v311
                %v313 = vld [vmem:[%s247 + $0x300] sm:$0xff]
                %314 = vst [vmem:[%s248 + $0x100] sm:$0xff] %v313
                %v315 = vld [vmem:[%s247 + $0x308] sm:$0xff]
                %316 = vst [vmem:[%s248 + $0x108] sm:$0xff] %v315
                %v317 = vld [vmem:[%s247 + $0x310] sm:$0xff]
                %318 = vst [vmem:[%s248 + $0x110] sm:$0xff] %v317
                %v319 = vld [vmem:[%s247 + $0x318] sm:$0xff]
                %320 = vst [vmem:[%s248 + $0x118] sm:$0xff] %v319
                %v321 = vld [vmem:[%s247 + $0x360] sm:$0xff]
                %322 = vst [vmem:[%s248 + $0x120] sm:$0xff] %v321
                %v323 = vld [vmem:[%s247 + $0x368] sm:$0xff]
                %324 = vst [vmem:[%s248 + $0x128] sm:$0xff] %v323
                %v325 = vld [vmem:[%s247 + $0x370] sm:$0xff]
                %326 = vst [vmem:[%s248 + $0x130] sm:$0xff] %v325
                %v327 = vld [vmem:[%s247 + $0x378] sm:$0xff]
                %328 = vst [vmem:[%s248 + $0x138] sm:$0xff] %v327
                %v329 = vld [vmem:[%s247 + $0x3c0] sm:$0xff]
                %330 = vst [vmem:[%s248 + $0x140] sm:$0xff] %v329
                %v331 = vld [vmem:[%s247 + $0x3c8] sm:$0xff]
                %332 = vst [vmem:[%s248 + $0x148] sm:$0xff] %v331
                %v333 = vld [vmem:[%s247 + $0x3d0] sm:$0xff]
                %334 = vst [vmem:[%s248 + $0x150] sm:$0xff] %v333
                %v335 = vld [vmem:[%s247 + $0x3d8] sm:$0xff]
                %336 = vst [vmem:[%s248 + $0x158] sm:$0xff] %v335
                %v337 = vld [vmem:[%s247 + $0x420] sm:$0xff]
                %338 = vst [vmem:[%s248 + $0x160] sm:$0xff] %v337
                %v339 = vld [vmem:[%s247 + $0x428] sm:$0xff]
                %340 = vst [vmem:[%s248 + $0x168] sm:$0xff] %v339
                %v341 = vld [vmem:[%s247 + $0x430] sm:$0xff]
                %342 = vst [vmem:[%s248 + $0x170] sm:$0xff] %v341
                %v343 = vld [vmem:[%s247 + $0x438] sm:$0xff]
                %344 = vst [vmem:[%s248 + $0x178] sm:$0xff] %v343
                %v345 = vld [vmem:[%s247 + $0x480] sm:$0xff]
                %346 = vst [vmem:[%s248 + $0x180] sm:$0xff] %v345
                %v347 = vld [vmem:[%s247 + $0x488] sm:$0xff]
                %348 = vst [vmem:[%s248 + $0x188] sm:$0xff] %v347
                %v349 = vld [vmem:[%s247 + $0x490] sm:$0xff]
                %350 = vst [vmem:[%s248 + $0x190] sm:$0xff] %v349
                %v351 = vld [vmem:[%s247 + $0x498] sm:$0xff]
                %352 = vst [vmem:[%s248 + $0x198] sm:$0xff] %v351
                %v353 = vld [vmem:[%s247 + $0x4e0] sm:$0xff]
                %354 = vst [vmem:[%s248 + $0x1a0] sm:$0xff] %v353
                %v355 = vld [vmem:[%s247 + $0x4e8] sm:$0xff]
                %356 = vst [vmem:[%s248 + $0x1a8] sm:$0xff] %v355
                %v357 = vld [vmem:[%s247 + $0x4f0] sm:$0xff]
                %358 = vst [vmem:[%s248 + $0x1b0] sm:$0xff] %v357
                %v359 = vld [vmem:[%s247 + $0x4f8] sm:$0xff]
                %360 = vst [vmem:[%s248 + $0x1b8] sm:$0xff] %v359
                %v361 = vld [vmem:[%s247 + $0x540] sm:$0xff]
                %362 = vst [vmem:[%s248 + $0x1c0] sm:$0xff] %v361
                %v363 = vld [vmem:[%s247 + $0x548] sm:$0xff]
                %364 = vst [vmem:[%s248 + $0x1c8] sm:$0xff] %v363
                %v365 = vld [vmem:[%s247 + $0x550] sm:$0xff]
                %366 = vst [vmem:[%s248 + $0x1d0] sm:$0xff] %v365
                %v367 = vld [vmem:[%s247 + $0x558] sm:$0xff]
                %368 = vst [vmem:[%s248 + $0x1d8] sm:$0xff] %v367
                %v369 = vld [vmem:[%s247 + $0x5a0] sm:$0xff]
                %370 = vst [vmem:[%s248 + $0x1e0] sm:$0xff] %v369
                %v371 = vld [vmem:[%s247 + $0x5a8] sm:$0xff]
                %372 = vst [vmem:[%s248 + $0x1e8] sm:$0xff] %v371
                %v373 = vld [vmem:[%s247 + $0x5b0] sm:$0xff]
                %374 = vst [vmem:[%s248 + $0x1f0] sm:$0xff] %v373
                %v375 = vld [vmem:[%s247 + $0x5b8] sm:$0xff]
                %376 = vst [vmem:[%s248 + $0x1f8] sm:$0xff] %v375
                %v377 = vld [vmem:[%s247 + $0x600] sm:$0xff]
                %378 = vst [vmem:[%s248 + $0x200] sm:$0xff] %v377
                %v379 = vld [vmem:[%s247 + $0x608] sm:$0xff]
                %380 = vst [vmem:[%s248 + $0x208] sm:$0xff] %v379
                %v381 = vld [vmem:[%s247 + $0x610] sm:$0xff]
                %382 = vst [vmem:[%s248 + $0x210] sm:$0xff] %v381
                %v383 = vld [vmem:[%s247 + $0x618] sm:$0xff]
                %384 = vst [vmem:[%s248 + $0x218] sm:$0xff] %v383
                %v385 = vld [vmem:[%s247 + $0x660] sm:$0xff]
                %386 = vst [vmem:[%s248 + $0x220] sm:$0xff] %v385
                %v387 = vld [vmem:[%s247 + $0x668] sm:$0xff]
                %388 = vst [vmem:[%s248 + $0x228] sm:$0xff] %v387
                %v389 = vld [vmem:[%s247 + $0x670] sm:$0xff]
                %390 = vst [vmem:[%s248 + $0x230] sm:$0xff] %v389
                %v391 = vld [vmem:[%s247 + $0x678] sm:$0xff]
                %392 = vst [vmem:[%s248 + $0x238] sm:$0xff] %v391
                %v393 = vld [vmem:[%s247 + $0x6c0] sm:$0xff]
                %394 = vst [vmem:[%s248 + $0x240] sm:$0xff] %v393
                %v395 = vld [vmem:[%s247 + $0x6c8] sm:$0xff]
                %396 = vst [vmem:[%s248 + $0x248] sm:$0xff] %v395
                %v397 = vld [vmem:[%s247 + $0x6d0] sm:$0xff]
                %398 = vst [vmem:[%s248 + $0x250] sm:$0xff] %v397
                %v399 = vld [vmem:[%s247 + $0x6d8] sm:$0xff]
                %400 = vst [vmem:[%s248 + $0x258] sm:$0xff] %v399
                %v401 = vld [vmem:[%s247 + $0x720] sm:$0xff]
                %402 = vst [vmem:[%s248 + $0x260] sm:$0xff] %v401
                %v403 = vld [vmem:[%s247 + $0x728] sm:$0xff]
                %404 = vst [vmem:[%s248 + $0x268] sm:$0xff] %v403
                %v405 = vld [vmem:[%s247 + $0x730] sm:$0xff]
                %406 = vst [vmem:[%s248 + $0x270] sm:$0xff] %v405
                %v407 = vld [vmem:[%s247 + $0x738] sm:$0xff]
                %408 = vst [vmem:[%s248 + $0x278] sm:$0xff] %v407
                %v409 = vld [vmem:[%s247 + $0x780] sm:$0xff]
                %410 = vst [vmem:[%s248 + $0x280] sm:$0xff] %v409
                %v411 = vld [vmem:[%s247 + $0x788] sm:$0xff]
                %412 = vst [vmem:[%s248 + $0x288] sm:$0xff] %v411
                %v413 = vld [vmem:[%s247 + $0x790] sm:$0xff]
                %414 = vst [vmem:[%s248 + $0x290] sm:$0xff] %v413
                %v415 = vld [vmem:[%s247 + $0x798] sm:$0xff]
                %416 = vst [vmem:[%s248 + $0x298] sm:$0xff] %v415
                %v417 = vld [vmem:[%s247 + $0x7e0] sm:$0xff]
                %418 = vst [vmem:[%s248 + $0x2a0] sm:$0xff] %v417
                %v419 = vld [vmem:[%s247 + $0x7e8] sm:$0xff]
                %420 = vst [vmem:[%s248 + $0x2a8] sm:$0xff] %v419
                %v421 = vld [vmem:[%s247 + $0x7f0] sm:$0xff]
                %422 = vst [vmem:[%s248 + $0x2b0] sm:$0xff] %v421
                %v423 = vld [vmem:[%s247 + $0x7f8] sm:$0xff]
                %424 = vst [vmem:[%s248 + $0x2b8] sm:$0xff] %v423
                %v425 = vld [vmem:[%s247 + $0x840] sm:$0xff]
                %426 = vst [vmem:[%s248 + $0x2c0] sm:$0xff] %v425
                %v427 = vld [vmem:[%s247 + $0x848] sm:$0xff]
                %428 = vst [vmem:[%s248 + $0x2c8] sm:$0xff] %v427
                %v429 = vld [vmem:[%s247 + $0x850] sm:$0xff]
                %430 = vst [vmem:[%s248 + $0x2d0] sm:$0xff] %v429
                %v431 = vld [vmem:[%s247 + $0x858] sm:$0xff]
                %432 = vst [vmem:[%s248 + $0x2d8] sm:$0xff] %v431
                %v433 = vld [vmem:[%s247 + $0x8a0] sm:$0xff]
                %434 = vst [vmem:[%s248 + $0x2e0] sm:$0xff] %v433
                %v435 = vld [vmem:[%s247 + $0x8a8] sm:$0xff]
                %436 = vst [vmem:[%s248 + $0x2e8] sm:$0xff] %v435
                %v437 = vld [vmem:[%s247 + $0x8b0] sm:$0xff]
                %438 = vst [vmem:[%s248 + $0x2f0] sm:$0xff] %v437
                %v439 = vld [vmem:[%s247 + $0x8b8] sm:$0xff]
                %440 = vst [vmem:[%s248 + $0x2f8] sm:$0xff] %v439
                %v441 = vld [vmem:[%s247 + $0x900] sm:$0xff]
                %442 = vst [vmem:[%s248 + $0x300] sm:$0xff] %v441
                %v443 = vld [vmem:[%s247 + $0x908] sm:$0xff]
                %444 = vst [vmem:[%s248 + $0x308] sm:$0xff] %v443
                %v445 = vld [vmem:[%s247 + $0x910] sm:$0xff]
                %446 = vst [vmem:[%s248 + $0x310] sm:$0xff] %v445
                %v447 = vld [vmem:[%s247 + $0x918] sm:$0xff]
                %448 = vst [vmem:[%s248 + $0x318] sm:$0xff] %v447
                %v449 = vld [vmem:[%s247 + $0x960] sm:$0xff]
                %450 = vst [vmem:[%s248 + $0x320] sm:$0xff] %v449
                %v451 = vld [vmem:[%s247 + $0x968] sm:$0xff]
                %452 = vst [vmem:[%s248 + $0x328] sm:$0xff] %v451
                %v453 = vld [vmem:[%s247 + $0x970] sm:$0xff]
                %454 = vst [vmem:[%s248 + $0x330] sm:$0xff] %v453
                %v455 = vld [vmem:[%s247 + $0x978] sm:$0xff]
                %456 = vst [vmem:[%s248 + $0x338] sm:$0xff] %v455
                %v457 = vld [vmem:[%s247 + $0x9c0] sm:$0xff]
                %458 = vst [vmem:[%s248 + $0x340] sm:$0xff] %v457
                %v459 = vld [vmem:[%s247 + $0x9c8] sm:$0xff]
                %460 = vst [vmem:[%s248 + $0x348] sm:$0xff] %v459
                %v461 = vld [vmem:[%s247 + $0x9d0] sm:$0xff]
                %462 = vst [vmem:[%s248 + $0x350] sm:$0xff] %v461
                %v463 = vld [vmem:[%s247 + $0x9d8] sm:$0xff]
                %464 = vst [vmem:[%s248 + $0x358] sm:$0xff] %v463
                %v465 = vld [vmem:[%s247 + $0xa20] sm:$0xff]
                %466 = vst [vmem:[%s248 + $0x360] sm:$0xff] %v465
                %v467 = vld [vmem:[%s247 + $0xa28] sm:$0xff]
                %468 = vst [vmem:[%s248 + $0x368] sm:$0xff] %v467
                %v469 = vld [vmem:[%s247 + $0xa30] sm:$0xff]
                %470 = vst [vmem:[%s248 + $0x370] sm:$0xff] %v469
                %v471 = vld [vmem:[%s247 + $0xa38] sm:$0xff]
                %472 = vst [vmem:[%s248 + $0x378] sm:$0xff] %v471
                %v473 = vld [vmem:[%s247 + $0xa80] sm:$0xff]
                %474 = vst [vmem:[%s248 + $0x380] sm:$0xff] %v473
                %v475 = vld [vmem:[%s247 + $0xa88] sm:$0xff]
                %476 = vst [vmem:[%s248 + $0x388] sm:$0xff] %v475
                %v477 = vld [vmem:[%s247 + $0xa90] sm:$0xff]
                %478 = vst [vmem:[%s248 + $0x390] sm:$0xff] %v477
                %v479 = vld [vmem:[%s247 + $0xa98] sm:$0xff]
                %480 = vst [vmem:[%s248 + $0x398] sm:$0xff] %v479
                %v481 = vld [vmem:[%s247 + $0xae0] sm:$0xff]
                %482 = vst [vmem:[%s248 + $0x3a0] sm:$0xff] %v481
                %v483 = vld [vmem:[%s247 + $0xae8] sm:$0xff]
                %484 = vst [vmem:[%s248 + $0x3a8] sm:$0xff] %v483
                %v485 = vld [vmem:[%s247 + $0xaf0] sm:$0xff]
                %486 = vst [vmem:[%s248 + $0x3b0] sm:$0xff] %v485
                %v487 = vld [vmem:[%s247 + $0xaf8] sm:$0xff]
                %488 = vst [vmem:[%s248 + $0x3b8] sm:$0xff] %v487
                %v489 = vld [vmem:[%s247 + $0xb40] sm:$0xff]
                %490 = vst [vmem:[%s248 + $0x3c0] sm:$0xff] %v489
                %v491 = vld [vmem:[%s247 + $0xb48] sm:$0xff]
                %492 = vst [vmem:[%s248 + $0x3c8] sm:$0xff] %v491
                %v493 = vld [vmem:[%s247 + $0xb50] sm:$0xff]
                %494 = vst [vmem:[%s248 + $0x3d0] sm:$0xff] %v493
                %v495 = vld [vmem:[%s247 + $0xb58] sm:$0xff]
                %496 = vst [vmem:[%s248 + $0x3d8] sm:$0xff] %v495
                %v497 = vld [vmem:[%s247 + $0xba0] sm:$0xff]
                %498 = vst [vmem:[%s248 + $0x3e0] sm:$0xff] %v497
                %v499 = vld [vmem:[%s247 + $0xba8] sm:$0xff]
                %500 = vst [vmem:[%s248 + $0x3e8] sm:$0xff] %v499
                %v501 = vld [vmem:[%s247 + $0xbb0] sm:$0xff]
                %502 = vst [vmem:[%s248 + $0x3f0] sm:$0xff] %v501
                %v503 = vld [vmem:[%s247 + $0xbb8] sm:$0xff]
                %504 = vst [vmem:[%s248 + $0x3f8] sm:$0xff] %v503
              $region45: #{fused_mul_conv_bn.2} parent=39 // loop_footer
                %s246 = sadd.s32 1, %s242
              $region46: #{fused_mul_conv_bn.2} parent=39 // loop_footer_branch
                %241 = sbr.rel target = $region42
              $region47: #{fused_mul_conv_bn.2} parent=39 // loop_exit
                _
            $region40: #{fused_mul_conv_bn.2} parent=35 // pred_fallthru
              _
            // Predicated region
            $region48: #{fused_mul_conv_bn.2} parent=35 // pred_check
              _
            $region49: #{fused_mul_conv_bn.2} parent=35 // pred_check_branch
              %506 = sbr.rel target = $region51
            $region50: #{fused_mul_conv_bn.2} parent=35 // pred_region
              _
            $region51: #{fused_mul_conv_bn.2} parent=35 // pred_fallthru
              _
          $region36: #{fused_mul_conv_bn.2} parent=31 // pred_fallthru
            _
          %507 = vnop
        $region32: #{fused_mul_conv_bn.2} parent=23 // pred_fallthru
          _
      $region24: #{fused_mul_conv_bn.2} parent=5 // pred_fallthru
        _
      %p508 = scmp.le.s32.totalorder 1, %s13
      %p509 = scmp.lt.s32.totalorder %s13, 4
      %p510 = pnand %p508, %p509
      %p511 = pneg %p510
      // Predicated region
      $region52: #{fused_mul_conv_bn.2} parent=5 // pred_check
        _
      $region53: #{fused_mul_conv_bn.2} parent=5 // pred_check_branch
        %513 = sbr.rel (%p510) target = $region55
      $region54: #{fused_mul_conv_bn.2} parent=5 // pred_region
        %s514 = ssub.s32 %s13, 1
        %s515 = sand.u32 %s66, 1
        %s516 = sand.u32 %s66, 1
        %s517 = smul.addr %s516, 1024
        %s518 = scalar_lea.vmem [#allocation5], %s517
        // Predicated region
        $region56: #{fused_mul_conv_bn.2} parent=54 // pred_check
          %p519 = pneg %p79
        $region57: #{fused_mul_conv_bn.2} parent=54 // pred_check_branch
          %521 = sbr.rel (%p519) target = $region59
        $region58: #{fused_mul_conv_bn.2} parent=54 // pred_region
          _
        $region59: #{fused_mul_conv_bn.2} parent=54 // pred_fallthru
          _
        %s522 = smul.u32 64, %s23
        %p523 = scmp.lt.s32.totalorder %s22, 0
        %s524 = scalar_select %p523, %s22, 0
        %p525 = scmp.lt.s32.totalorder %s522, 191
        %s526 = scalar_select %p525, %s522, 191
        %s527 = smul.addr %s524, 192
        %s528 = sadd.s32 %s526, %s527
        %s529 = smul.addr %s528, 8
        %s530 = scalar_lea.vmem %s0, %s529
        %p531 = pneg %p53
        %p532 = pneg %p50
        %s533 = sand.u32 %s66, 1
        %s534 = sand.u32 %s66, 1
        %s535 = smul.addr %s534, 1024
        %s536 = scalar_lea.vmem [#allocation5], %s535
        %p537 = pneg %p79
        %p538 = pneg %p76
        %p539 = pneg %p100
        %p540 = pneg %p97
        %p541 = pneg %p121
        %p542 = pneg %p118
        %p543 = pneg %p147
        %p544 = pneg %p144
        %p545 = scmp.lt.s32.totalorder %s22, 0
        %s546 = scalar_select %p545, %s22, 0
        %s547 = smul.addr %s546, 32
        %s548 = smul.addr %s547, 8
        %s549 = scalar_lea.vmem %s4, %s548
        %p550 = pneg %p168
        %p551 = pneg %p165
        %p552 = pneg %p189
        %p553 = pneg %p186
        %s554 = smul.u32 64, %s23
        %p555 = scmp.lt.s32.totalorder %s22, 0
        %s556 = scalar_select %p555, %s22, 0
        %p557 = scmp.lt.s32.totalorder %s554, 191
        %s558 = scalar_select %p557, %s554, 191
        %s559 = smul.addr %s556, 192
        %s560 = sadd.s32 %s558, %s559
        %s561 = smul.addr %s560, 8
        %s562 = scalar_lea.vmem %s0, %s561
        %s563 = smul.u32 64, %s23
        %s564 = smul.u32 4, %s23
        %p565 = scmp.lt.s32.totalorder %s22, 0
        %s566 = scalar_select %p565, %s22, 0
        %s567 = smul.addr %s566, 32
        %s568 = smul.addr %s567, 8
        %s569 = scalar_lea.vmem %s4, %s568
        %p570 = scmp.eq.s32.totalorder %s22, 0
        %p571 = scmp.eq.s32.totalorder %s23, 0
        %p572 = pnand %p570, %p571
        %p573 = pneg %p572
        // Predicated region
        $region60: #{fused_mul_conv_bn.2} parent=54 // pred_check
          _
        $region61: #{fused_mul_conv_bn.2} parent=54 // pred_check_branch
          %575 = sbr.rel (%p572) target = $region63
        $region62: #{fused_mul_conv_bn.2} parent=54 // pred_region
          %vm576 = vcmask 7168
          %577 = vst.msk [vmem:[#allocation3] sm:$0xff] %vm576, 0.0
          %578 = vst.msk [vmem:[#allocation3 + $0x8] sm:$0xff] %vm576, 0.0
          %579 = vst.msk [vmem:[#allocation3 + $0x10] sm:$0xff] %vm576, 0.0
          %580 = vst.msk [vmem:[#allocation3 + $0x18] sm:$0xff] %vm576, 0.0
          %581 = vst.msk [vmem:[#allocation3 + $0x20] sm:$0xff] %vm576, 0.0
          %582 = vst.msk [vmem:[#allocation3 + $0x28] sm:$0xff] %vm576, 0.0
          %583 = vst.msk [vmem:[#allocation3 + $0x30] sm:$0xff] %vm576, 0.0
          %584 = vst.msk [vmem:[#allocation3 + $0x38] sm:$0xff] %vm576, 0.0
          %585 = vst.msk [vmem:[#allocation3 + $0x40] sm:$0xff] %vm576, 0.0
          %586 = vst.msk [vmem:[#allocation3 + $0x48] sm:$0xff] %vm576, 0.0
          %587 = vst.msk [vmem:[#allocation3 + $0x50] sm:$0xff] %vm576, 0.0
          %588 = vst.msk [vmem:[#allocation3 + $0x58] sm:$0xff] %vm576, 0.0
          %589 = vst.msk [vmem:[#allocation3 + $0x60] sm:$0xff] %vm576, 0.0
          %590 = vst.msk [vmem:[#allocation3 + $0x68] sm:$0xff] %vm576, 0.0
          %591 = vst.msk [vmem:[#allocation3 + $0x70] sm:$0xff] %vm576, 0.0
          %592 = vst.msk [vmem:[#allocation3 + $0x78] sm:$0xff] %vm576, 0.0
          %593 = vst.msk [vmem:[#allocation3 + $0x80] sm:$0xff] %vm576, 0.0
          %594 = vst.msk [vmem:[#allocation3 + $0x88] sm:$0xff] %vm576, 0.0
          %595 = vst.msk [vmem:[#allocation3 + $0x90] sm:$0xff] %vm576, 0.0
          %596 = vst.msk [vmem:[#allocation3 + $0x98] sm:$0xff] %vm576, 0.0
          %597 = vst.msk [vmem:[#allocation3 + $0xa0] sm:$0xff] %vm576, 0.0
          %598 = vst.msk [vmem:[#allocation3 + $0xa8] sm:$0xff] %vm576, 0.0
          %599 = vst.msk [vmem:[#allocation3 + $0xb0] sm:$0xff] %vm576, 0.0
          %600 = vst.msk [vmem:[#allocation3 + $0xb8] sm:$0xff] %vm576, 0.0
          %601 = vst.msk [vmem:[#allocation3 + $0xc0] sm:$0xff] %vm576, 0.0
          %602 = vst.msk [vmem:[#allocation3 + $0xc8] sm:$0xff] %vm576, 0.0
          %603 = vst.msk [vmem:[#allocation3 + $0xd0] sm:$0xff] %vm576, 0.0
          %604 = vst.msk [vmem:[#allocation3 + $0xd8] sm:$0xff] %vm576, 0.0
          %605 = vst.msk [vmem:[#allocation3 + $0xe0] sm:$0xff] %vm576, 0.0
          %606 = vst.msk [vmem:[#allocation3 + $0xe8] sm:$0xff] %vm576, 0.0
          %607 = vst.msk [vmem:[#allocation3 + $0xf0] sm:$0xff] %vm576, 0.0
          %608 = vst.msk [vmem:[#allocation3 + $0xf8] sm:$0xff] %vm576, 0.0
          %609 = vst.msk [vmem:[#allocation4] sm:$0xff] %vm576, 0.0
          %610 = vst.msk [vmem:[#allocation4 + $0x8] sm:$0xff] %vm576, 0.0
          %611 = vst.msk [vmem:[#allocation4 + $0x10] sm:$0xff] %vm576, 0.0
          %612 = vst.msk [vmem:[#allocation4 + $0x18] sm:$0xff] %vm576, 0.0
          %613 = vst.msk [vmem:[#allocation4 + $0x20] sm:$0xff] %vm576, 0.0
          %614 = vst.msk [vmem:[#allocation4 + $0x28] sm:$0xff] %vm576, 0.0
          %615 = vst.msk [vmem:[#allocation4 + $0x30] sm:$0xff] %vm576, 0.0
          %616 = vst.msk [vmem:[#allocation4 + $0x38] sm:$0xff] %vm576, 0.0
          %617 = vst.msk [vmem:[#allocation4 + $0x40] sm:$0xff] %vm576, 0.0
          %618 = vst.msk [vmem:[#allocation4 + $0x48] sm:$0xff] %vm576, 0.0
          %619 = vst.msk [vmem:[#allocation4 + $0x50] sm:$0xff] %vm576, 0.0
          %620 = vst.msk [vmem:[#allocation4 + $0x58] sm:$0xff] %vm576, 0.0
          %621 = vst.msk [vmem:[#allocation4 + $0x60] sm:$0xff] %vm576, 0.0
          %622 = vst.msk [vmem:[#allocation4 + $0x68] sm:$0xff] %vm576, 0.0
          %623 = vst.msk [vmem:[#allocation4 + $0x70] sm:$0xff] %vm576, 0.0
          %624 = vst.msk [vmem:[#allocation4 + $0x78] sm:$0xff] %vm576, 0.0
          %625 = vst.msk [vmem:[#allocation4 + $0x80] sm:$0xff] %vm576, 0.0
          %626 = vst.msk [vmem:[#allocation4 + $0x88] sm:$0xff] %vm576, 0.0
          %627 = vst.msk [vmem:[#allocation4 + $0x90] sm:$0xff] %vm576, 0.0
          %628 = vst.msk [vmem:[#allocation4 + $0x98] sm:$0xff] %vm576, 0.0
          %629 = vst.msk [vmem:[#allocation4 + $0xa0] sm:$0xff] %vm576, 0.0
          %630 = vst.msk [vmem:[#allocation4 + $0xa8] sm:$0xff] %vm576, 0.0
          %631 = vst.msk [vmem:[#allocation4 + $0xb0] sm:$0xff] %vm576, 0.0
          %632 = vst.msk [vmem:[#allocation4 + $0xb8] sm:$0xff] %vm576, 0.0
          %633 = vst.msk [vmem:[#allocation4 + $0xc0] sm:$0xff] %vm576, 0.0
          %634 = vst.msk [vmem:[#allocation4 + $0xc8] sm:$0xff] %vm576, 0.0
          %635 = vst.msk [vmem:[#allocation4 + $0xd0] sm:$0xff] %vm576, 0.0
          %636 = vst.msk [vmem:[#allocation4 + $0xd8] sm:$0xff] %vm576, 0.0
          %637 = vst.msk [vmem:[#allocation4 + $0xe0] sm:$0xff] %vm576, 0.0
          %638 = vst.msk [vmem:[#allocation4 + $0xe8] sm:$0xff] %vm576, 0.0
          %639 = vst.msk [vmem:[#allocation4 + $0xf0] sm:$0xff] %vm576, 0.0
          %640 = vst.msk [vmem:[#allocation4 + $0xf8] sm:$0xff] %vm576, 0.0
        $region63: #{fused_mul_conv_bn.2} parent=54 // pred_fallthru
          _
        // Predicated region
        $region64: #{fused_mul_conv_bn.2} parent=54 // pred_check
          %p641 = pneg %p571
        $region65: #{fused_mul_conv_bn.2} parent=54 // pred_check_branch
          %643 = sbr.rel (%p641) target = $region67
        $region66: #{fused_mul_conv_bn.2} parent=54 // pred_region
          %vm644 = vcmask 400384
          %645 = vst.msk [vmem:[#allocation2] sm:$0xff] %vm644, 0.0
          %646 = vst.msk [vmem:[#allocation2 + $0x8] sm:$0xff] %vm644, 0.0
          %647 = vst.msk [vmem:[#allocation2 + $0x10] sm:$0xff] %vm644, 0.0
          %648 = vst.msk [vmem:[#allocation2 + $0x18] sm:$0xff] %vm644, 0.0
          %649 = vst.msk [vmem:[#allocation2 + $0x20] sm:$0xff] %vm644, 0.0
          %650 = vst.msk [vmem:[#allocation2 + $0x28] sm:$0xff] %vm644, 0.0
          %651 = vst.msk [vmem:[#allocation2 + $0x30] sm:$0xff] %vm644, 0.0
          %652 = vst.msk [vmem:[#allocation2 + $0x38] sm:$0xff] %vm644, 0.0
          %653 = vst.msk [vmem:[#allocation2 + $0x40] sm:$0xff] %vm644, 0.0
          %654 = vst.msk [vmem:[#allocation2 + $0x48] sm:$0xff] %vm644, 0.0
          %655 = vst.msk [vmem:[#allocation2 + $0x50] sm:$0xff] %vm644, 0.0
          %656 = vst.msk [vmem:[#allocation2 + $0x58] sm:$0xff] %vm644, 0.0
          %657 = vst.msk [vmem:[#allocation2 + $0x60] sm:$0xff] %vm644, 0.0
          %658 = vst.msk [vmem:[#allocation2 + $0x68] sm:$0xff] %vm644, 0.0
          %659 = vst.msk [vmem:[#allocation2 + $0x70] sm:$0xff] %vm644, 0.0
          %660 = vst.msk [vmem:[#allocation2 + $0x78] sm:$0xff] %vm644, 0.0
          %661 = vst.msk [vmem:[#allocation2 + $0x80] sm:$0xff] %vm644, 0.0
          %662 = vst.msk [vmem:[#allocation2 + $0x88] sm:$0xff] %vm644, 0.0
          %663 = vst.msk [vmem:[#allocation2 + $0x90] sm:$0xff] %vm644, 0.0
          %664 = vst.msk [vmem:[#allocation2 + $0x98] sm:$0xff] %vm644, 0.0
          %665 = vst.msk [vmem:[#allocation2 + $0xa0] sm:$0xff] %vm644, 0.0
          %666 = vst.msk [vmem:[#allocation2 + $0xa8] sm:$0xff] %vm644, 0.0
          %667 = vst.msk [vmem:[#allocation2 + $0xb0] sm:$0xff] %vm644, 0.0
          %668 = vst.msk [vmem:[#allocation2 + $0xb8] sm:$0xff] %vm644, 0.0
          %669 = vst.msk [vmem:[#allocation2 + $0xc0] sm:$0xff] %vm644, 0.0
          %670 = vst.msk [vmem:[#allocation2 + $0xc8] sm:$0xff] %vm644, 0.0
          %671 = vst.msk [vmem:[#allocation2 + $0xd0] sm:$0xff] %vm644, 0.0
          %672 = vst.msk [vmem:[#allocation2 + $0xd8] sm:$0xff] %vm644, 0.0
          %673 = vst.msk [vmem:[#allocation2 + $0xe0] sm:$0xff] %vm644, 0.0
          %674 = vst.msk [vmem:[#allocation2 + $0xe8] sm:$0xff] %vm644, 0.0
          %675 = vst.msk [vmem:[#allocation2 + $0xf0] sm:$0xff] %vm644, 0.0
          %676 = vst.msk [vmem:[#allocation2 + $0xf8] sm:$0xff] %vm644, 0.0
        $region67: #{fused_mul_conv_bn.2} parent=54 // pred_fallthru
          _
        %v677 = vld [vmem:[#allocation2] sm:$0xff]
        %v678 = vld [vmem:[#allocation2 + $0x8] sm:$0xff]
        %v679 = vld [vmem:[#allocation2 + $0x10] sm:$0xff]
        %v680 = vld [vmem:[#allocation2 + $0x18] sm:$0xff]
        %v681 = vld [vmem:[#allocation2 + $0x20] sm:$0xff]
        %v682 = vld [vmem:[#allocation2 + $0x28] sm:$0xff]
        %v683 = vld [vmem:[#allocation2 + $0x30] sm:$0xff]
        %v684 = vld [vmem:[#allocation2 + $0x38] sm:$0xff]
        %v685 = vld [vmem:[#allocation2 + $0x40] sm:$0xff]
        %v686 = vld [vmem:[#allocation2 + $0x48] sm:$0xff]
        %v687 = vld [vmem:[#allocation2 + $0x50] sm:$0xff]
        %v688 = vld [vmem:[#allocation2 + $0x58] sm:$0xff]
        %v689 = vld [vmem:[#allocation2 + $0x60] sm:$0xff]
        %v690 = vld [vmem:[#allocation2 + $0x68] sm:$0xff]
        %v691 = vld [vmem:[#allocation2 + $0x70] sm:$0xff]
        %v692 = vld [vmem:[#allocation2 + $0x78] sm:$0xff]
        %v693 = vld [vmem:[#allocation2 + $0x80] sm:$0xff]
        %v694 = vld [vmem:[#allocation2 + $0x88] sm:$0xff]
        %v695 = vld [vmem:[#allocation2 + $0x90] sm:$0xff]
        %v696 = vld [vmem:[#allocation2 + $0x98] sm:$0xff]
        %v697 = vld [vmem:[#allocation2 + $0xa0] sm:$0xff]
        %v698 = vld [vmem:[#allocation2 + $0xa8] sm:$0xff]
        %v699 = vld [vmem:[#allocation2 + $0xb0] sm:$0xff]
        %v700 = vld [vmem:[#allocation2 + $0xb8] sm:$0xff]
        %v701 = vld [vmem:[#allocation2 + $0xc0] sm:$0xff]
        %v702 = vld [vmem:[#allocation2 + $0xc8] sm:$0xff]
        %v703 = vld [vmem:[#allocation2 + $0xd0] sm:$0xff]
        %v704 = vld [vmem:[#allocation2 + $0xd8] sm:$0xff]
        %v705 = vld [vmem:[#allocation2 + $0xe0] sm:$0xff]
        %v706 = vld [vmem:[#allocation2 + $0xe8] sm:$0xff]
        %v707 = vld [vmem:[#allocation2 + $0xf0] sm:$0xff]
        %v708 = vld [vmem:[#allocation2 + $0xf8] sm:$0xff]
        %v709 = vld [vmem:[%s518] sm:$0xff]
        %v710 = vld [vmem:[%s518 + $0x8] sm:$0xff]
        %v711 = vld [vmem:[%s518 + $0x10] sm:$0xff]
        %v712 = vld [vmem:[%s518 + $0x18] sm:$0xff]
        %v713 = vld [vmem:[%s518 + $0x20] sm:$0xff]
        %v714 = vld [vmem:[%s518 + $0x28] sm:$0xff]
        %v715 = vld [vmem:[%s518 + $0x30] sm:$0xff]
        %v716 = vld [vmem:[%s518 + $0x38] sm:$0xff]
        %v717 = vld [vmem:[%s518 + $0x40] sm:$0xff]
        %v718 = vld [vmem:[%s518 + $0x48] sm:$0xff]
        %v719 = vld [vmem:[%s518 + $0x50] sm:$0xff]
        %v720 = vld [vmem:[%s518 + $0x58] sm:$0xff]
        %v721 = vld [vmem:[%s518 + $0x60] sm:$0xff]
        %v722 = vld [vmem:[%s518 + $0x68] sm:$0xff]
        %v723 = vld [vmem:[%s518 + $0x70] sm:$0xff]
        %v724 = vld [vmem:[%s518 + $0x78] sm:$0xff]
        %v725 = vld [vmem:[%s518 + $0x80] sm:$0xff]
        %v726 = vld [vmem:[%s518 + $0x88] sm:$0xff]
        %v727 = vld [vmem:[%s518 + $0x90] sm:$0xff]
        %v728 = vld [vmem:[%s518 + $0x98] sm:$0xff]
        %v729 = vld [vmem:[%s518 + $0xa0] sm:$0xff]
        %v730 = vld [vmem:[%s518 + $0xa8] sm:$0xff]
        %v731 = vld [vmem:[%s518 + $0xb0] sm:$0xff]
        %v732 = vld [vmem:[%s518 + $0xb8] sm:$0xff]
        %v733 = vld [vmem:[%s518 + $0xc0] sm:$0xff]
        %v734 = vld [vmem:[%s518 + $0xc8] sm:$0xff]
        %v735 = vld [vmem:[%s518 + $0xd0] sm:$0xff]
        %v736 = vld [vmem:[%s518 + $0xd8] sm:$0xff]
        %v737 = vld [vmem:[%s518 + $0xe0] sm:$0xff]
        %v738 = vld [vmem:[%s518 + $0xe8] sm:$0xff]
        %v739 = vld [vmem:[%s518 + $0xf0] sm:$0xff]
        %v740 = vld [vmem:[%s518 + $0xf8] sm:$0xff]
        %v741 = vld [vmem:[%s518 + $0x100] sm:$0xff]
        %v742 = vld [vmem:[%s518 + $0x108] sm:$0xff]
        %v743 = vld [vmem:[%s518 + $0x110] sm:$0xff]
        %v744 = vld [vmem:[%s518 + $0x118] sm:$0xff]
        %v745 = vld [vmem:[%s518 + $0x120] sm:$0xff]
        %v746 = vld [vmem:[%s518 + $0x128] sm:$0xff]
        %v747 = vld [vmem:[%s518 + $0x130] sm:$0xff]
        %v748 = vld [vmem:[%s518 + $0x138] sm:$0xff]
        %v749 = vld [vmem:[%s518 + $0x140] sm:$0xff]
        %v750 = vld [vmem:[%s518 + $0x148] sm:$0xff]
        %v751 = vld [vmem:[%s518 + $0x150] sm:$0xff]
        %v752 = vld [vmem:[%s518 + $0x158] sm:$0xff]
        %v753 = vld [vmem:[%s518 + $0x160] sm:$0xff]
        %v754 = vld [vmem:[%s518 + $0x168] sm:$0xff]
        %v755 = vld [vmem:[%s518 + $0x170] sm:$0xff]
        %v756 = vld [vmem:[%s518 + $0x178] sm:$0xff]
        %v757 = vld [vmem:[%s518 + $0x180] sm:$0xff]
        %v758 = vld [vmem:[%s518 + $0x188] sm:$0xff]
        %v759 = vld [vmem:[%s518 + $0x190] sm:$0xff]
        %v760 = vld [vmem:[%s518 + $0x198] sm:$0xff]
        %v761 = vld [vmem:[%s518 + $0x1a0] sm:$0xff]
        %v762 = vld [vmem:[%s518 + $0x1a8] sm:$0xff]
        %v763 = vld [vmem:[%s518 + $0x1b0] sm:$0xff]
        %v764 = vld [vmem:[%s518 + $0x1b8] sm:$0xff]
        %v765 = vld [vmem:[%s518 + $0x1c0] sm:$0xff]
        %v766 = vld [vmem:[%s518 + $0x1c8] sm:$0xff]
        %v767 = vld [vmem:[%s518 + $0x1d0] sm:$0xff]
        %v768 = vld [vmem:[%s518 + $0x1d8] sm:$0xff]
        %v769 = vld [vmem:[%s518 + $0x1e0] sm:$0xff]
        %v770 = vld [vmem:[%s518 + $0x1e8] sm:$0xff]
        %v771 = vld [vmem:[%s518 + $0x1f0] sm:$0xff]
        %v772 = vld [vmem:[%s518 + $0x1f8] sm:$0xff]
        %v773 = vld [vmem:[%s518 + $0x200] sm:$0xff]
        %v774 = vld [vmem:[%s518 + $0x208] sm:$0xff]
        %v775 = vld [vmem:[%s518 + $0x210] sm:$0xff]
        %v776 = vld [vmem:[%s518 + $0x218] sm:$0xff]
        %v777 = vld [vmem:[%s518 + $0x220] sm:$0xff]
        %v778 = vld [vmem:[%s518 + $0x228] sm:$0xff]
        %v779 = vld [vmem:[%s518 + $0x230] sm:$0xff]
        %v780 = vld [vmem:[%s518 + $0x238] sm:$0xff]
        %v781 = vld [vmem:[%s518 + $0x240] sm:$0xff]
        %v782 = vld [vmem:[%s518 + $0x248] sm:$0xff]
        %v783 = vld [vmem:[%s518 + $0x250] sm:$0xff]
        %v784 = vld [vmem:[%s518 + $0x258] sm:$0xff]
        %v785 = vld [vmem:[%s518 + $0x260] sm:$0xff]
        %v786 = vld [vmem:[%s518 + $0x268] sm:$0xff]
        %v787 = vld [vmem:[%s518 + $0x270] sm:$0xff]
        %v788 = vld [vmem:[%s518 + $0x278] sm:$0xff]
        %v789 = vld [vmem:[%s518 + $0x280] sm:$0xff]
        %v790 = vld [vmem:[%s518 + $0x288] sm:$0xff]
        %v791 = vld [vmem:[%s518 + $0x290] sm:$0xff]
        %v792 = vld [vmem:[%s518 + $0x298] sm:$0xff]
        %v793 = vld [vmem:[%s518 + $0x2a0] sm:$0xff]
        %v794 = vld [vmem:[%s518 + $0x2a8] sm:$0xff]
        %v795 = vld [vmem:[%s518 + $0x2b0] sm:$0xff]
        %v796 = vld [vmem:[%s518 + $0x2b8] sm:$0xff]
        %v797 = vld [vmem:[%s518 + $0x2c0] sm:$0xff]
        %v798 = vld [vmem:[%s518 + $0x2c8] sm:$0xff]
        %v799 = vld [vmem:[%s518 + $0x2d0] sm:$0xff]
        %v800 = vld [vmem:[%s518 + $0x2d8] sm:$0xff]
        %v801 = vld [vmem:[%s518 + $0x2e0] sm:$0xff]
        %v802 = vld [vmem:[%s518 + $0x2e8] sm:$0xff]
        %v803 = vld [vmem:[%s518 + $0x2f0] sm:$0xff]
        %v804 = vld [vmem:[%s518 + $0x2f8] sm:$0xff]
        %v805 = vld [vmem:[%s518 + $0x300] sm:$0xff]
        %v806 = vld [vmem:[%s518 + $0x308] sm:$0xff]
        %v807 = vld [vmem:[%s518 + $0x310] sm:$0xff]
        %v808 = vld [vmem:[%s518 + $0x318] sm:$0xff]
        %v809 = vld [vmem:[%s518 + $0x320] sm:$0xff]
        %v810 = vld [vmem:[%s518 + $0x328] sm:$0xff]
        %v811 = vld [vmem:[%s518 + $0x330] sm:$0xff]
        %v812 = vld [vmem:[%s518 + $0x338] sm:$0xff]
        %v813 = vld [vmem:[%s518 + $0x340] sm:$0xff]
        %v814 = vld [vmem:[%s518 + $0x348] sm:$0xff]
        %v815 = vld [vmem:[%s518 + $0x350] sm:$0xff]
        %v816 = vld [vmem:[%s518 + $0x358] sm:$0xff]
        %v817 = vld [vmem:[%s518 + $0x360] sm:$0xff]
        %v818 = vld [vmem:[%s518 + $0x368] sm:$0xff]
        %v819 = vld [vmem:[%s518 + $0x370] sm:$0xff]
        %v820 = vld [vmem:[%s518 + $0x378] sm:$0xff]
        %v821 = vld [vmem:[%s518 + $0x380] sm:$0xff]
        %v822 = vld [vmem:[%s518 + $0x388] sm:$0xff]
        %v823 = vld [vmem:[%s518 + $0x390] sm:$0xff]
        %v824 = vld [vmem:[%s518 + $0x398] sm:$0xff]
        %v825 = vld [vmem:[%s518 + $0x3a0] sm:$0xff]
        %v826 = vld [vmem:[%s518 + $0x3a8] sm:$0xff]
        %v827 = vld [vmem:[%s518 + $0x3b0] sm:$0xff]
        %v828 = vld [vmem:[%s518 + $0x3b8] sm:$0xff]
        %v829 = vld [vmem:[%s518 + $0x3c0] sm:$0xff]
        %v830 = vld [vmem:[%s518 + $0x3c8] sm:$0xff]
        %v831 = vld [vmem:[%s518 + $0x3d0] sm:$0xff]
        %v832 = vld [vmem:[%s518 + $0x3d8] sm:$0xff]
        %v833 = vld [vmem:[%s518 + $0x3e0] sm:$0xff]
        %v834 = vld [vmem:[%s518 + $0x3e8] sm:$0xff]
        %v835 = vld [vmem:[%s518 + $0x3f0] sm:$0xff]
        %v836 = vld [vmem:[%s518 + $0x3f8] sm:$0xff]
        %v837 = vld [vmem:[%s562] sm:$0xff]
        %v838 = vld [vmem:[%s562 + $0x8] sm:$0xff]
        %v839 = vld [vmem:[%s562 + $0x10] sm:$0xff]
        %v840 = vld [vmem:[%s562 + $0x18] sm:$0xff]
        %v841 = vld [vmem:[%s562 + $0x20] sm:$0xff]
        %v842 = vld [vmem:[%s562 + $0x28] sm:$0xff]
        %v843 = vld [vmem:[%s562 + $0x30] sm:$0xff]
        %v844 = vld [vmem:[%s562 + $0x38] sm:$0xff]
        %v845 = vld [vmem:[%s562 + $0x40] sm:$0xff]
        %v846 = vld [vmem:[%s562 + $0x48] sm:$0xff]
        %v847 = vld [vmem:[%s562 + $0x50] sm:$0xff]
        %v848 = vld [vmem:[%s562 + $0x58] sm:$0xff]
        %v849 = vld [vmem:[%s562 + $0x60] sm:$0xff]
        %v850 = vld [vmem:[%s562 + $0x68] sm:$0xff]
        %v851 = vld [vmem:[%s562 + $0x70] sm:$0xff]
        %v852 = vld [vmem:[%s562 + $0x78] sm:$0xff]
        %v853 = vld [vmem:[%s562 + $0x80] sm:$0xff]
        %v854 = vld [vmem:[%s562 + $0x88] sm:$0xff]
        %v855 = vld [vmem:[%s562 + $0x90] sm:$0xff]
        %v856 = vld [vmem:[%s562 + $0x98] sm:$0xff]
        %v857 = vld [vmem:[%s562 + $0xa0] sm:$0xff]
        %v858 = vld [vmem:[%s562 + $0xa8] sm:$0xff]
        %v859 = vld [vmem:[%s562 + $0xb0] sm:$0xff]
        %v860 = vld [vmem:[%s562 + $0xb8] sm:$0xff]
        %v861 = vld [vmem:[%s562 + $0xc0] sm:$0xff]
        %v862 = vld [vmem:[%s562 + $0xc8] sm:$0xff]
        %v863 = vld [vmem:[%s562 + $0xd0] sm:$0xff]
        %v864 = vld [vmem:[%s562 + $0xd8] sm:$0xff]
        %v865 = vld [vmem:[%s562 + $0xe0] sm:$0xff]
        %v866 = vld [vmem:[%s562 + $0xe8] sm:$0xff]
        %v867 = vld [vmem:[%s562 + $0xf0] sm:$0xff]
        %v868 = vld [vmem:[%s562 + $0xf8] sm:$0xff]
        %v869 = vld [vmem:[%s562 + $0x100] sm:$0xff]
        %v870 = vld [vmem:[%s562 + $0x108] sm:$0xff]
        %v871 = vld [vmem:[%s562 + $0x110] sm:$0xff]
        %v872 = vld [vmem:[%s562 + $0x118] sm:$0xff]
        %v873 = vld [vmem:[%s562 + $0x120] sm:$0xff]
        %v874 = vld [vmem:[%s562 + $0x128] sm:$0xff]
        %v875 = vld [vmem:[%s562 + $0x130] sm:$0xff]
        %v876 = vld [vmem:[%s562 + $0x138] sm:$0xff]
        %v877 = vld [vmem:[%s562 + $0x140] sm:$0xff]
        %v878 = vld [vmem:[%s562 + $0x148] sm:$0xff]
        %v879 = vld [vmem:[%s562 + $0x150] sm:$0xff]
        %v880 = vld [vmem:[%s562 + $0x158] sm:$0xff]
        %v881 = vld [vmem:[%s562 + $0x160] sm:$0xff]
        %v882 = vld [vmem:[%s562 + $0x168] sm:$0xff]
        %v883 = vld [vmem:[%s562 + $0x170] sm:$0xff]
        %v884 = vld [vmem:[%s562 + $0x178] sm:$0xff]
        %v885 = vld [vmem:[%s562 + $0x180] sm:$0xff]
        %v886 = vld [vmem:[%s562 + $0x188] sm:$0xff]
        %v887 = vld [vmem:[%s562 + $0x190] sm:$0xff]
        %v888 = vld [vmem:[%s562 + $0x198] sm:$0xff]
        %v889 = vld [vmem:[%s562 + $0x1a0] sm:$0xff]
        %v890 = vld [vmem:[%s562 + $0x1a8] sm:$0xff]
        %v891 = vld [vmem:[%s562 + $0x1b0] sm:$0xff]
        %v892 = vld [vmem:[%s562 + $0x1b8] sm:$0xff]
        %v893 = vld [vmem:[%s562 + $0x1c0] sm:$0xff]
        %v894 = vld [vmem:[%s562 + $0x1c8] sm:$0xff]
        %v895 = vld [vmem:[%s562 + $0x1d0] sm:$0xff]
        %v896 = vld [vmem:[%s562 + $0x1d8] sm:$0xff]
        %v897 = vld [vmem:[%s562 + $0x1e0] sm:$0xff]
        %v898 = vld [vmem:[%s562 + $0x1e8] sm:$0xff]
        %v899 = vld [vmem:[%s562 + $0x1f0] sm:$0xff]
        %v900 = vld [vmem:[%s562 + $0x1f8] sm:$0xff]
        %901 = vmatpush.msra.mxu0 %v852
        %902 = vmatpush.msra.mxu0 %v851
        %903 = vmatpush.msra.mxu0 %v850
        %904 = vmatpush.msra.mxu0 %v849
        %905 = vmatpush.msra.mxu0 %v848
        %906 = vmatpush.msra.mxu0 %v847
        %907 = vmatpush.msra.mxu0 %v846
        %908 = vmatpush.msra.mxu0 %v845
        %909 = vmatpush.msra.mxu0 %v844
        %910 = vmatpush.msra.mxu0 %v843
        %911 = vmatpush.msra.mxu0 %v842
        %912 = vmatpush.msra.mxu0 %v841
        %913 = vmatpush.msra.mxu0 %v840
        %914 = vmatpush.msra.mxu0 %v839
        %915 = vmatpush.msra.mxu0 %v838
        %916 = vmatpush.msra.mxu0 %v837
        %917 = vmatmul.f32.gmra.mxu0 %v709
        %v918 = vpop.f32.mrf.mxu0
        %v919 = vadd.f32 0.0, %v918
        %920 = vmatmul.f32.gmra.mxu0 %v713
        %v921 = vpop.f32.mrf.mxu0
        %v922 = vadd.f32 0.0, %v921
        %923 = vmatmul.f32.gmra.mxu0 %v717
        %v924 = vpop.f32.mrf.mxu0
        %v925 = vadd.f32 0.0, %v924
        %926 = vmatmul.f32.gmra.mxu0 %v721
        %v927 = vpop.f32.mrf.mxu0
        %v928 = vadd.f32 0.0, %v927
        %929 = vmatmul.f32.gmra.mxu0 %v725
        %v930 = vpop.f32.mrf.mxu0
        %v931 = vadd.f32 0.0, %v930
        %932 = vmatmul.f32.gmra.mxu0 %v729
        %v933 = vpop.f32.mrf.mxu0
        %v934 = vadd.f32 0.0, %v933
        %935 = vmatmul.f32.gmra.mxu0 %v733
        %v936 = vpop.f32.mrf.mxu0
        %v937 = vadd.f32 0.0, %v936
        %938 = vmatmul.f32.gmra.mxu0 %v737
        %v939 = vpop.f32.mrf.mxu0
        %v940 = vadd.f32 0.0, %v939
        %941 = vmatmul.f32.gmra.mxu0 %v741
        %v942 = vpop.f32.mrf.mxu0
        %v943 = vadd.f32 0.0, %v942
        %944 = vmatmul.f32.gmra.mxu0 %v745
        %v945 = vpop.f32.mrf.mxu0
        %v946 = vadd.f32 0.0, %v945
        %947 = vmatmul.f32.gmra.mxu0 %v749
        %v948 = vpop.f32.mrf.mxu0
        %v949 = vadd.f32 0.0, %v948
        %950 = vmatmul.f32.gmra.mxu0 %v753
        %v951 = vpop.f32.mrf.mxu0
        %v952 = vadd.f32 0.0, %v951
        %953 = vmatmul.f32.gmra.mxu0 %v757
        %v954 = vpop.f32.mrf.mxu0
        %v955 = vadd.f32 0.0, %v954
        %956 = vmatmul.f32.gmra.mxu0 %v761
        %v957 = vpop.f32.mrf.mxu0
        %v958 = vadd.f32 0.0, %v957
        %959 = vmatmul.f32.gmra.mxu0 %v765
        %v960 = vpop.f32.mrf.mxu0
        %v961 = vadd.f32 0.0, %v960
        %962 = vmatmul.f32.gmra.mxu0 %v769
        %v963 = vpop.f32.mrf.mxu0
        %v964 = vadd.f32 0.0, %v963
        %965 = vmatmul.f32.gmra.mxu0 %v773
        %v966 = vpop.f32.mrf.mxu0
        %v967 = vadd.f32 0.0, %v966
        %968 = vmatmul.f32.gmra.mxu0 %v777
        %v969 = vpop.f32.mrf.mxu0
        %v970 = vadd.f32 0.0, %v969
        %971 = vmatmul.f32.gmra.mxu0 %v781
        %v972 = vpop.f32.mrf.mxu0
        %v973 = vadd.f32 0.0, %v972
        %974 = vmatmul.f32.gmra.mxu0 %v785
        %v975 = vpop.f32.mrf.mxu0
        %v976 = vadd.f32 0.0, %v975
        %977 = vmatmul.f32.gmra.mxu0 %v789
        %v978 = vpop.f32.mrf.mxu0
        %v979 = vadd.f32 0.0, %v978
        %980 = vmatmul.f32.gmra.mxu0 %v793
        %v981 = vpop.f32.mrf.mxu0
        %v982 = vadd.f32 0.0, %v981
        %983 = vmatmul.f32.gmra.mxu0 %v797
        %v984 = vpop.f32.mrf.mxu0
        %v985 = vadd.f32 0.0, %v984
        %986 = vmatmul.f32.gmra.mxu0 %v801
        %v987 = vpop.f32.mrf.mxu0
        %v988 = vadd.f32 0.0, %v987
        %989 = vmatmul.f32.gmra.mxu0 %v805
        %v990 = vpop.f32.mrf.mxu0
        %v991 = vadd.f32 0.0, %v990
        %992 = vmatmul.f32.gmra.mxu0 %v809
        %v993 = vpop.f32.mrf.mxu0
        %v994 = vadd.f32 0.0, %v993
        %995 = vmatmul.f32.gmra.mxu0 %v813
        %v996 = vpop.f32.mrf.mxu0
        %v997 = vadd.f32 0.0, %v996
        %998 = vmatmul.f32.gmra.mxu0 %v817
        %v999 = vpop.f32.mrf.mxu0
        %v1000 = vadd.f32 0.0, %v999
        %1001 = vmatmul.f32.gmra.mxu0 %v821
        %v1002 = vpop.f32.mrf.mxu0
        %v1003 = vadd.f32 0.0, %v1002
        %1004 = vmatmul.f32.gmra.mxu0 %v825
        %v1005 = vpop.f32.mrf.mxu0
        %v1006 = vadd.f32 0.0, %v1005
        %1007 = vmatmul.f32.gmra.mxu0 %v829
        %v1008 = vpop.f32.mrf.mxu0
        %v1009 = vadd.f32 0.0, %v1008
        %1010 = vmatmul.f32.gmra.mxu0 %v833
        %v1011 = vpop.f32.mrf.mxu0
        %v1012 = vadd.f32 0.0, %v1011
        %1013 = vdwg.mxu0
        %1014 = vmatpush.msra.mxu0 %v868
        %1015 = vmatpush.msra.mxu0 %v867
        %1016 = vmatpush.msra.mxu0 %v866
        %1017 = vmatpush.msra.mxu0 %v865
        %1018 = vmatpush.msra.mxu0 %v864
        %1019 = vmatpush.msra.mxu0 %v863
        %1020 = vmatpush.msra.mxu0 %v862
        %1021 = vmatpush.msra.mxu0 %v861
        %1022 = vmatpush.msra.mxu0 %v860
        %1023 = vmatpush.msra.mxu0 %v859
        %1024 = vmatpush.msra.mxu0 %v858
        %1025 = vmatpush.msra.mxu0 %v857
        %1026 = vmatpush.msra.mxu0 %v856
        %1027 = vmatpush.msra.mxu0 %v855
        %1028 = vmatpush.msra.mxu0 %v854
        %1029 = vmatpush.msra.mxu0 %v853
        %1030 = vmatmul.f32.gmra.mxu0 %v710
        %v1031 = vpop.f32.mrf.mxu0
        %v1032 = vadd.f32 %v919, %v1031
        %1033 = vmatmul.f32.gmra.mxu0 %v714
        %v1034 = vpop.f32.mrf.mxu0
        %v1035 = vadd.f32 %v922, %v1034
        %1036 = vmatmul.f32.gmra.mxu0 %v718
        %v1037 = vpop.f32.mrf.mxu0
        %v1038 = vadd.f32 %v925, %v1037
        %1039 = vmatmul.f32.gmra.mxu0 %v722
        %v1040 = vpop.f32.mrf.mxu0
        %v1041 = vadd.f32 %v928, %v1040
        %1042 = vmatmul.f32.gmra.mxu0 %v726
        %v1043 = vpop.f32.mrf.mxu0
        %v1044 = vadd.f32 %v931, %v1043
        %1045 = vmatmul.f32.gmra.mxu0 %v730
        %v1046 = vpop.f32.mrf.mxu0
        %v1047 = vadd.f32 %v934, %v1046
        %1048 = vmatmul.f32.gmra.mxu0 %v734
        %v1049 = vpop.f32.mrf.mxu0
        %v1050 = vadd.f32 %v937, %v1049
        %1051 = vmatmul.f32.gmra.mxu0 %v738
        %v1052 = vpop.f32.mrf.mxu0
        %v1053 = vadd.f32 %v940, %v1052
        %1054 = vmatmul.f32.gmra.mxu0 %v742
        %v1055 = vpop.f32.mrf.mxu0
        %v1056 = vadd.f32 %v943, %v1055
        %1057 = vmatmul.f32.gmra.mxu0 %v746
        %v1058 = vpop.f32.mrf.mxu0
        %v1059 = vadd.f32 %v946, %v1058
        %1060 = vmatmul.f32.gmra.mxu0 %v750
        %v1061 = vpop.f32.mrf.mxu0
        %v1062 = vadd.f32 %v949, %v1061
        %1063 = vmatmul.f32.gmra.mxu0 %v754
        %v1064 = vpop.f32.mrf.mxu0
        %v1065 = vadd.f32 %v952, %v1064
        %1066 = vmatmul.f32.gmra.mxu0 %v758
        %v1067 = vpop.f32.mrf.mxu0
        %v1068 = vadd.f32 %v955, %v1067
        %1069 = vmatmul.f32.gmra.mxu0 %v762
        %v1070 = vpop.f32.mrf.mxu0
        %v1071 = vadd.f32 %v958, %v1070
        %1072 = vmatmul.f32.gmra.mxu0 %v766
        %v1073 = vpop.f32.mrf.mxu0
        %v1074 = vadd.f32 %v961, %v1073
        %1075 = vmatmul.f32.gmra.mxu0 %v770
        %v1076 = vpop.f32.mrf.mxu0
        %v1077 = vadd.f32 %v964, %v1076
        %1078 = vmatmul.f32.gmra.mxu0 %v774
        %v1079 = vpop.f32.mrf.mxu0
        %v1080 = vadd.f32 %v967, %v1079
        %1081 = vmatmul.f32.gmra.mxu0 %v778
        %v1082 = vpop.f32.mrf.mxu0
        %v1083 = vadd.f32 %v970, %v1082
        %1084 = vmatmul.f32.gmra.mxu0 %v782
        %v1085 = vpop.f32.mrf.mxu0
        %v1086 = vadd.f32 %v973, %v1085
        %1087 = vmatmul.f32.gmra.mxu0 %v786
        %v1088 = vpop.f32.mrf.mxu0
        %v1089 = vadd.f32 %v976, %v1088
        %1090 = vmatmul.f32.gmra.mxu0 %v790
        %v1091 = vpop.f32.mrf.mxu0
        %v1092 = vadd.f32 %v979, %v1091
        %1093 = vmatmul.f32.gmra.mxu0 %v794
        %v1094 = vpop.f32.mrf.mxu0
        %v1095 = vadd.f32 %v982, %v1094
        %1096 = vmatmul.f32.gmra.mxu0 %v798
        %v1097 = vpop.f32.mrf.mxu0
        %v1098 = vadd.f32 %v985, %v1097
        %1099 = vmatmul.f32.gmra.mxu0 %v802
        %v1100 = vpop.f32.mrf.mxu0
        %v1101 = vadd.f32 %v988, %v1100
        %1102 = vmatmul.f32.gmra.mxu0 %v806
        %v1103 = vpop.f32.mrf.mxu0
        %v1104 = vadd.f32 %v991, %v1103
        %1105 = vmatmul.f32.gmra.mxu0 %v810
        %v1106 = vpop.f32.mrf.mxu0
        %v1107 = vadd.f32 %v994, %v1106
        %1108 = vmatmul.f32.gmra.mxu0 %v814
        %v1109 = vpop.f32.mrf.mxu0
        %v1110 = vadd.f32 %v997, %v1109
        %1111 = vmatmul.f32.gmra.mxu0 %v818
        %v1112 = vpop.f32.mrf.mxu0
        %v1113 = vadd.f32 %v1000, %v1112
        %1114 = vmatmul.f32.gmra.mxu0 %v822
        %v1115 = vpop.f32.mrf.mxu0
        %v1116 = vadd.f32 %v1003, %v1115
        %1117 = vmatmul.f32.gmra.mxu0 %v826
        %v1118 = vpop.f32.mrf.mxu0
        %v1119 = vadd.f32 %v1006, %v1118
        %1120 = vmatmul.f32.gmra.mxu0 %v830
        %v1121 = vpop.f32.mrf.mxu0
        %v1122 = vadd.f32 %v1009, %v1121
        %1123 = vmatmul.f32.gmra.mxu0 %v834
        %v1124 = vpop.f32.mrf.mxu0
        %v1125 = vadd.f32 %v1012, %v1124
        %1126 = vdwg.mxu0
        %1127 = vmatpush.msra.mxu0 %v884
        %1128 = vmatpush.msra.mxu0 %v883
        %1129 = vmatpush.msra.mxu0 %v882
        %1130 = vmatpush.msra.mxu0 %v881
        %1131 = vmatpush.msra.mxu0 %v880
        %1132 = vmatpush.msra.mxu0 %v879
        %1133 = vmatpush.msra.mxu0 %v878
        %1134 = vmatpush.msra.mxu0 %v877
        %1135 = vmatpush.msra.mxu0 %v876
        %1136 = vmatpush.msra.mxu0 %v875
        %1137 = vmatpush.msra.mxu0 %v874
        %1138 = vmatpush.msra.mxu0 %v873
        %1139 = vmatpush.msra.mxu0 %v872
        %1140 = vmatpush.msra.mxu0 %v871
        %1141 = vmatpush.msra.mxu0 %v870
        %1142 = vmatpush.msra.mxu0 %v869
        %1143 = vmatmul.f32.gmra.mxu0 %v711
        %v1144 = vpop.f32.mrf.mxu0
        %v1145 = vadd.f32 %v1032, %v1144
        %1146 = vmatmul.f32.gmra.mxu0 %v715
        %v1147 = vpop.f32.mrf.mxu0
        %v1148 = vadd.f32 %v1035, %v1147
        %1149 = vmatmul.f32.gmra.mxu0 %v719
        %v1150 = vpop.f32.mrf.mxu0
        %v1151 = vadd.f32 %v1038, %v1150
        %1152 = vmatmul.f32.gmra.mxu0 %v723
        %v1153 = vpop.f32.mrf.mxu0
        %v1154 = vadd.f32 %v1041, %v1153
        %1155 = vmatmul.f32.gmra.mxu0 %v727
        %v1156 = vpop.f32.mrf.mxu0
        %v1157 = vadd.f32 %v1044, %v1156
        %1158 = vmatmul.f32.gmra.mxu0 %v731
        %v1159 = vpop.f32.mrf.mxu0
        %v1160 = vadd.f32 %v1047, %v1159
        %1161 = vmatmul.f32.gmra.mxu0 %v735
        %v1162 = vpop.f32.mrf.mxu0
        %v1163 = vadd.f32 %v1050, %v1162
        %1164 = vmatmul.f32.gmra.mxu0 %v739
        %v1165 = vpop.f32.mrf.mxu0
        %v1166 = vadd.f32 %v1053, %v1165
        %1167 = vmatmul.f32.gmra.mxu0 %v743
        %v1168 = vpop.f32.mrf.mxu0
        %v1169 = vadd.f32 %v1056, %v1168
        %1170 = vmatmul.f32.gmra.mxu0 %v747
        %v1171 = vpop.f32.mrf.mxu0
        %v1172 = vadd.f32 %v1059, %v1171
        %1173 = vmatmul.f32.gmra.mxu0 %v751
        %v1174 = vpop.f32.mrf.mxu0
        %v1175 = vadd.f32 %v1062, %v1174
        %1176 = vmatmul.f32.gmra.mxu0 %v755
        %v1177 = vpop.f32.mrf.mxu0
        %v1178 = vadd.f32 %v1065, %v1177
        %1179 = vmatmul.f32.gmra.mxu0 %v759
        %v1180 = vpop.f32.mrf.mxu0
        %v1181 = vadd.f32 %v1068, %v1180
        %1182 = vmatmul.f32.gmra.mxu0 %v763
        %v1183 = vpop.f32.mrf.mxu0
        %v1184 = vadd.f32 %v1071, %v1183
        %1185 = vmatmul.f32.gmra.mxu0 %v767
        %v1186 = vpop.f32.mrf.mxu0
        %v1187 = vadd.f32 %v1074, %v1186
        %1188 = vmatmul.f32.gmra.mxu0 %v771
        %v1189 = vpop.f32.mrf.mxu0
        %v1190 = vadd.f32 %v1077, %v1189
        %1191 = vmatmul.f32.gmra.mxu0 %v775
        %v1192 = vpop.f32.mrf.mxu0
        %v1193 = vadd.f32 %v1080, %v1192
        %1194 = vmatmul.f32.gmra.mxu0 %v779
        %v1195 = vpop.f32.mrf.mxu0
        %v1196 = vadd.f32 %v1083, %v1195
        %1197 = vmatmul.f32.gmra.mxu0 %v783
        %v1198 = vpop.f32.mrf.mxu0
        %v1199 = vadd.f32 %v1086, %v1198
        %1200 = vmatmul.f32.gmra.mxu0 %v787
        %v1201 = vpop.f32.mrf.mxu0
        %v1202 = vadd.f32 %v1089, %v1201
        %1203 = vmatmul.f32.gmra.mxu0 %v791
        %v1204 = vpop.f32.mrf.mxu0
        %v1205 = vadd.f32 %v1092, %v1204
        %1206 = vmatmul.f32.gmra.mxu0 %v795
        %v1207 = vpop.f32.mrf.mxu0
        %v1208 = vadd.f32 %v1095, %v1207
        %1209 = vmatmul.f32.gmra.mxu0 %v799
        %v1210 = vpop.f32.mrf.mxu0
        %v1211 = vadd.f32 %v1098, %v1210
        %1212 = vmatmul.f32.gmra.mxu0 %v803
        %v1213 = vpop.f32.mrf.mxu0
        %v1214 = vadd.f32 %v1101, %v1213
        %1215 = vmatmul.f32.gmra.mxu0 %v807
        %v1216 = vpop.f32.mrf.mxu0
        %v1217 = vadd.f32 %v1104, %v1216
        %1218 = vmatmul.f32.gmra.mxu0 %v811
        %v1219 = vpop.f32.mrf.mxu0
        %v1220 = vadd.f32 %v1107, %v1219
        %1221 = vmatmul.f32.gmra.mxu0 %v815
        %v1222 = vpop.f32.mrf.mxu0
        %v1223 = vadd.f32 %v1110, %v1222
        %1224 = vmatmul.f32.gmra.mxu0 %v819
        %v1225 = vpop.f32.mrf.mxu0
        %v1226 = vadd.f32 %v1113, %v1225
        %1227 = vmatmul.f32.gmra.mxu0 %v823
        %v1228 = vpop.f32.mrf.mxu0
        %v1229 = vadd.f32 %v1116, %v1228
        %1230 = vmatmul.f32.gmra.mxu0 %v827
        %v1231 = vpop.f32.mrf.mxu0
        %v1232 = vadd.f32 %v1119, %v1231
        %1233 = vmatmul.f32.gmra.mxu0 %v831
        %v1234 = vpop.f32.mrf.mxu0
        %v1235 = vadd.f32 %v1122, %v1234
        %1236 = vmatmul.f32.gmra.mxu0 %v835
        %v1237 = vpop.f32.mrf.mxu0
        %v1238 = vadd.f32 %v1125, %v1237
        %1239 = vdwg.mxu0
        %1240 = vmatpush.msra.mxu0 %v900
        %1241 = vmatpush.msra.mxu0 %v899
        %1242 = vmatpush.msra.mxu0 %v898
        %1243 = vmatpush.msra.mxu0 %v897
        %1244 = vmatpush.msra.mxu0 %v896
        %1245 = vmatpush.msra.mxu0 %v895
        %1246 = vmatpush.msra.mxu0 %v894
        %1247 = vmatpush.msra.mxu0 %v893
        %1248 = vmatpush.msra.mxu0 %v892
        %1249 = vmatpush.msra.mxu0 %v891
        %1250 = vmatpush.msra.mxu0 %v890
        %1251 = vmatpush.msra.mxu0 %v889
        %1252 = vmatpush.msra.mxu0 %v888
        %1253 = vmatpush.msra.mxu0 %v887
        %1254 = vmatpush.msra.mxu0 %v886
        %1255 = vmatpush.msra.mxu0 %v885
        %1256 = vmatmul.f32.gmra.mxu0 %v712
        %v1257 = vpop.f32.mrf.mxu0
        %v1258 = vadd.f32 %v1145, %v1257
        %1259 = vmatmul.f32.gmra.mxu0 %v716
        %v1260 = vpop.f32.mrf.mxu0
        %v1261 = vadd.f32 %v1148, %v1260
        %1262 = vmatmul.f32.gmra.mxu0 %v720
        %v1263 = vpop.f32.mrf.mxu0
        %v1264 = vadd.f32 %v1151, %v1263
        %1265 = vmatmul.f32.gmra.mxu0 %v724
        %v1266 = vpop.f32.mrf.mxu0
        %v1267 = vadd.f32 %v1154, %v1266
        %1268 = vmatmul.f32.gmra.mxu0 %v728
        %v1269 = vpop.f32.mrf.mxu0
        %v1270 = vadd.f32 %v1157, %v1269
        %1271 = vmatmul.f32.gmra.mxu0 %v732
        %v1272 = vpop.f32.mrf.mxu0
        %v1273 = vadd.f32 %v1160, %v1272
        %1274 = vmatmul.f32.gmra.mxu0 %v736
        %v1275 = vpop.f32.mrf.mxu0
        %v1276 = vadd.f32 %v1163, %v1275
        %1277 = vmatmul.f32.gmra.mxu0 %v740
        %v1278 = vpop.f32.mrf.mxu0
        %v1279 = vadd.f32 %v1166, %v1278
        %1280 = vmatmul.f32.gmra.mxu0 %v744
        %v1281 = vpop.f32.mrf.mxu0
        %v1282 = vadd.f32 %v1169, %v1281
        %1283 = vmatmul.f32.gmra.mxu0 %v748
        %v1284 = vpop.f32.mrf.mxu0
        %v1285 = vadd.f32 %v1172, %v1284
        %1286 = vmatmul.f32.gmra.mxu0 %v752
        %v1287 = vpop.f32.mrf.mxu0
        %v1288 = vadd.f32 %v1175, %v1287
        %1289 = vmatmul.f32.gmra.mxu0 %v756
        %v1290 = vpop.f32.mrf.mxu0
        %v1291 = vadd.f32 %v1178, %v1290
        %1292 = vmatmul.f32.gmra.mxu0 %v760
        %v1293 = vpop.f32.mrf.mxu0
        %v1294 = vadd.f32 %v1181, %v1293
        %1295 = vmatmul.f32.gmra.mxu0 %v764
        %v1296 = vpop.f32.mrf.mxu0
        %v1297 = vadd.f32 %v1184, %v1296
        %1298 = vmatmul.f32.gmra.mxu0 %v768
        %v1299 = vpop.f32.mrf.mxu0
        %v1300 = vadd.f32 %v1187, %v1299
        %1301 = vmatmul.f32.gmra.mxu0 %v772
        %v1302 = vpop.f32.mrf.mxu0
        %v1303 = vadd.f32 %v1190, %v1302
        %1304 = vmatmul.f32.gmra.mxu0 %v776
        %v1305 = vpop.f32.mrf.mxu0
        %v1306 = vadd.f32 %v1193, %v1305
        %1307 = vmatmul.f32.gmra.mxu0 %v780
        %v1308 = vpop.f32.mrf.mxu0
        %v1309 = vadd.f32 %v1196, %v1308
        %1310 = vmatmul.f32.gmra.mxu0 %v784
        %v1311 = vpop.f32.mrf.mxu0
        %v1312 = vadd.f32 %v1199, %v1311
        %1313 = vmatmul.f32.gmra.mxu0 %v788
        %v1314 = vpop.f32.mrf.mxu0
        %v1315 = vadd.f32 %v1202, %v1314
        %1316 = vmatmul.f32.gmra.mxu0 %v792
        %v1317 = vpop.f32.mrf.mxu0
        %v1318 = vadd.f32 %v1205, %v1317
        %1319 = vmatmul.f32.gmra.mxu0 %v796
        %v1320 = vpop.f32.mrf.mxu0
        %v1321 = vadd.f32 %v1208, %v1320
        %1322 = vmatmul.f32.gmra.mxu0 %v800
        %v1323 = vpop.f32.mrf.mxu0
        %v1324 = vadd.f32 %v1211, %v1323
        %1325 = vmatmul.f32.gmra.mxu0 %v804
        %v1326 = vpop.f32.mrf.mxu0
        %v1327 = vadd.f32 %v1214, %v1326
        %1328 = vmatmul.f32.gmra.mxu0 %v808
        %v1329 = vpop.f32.mrf.mxu0
        %v1330 = vadd.f32 %v1217, %v1329
        %1331 = vmatmul.f32.gmra.mxu0 %v812
        %v1332 = vpop.f32.mrf.mxu0
        %v1333 = vadd.f32 %v1220, %v1332
        %1334 = vmatmul.f32.gmra.mxu0 %v816
        %v1335 = vpop.f32.mrf.mxu0
        %v1336 = vadd.f32 %v1223, %v1335
        %1337 = vmatmul.f32.gmra.mxu0 %v820
        %v1338 = vpop.f32.mrf.mxu0
        %v1339 = vadd.f32 %v1226, %v1338
        %1340 = vmatmul.f32.gmra.mxu0 %v824
        %v1341 = vpop.f32.mrf.mxu0
        %v1342 = vadd.f32 %v1229, %v1341
        %1343 = vmatmul.f32.gmra.mxu0 %v828
        %v1344 = vpop.f32.mrf.mxu0
        %v1345 = vadd.f32 %v1232, %v1344
        %1346 = vmatmul.f32.gmra.mxu0 %v832
        %v1347 = vpop.f32.mrf.mxu0
        %v1348 = vadd.f32 %v1235, %v1347
        %1349 = vmatmul.f32.gmra.mxu0 %v836
        %v1350 = vpop.f32.mrf.mxu0
        %v1351 = vadd.f32 %v1238, %v1350
        %1352 = vdwg.mxu0
        %v1353 = vadd.f32 %v677, %v1258
        %v1354 = vadd.f32 %v678, %v1261
        %v1355 = vadd.f32 %v679, %v1264
        %v1356 = vadd.f32 %v680, %v1267
        %v1357 = vadd.f32 %v681, %v1270
        %v1358 = vadd.f32 %v682, %v1273
        %v1359 = vadd.f32 %v683, %v1276
        %v1360 = vadd.f32 %v684, %v1279
        %v1361 = vadd.f32 %v685, %v1282
        %v1362 = vadd.f32 %v686, %v1285
        %v1363 = vadd.f32 %v687, %v1288
        %v1364 = vadd.f32 %v688, %v1291
        %v1365 = vadd.f32 %v689, %v1294
        %v1366 = vadd.f32 %v690, %v1297
        %v1367 = vadd.f32 %v691, %v1300
        %v1368 = vadd.f32 %v692, %v1303
        %v1369 = vadd.f32 %v693, %v1306
        %v1370 = vadd.f32 %v694, %v1309
        %v1371 = vadd.f32 %v695, %v1312
        %v1372 = vadd.f32 %v696, %v1315
        %v1373 = vadd.f32 %v697, %v1318
        %v1374 = vadd.f32 %v698, %v1321
        %v1375 = vadd.f32 %v699, %v1324
        %v1376 = vadd.f32 %v700, %v1327
        %v1377 = vadd.f32 %v701, %v1330
        %v1378 = vadd.f32 %v702, %v1333
        %v1379 = vadd.f32 %v703, %v1336
        %v1380 = vadd.f32 %v704, %v1339
        %v1381 = vadd.f32 %v705, %v1342
        %v1382 = vadd.f32 %v706, %v1345
        %v1383 = vadd.f32 %v707, %v1348
        %v1384 = vadd.f32 %v708, %v1351
        %vm1385 = vcmask 400384
        %1386 = vst.msk [vmem:[#allocation2] sm:$0xff] %vm1385, %v1353
        %1387 = vst.msk [vmem:[#allocation2 + $0x8] sm:$0xff] %vm1385, %v1354
        %1388 = vst.msk [vmem:[#allocation2 + $0x10] sm:$0xff] %vm1385, %v1355
        %1389 = vst.msk [vmem:[#allocation2 + $0x18] sm:$0xff] %vm1385, %v1356
        %1390 = vst.msk [vmem:[#allocation2 + $0x20] sm:$0xff] %vm1385, %v1357
        %1391 = vst.msk [vmem:[#allocation2 + $0x28] sm:$0xff] %vm1385, %v1358
        %1392 = vst.msk [vmem:[#allocation2 + $0x30] sm:$0xff] %vm1385, %v1359
        %1393 = vst.msk [vmem:[#allocation2 + $0x38] sm:$0xff] %vm1385, %v1360
        %1394 = vst.msk [vmem:[#allocation2 + $0x40] sm:$0xff] %vm1385, %v1361
        %1395 = vst.msk [vmem:[#allocation2 + $0x48] sm:$0xff] %vm1385, %v1362
        %1396 = vst.msk [vmem:[#allocation2 + $0x50] sm:$0xff] %vm1385, %v1363
        %1397 = vst.msk [vmem:[#allocation2 + $0x58] sm:$0xff] %vm1385, %v1364
        %1398 = vst.msk [vmem:[#allocation2 + $0x60] sm:$0xff] %vm1385, %v1365
        %1399 = vst.msk [vmem:[#allocation2 + $0x68] sm:$0xff] %vm1385, %v1366
        %1400 = vst.msk [vmem:[#allocation2 + $0x70] sm:$0xff] %vm1385, %v1367
        %1401 = vst.msk [vmem:[#allocation2 + $0x78] sm:$0xff] %vm1385, %v1368
        %1402 = vst.msk [vmem:[#allocation2 + $0x80] sm:$0xff] %vm1385, %v1369
        %1403 = vst.msk [vmem:[#allocation2 + $0x88] sm:$0xff] %vm1385, %v1370
        %1404 = vst.msk [vmem:[#allocation2 + $0x90] sm:$0xff] %vm1385, %v1371
        %1405 = vst.msk [vmem:[#allocation2 + $0x98] sm:$0xff] %vm1385, %v1372
        %1406 = vst.msk [vmem:[#allocation2 + $0xa0] sm:$0xff] %vm1385, %v1373
        %1407 = vst.msk [vmem:[#allocation2 + $0xa8] sm:$0xff] %vm1385, %v1374
        %1408 = vst.msk [vmem:[#allocation2 + $0xb0] sm:$0xff] %vm1385, %v1375
        %1409 = vst.msk [vmem:[#allocation2 + $0xb8] sm:$0xff] %vm1385, %v1376
        %1410 = vst.msk [vmem:[#allocation2 + $0xc0] sm:$0xff] %vm1385, %v1377
        %1411 = vst.msk [vmem:[#allocation2 + $0xc8] sm:$0xff] %vm1385, %v1378
        %1412 = vst.msk [vmem:[#allocation2 + $0xd0] sm:$0xff] %vm1385, %v1379
        %1413 = vst.msk [vmem:[#allocation2 + $0xd8] sm:$0xff] %vm1385, %v1380
        %1414 = vst.msk [vmem:[#allocation2 + $0xe0] sm:$0xff] %vm1385, %v1381
        %1415 = vst.msk [vmem:[#allocation2 + $0xe8] sm:$0xff] %vm1385, %v1382
        %1416 = vst.msk [vmem:[#allocation2 + $0xf0] sm:$0xff] %vm1385, %v1383
        %1417 = vst.msk [vmem:[#allocation2 + $0xf8] sm:$0xff] %vm1385, %v1384
        %p1418 = scmp.eq.s32.totalorder %s23, 2
        // Predicated region
        $region68: #{fused_mul_conv_bn.2} parent=54 // pred_check
          %p1419 = pneg %p1418
        $region69: #{fused_mul_conv_bn.2} parent=54 // pred_check_branch
          %1421 = sbr.rel (%p1419) target = $region71
        $region70: #{fused_mul_conv_bn.2} parent=54 // pred_region
          %v1422 = vld [vmem:[#allocation2] sm:$0xff]
          %v1423 = vld [vmem:[#allocation2 + $0x8] sm:$0xff]
          %v1424 = vld [vmem:[#allocation2 + $0x10] sm:$0xff]
          %v1425 = vld [vmem:[#allocation2 + $0x18] sm:$0xff]
          %v1426 = vld [vmem:[#allocation2 + $0x20] sm:$0xff]
          %v1427 = vld [vmem:[#allocation2 + $0x28] sm:$0xff]
          %v1428 = vld [vmem:[#allocation2 + $0x30] sm:$0xff]
          %v1429 = vld [vmem:[#allocation2 + $0x38] sm:$0xff]
          %v1430 = vld [vmem:[#allocation2 + $0x40] sm:$0xff]
          %v1431 = vld [vmem:[#allocation2 + $0x48] sm:$0xff]
          %v1432 = vld [vmem:[#allocation2 + $0x50] sm:$0xff]
          %v1433 = vld [vmem:[#allocation2 + $0x58] sm:$0xff]
          %v1434 = vld [vmem:[#allocation2 + $0x60] sm:$0xff]
          %v1435 = vld [vmem:[#allocation2 + $0x68] sm:$0xff]
          %v1436 = vld [vmem:[#allocation2 + $0x70] sm:$0xff]
          %v1437 = vld [vmem:[#allocation2 + $0x78] sm:$0xff]
          %v1438 = vld [vmem:[#allocation2 + $0x80] sm:$0xff]
          %v1439 = vld [vmem:[#allocation2 + $0x88] sm:$0xff]
          %v1440 = vld [vmem:[#allocation2 + $0x90] sm:$0xff]
          %v1441 = vld [vmem:[#allocation2 + $0x98] sm:$0xff]
          %v1442 = vld [vmem:[#allocation2 + $0xa0] sm:$0xff]
          %v1443 = vld [vmem:[#allocation2 + $0xa8] sm:$0xff]
          %v1444 = vld [vmem:[#allocation2 + $0xb0] sm:$0xff]
          %v1445 = vld [vmem:[#allocation2 + $0xb8] sm:$0xff]
          %v1446 = vld [vmem:[#allocation2 + $0xc0] sm:$0xff]
          %v1447 = vld [vmem:[#allocation2 + $0xc8] sm:$0xff]
          %v1448 = vld [vmem:[#allocation2 + $0xd0] sm:$0xff]
          %v1449 = vld [vmem:[#allocation2 + $0xd8] sm:$0xff]
          %v1450 = vld [vmem:[#allocation2 + $0xe0] sm:$0xff]
          %v1451 = vld [vmem:[#allocation2 + $0xe8] sm:$0xff]
          %v1452 = vld [vmem:[#allocation2 + $0xf0] sm:$0xff]
          %v1453 = vld [vmem:[#allocation2 + $0xf8] sm:$0xff]
          %1454 = vst.msk [vmem:[%s569] sm:$0xff] %vm1385, %v1422
          %1455 = vst.msk [vmem:[%s569 + $0x8] sm:$0xff] %vm1385, %v1423
          %1456 = vst.msk [vmem:[%s569 + $0x10] sm:$0xff] %vm1385, %v1424
          %1457 = vst.msk [vmem:[%s569 + $0x18] sm:$0xff] %vm1385, %v1425
          %1458 = vst.msk [vmem:[%s569 + $0x20] sm:$0xff] %vm1385, %v1426
          %1459 = vst.msk [vmem:[%s569 + $0x28] sm:$0xff] %vm1385, %v1427
          %1460 = vst.msk [vmem:[%s569 + $0x30] sm:$0xff] %vm1385, %v1428
          %1461 = vst.msk [vmem:[%s569 + $0x38] sm:$0xff] %vm1385, %v1429
          %1462 = vst.msk [vmem:[%s569 + $0x40] sm:$0xff] %vm1385, %v1430
          %1463 = vst.msk [vmem:[%s569 + $0x48] sm:$0xff] %vm1385, %v1431
          %1464 = vst.msk [vmem:[%s569 + $0x50] sm:$0xff] %vm1385, %v1432
          %1465 = vst.msk [vmem:[%s569 + $0x58] sm:$0xff] %vm1385, %v1433
          %1466 = vst.msk [vmem:[%s569 + $0x60] sm:$0xff] %vm1385, %v1434
          %1467 = vst.msk [vmem:[%s569 + $0x68] sm:$0xff] %vm1385, %v1435
          %1468 = vst.msk [vmem:[%s569 + $0x70] sm:$0xff] %vm1385, %v1436
          %1469 = vst.msk [vmem:[%s569 + $0x78] sm:$0xff] %vm1385, %v1437
          %1470 = vst.msk [vmem:[%s569 + $0x80] sm:$0xff] %vm1385, %v1438
          %1471 = vst.msk [vmem:[%s569 + $0x88] sm:$0xff] %vm1385, %v1439
          %1472 = vst.msk [vmem:[%s569 + $0x90] sm:$0xff] %vm1385, %v1440
          %1473 = vst.msk [vmem:[%s569 + $0x98] sm:$0xff] %vm1385, %v1441
          %1474 = vst.msk [vmem:[%s569 + $0xa0] sm:$0xff] %vm1385, %v1442
          %1475 = vst.msk [vmem:[%s569 + $0xa8] sm:$0xff] %vm1385, %v1443
          %1476 = vst.msk [vmem:[%s569 + $0xb0] sm:$0xff] %vm1385, %v1444
          %1477 = vst.msk [vmem:[%s569 + $0xb8] sm:$0xff] %vm1385, %v1445
          %1478 = vst.msk [vmem:[%s569 + $0xc0] sm:$0xff] %vm1385, %v1446
          %1479 = vst.msk [vmem:[%s569 + $0xc8] sm:$0xff] %vm1385, %v1447
          %1480 = vst.msk [vmem:[%s569 + $0xd0] sm:$0xff] %vm1385, %v1448
          %1481 = vst.msk [vmem:[%s569 + $0xd8] sm:$0xff] %vm1385, %v1449
          %1482 = vst.msk [vmem:[%s569 + $0xe0] sm:$0xff] %vm1385, %v1450
          %1483 = vst.msk [vmem:[%s569 + $0xe8] sm:$0xff] %vm1385, %v1451
          %1484 = vst.msk [vmem:[%s569 + $0xf0] sm:$0xff] %vm1385, %v1452
          %1485 = vst.msk [vmem:[%s569 + $0xf8] sm:$0xff] %vm1385, %v1453
          %v1486 = vld [vmem:[#allocation3] sm:$0xff]
          %v1487 = vld [vmem:[#allocation3 + $0x8] sm:$0xff]
          %v1488 = vld [vmem:[#allocation3 + $0x10] sm:$0xff]
          %v1489 = vld [vmem:[#allocation3 + $0x18] sm:$0xff]
          %v1490 = vld [vmem:[#allocation3 + $0x20] sm:$0xff]
          %v1491 = vld [vmem:[#allocation3 + $0x28] sm:$0xff]
          %v1492 = vld [vmem:[#allocation3 + $0x30] sm:$0xff]
          %v1493 = vld [vmem:[#allocation3 + $0x38] sm:$0xff]
          %v1494 = vld [vmem:[#allocation3 + $0x40] sm:$0xff]
          %v1495 = vld [vmem:[#allocation3 + $0x48] sm:$0xff]
          %v1496 = vld [vmem:[#allocation3 + $0x50] sm:$0xff]
          %v1497 = vld [vmem:[#allocation3 + $0x58] sm:$0xff]
          %v1498 = vld [vmem:[#allocation3 + $0x60] sm:$0xff]
          %v1499 = vld [vmem:[#allocation3 + $0x68] sm:$0xff]
          %v1500 = vld [vmem:[#allocation3 + $0x70] sm:$0xff]
          %v1501 = vld [vmem:[#allocation3 + $0x78] sm:$0xff]
          %v1502 = vld [vmem:[#allocation3 + $0x80] sm:$0xff]
          %v1503 = vld [vmem:[#allocation3 + $0x88] sm:$0xff]
          %v1504 = vld [vmem:[#allocation3 + $0x90] sm:$0xff]
          %v1505 = vld [vmem:[#allocation3 + $0x98] sm:$0xff]
          %v1506 = vld [vmem:[#allocation3 + $0xa0] sm:$0xff]
          %v1507 = vld [vmem:[#allocation3 + $0xa8] sm:$0xff]
          %v1508 = vld [vmem:[#allocation3 + $0xb0] sm:$0xff]
          %v1509 = vld [vmem:[#allocation3 + $0xb8] sm:$0xff]
          %v1510 = vld [vmem:[#allocation3 + $0xc0] sm:$0xff]
          %v1511 = vld [vmem:[#allocation3 + $0xc8] sm:$0xff]
          %v1512 = vld [vmem:[#allocation3 + $0xd0] sm:$0xff]
          %v1513 = vld [vmem:[#allocation3 + $0xd8] sm:$0xff]
          %v1514 = vld [vmem:[#allocation3 + $0xe0] sm:$0xff]
          %v1515 = vld [vmem:[#allocation3 + $0xe8] sm:$0xff]
          %v1516 = vld [vmem:[#allocation3 + $0xf0] sm:$0xff]
          %v1517 = vld [vmem:[#allocation3 + $0xf8] sm:$0xff]
          %v1518 = vsel %vm1385, %v1422, 0.0
          %1519 = vadd.xlane.f32.xlu0 %v1518
          %v1520 = vpop.xlane.xlu0 %1519
          %v1521 = vsel %vm1385, %v1423, 0.0
          %1522 = vadd.xlane.f32.xlu0 %v1521
          %v1523 = vpop.xlane.xlu0 %1522
          %v1524 = vsel %vm1385, %v1424, 0.0
          %1525 = vadd.xlane.f32.xlu0 %v1524
          %v1526 = vpop.xlane.xlu0 %1525
          %v1527 = vsel %vm1385, %v1425, 0.0
          %1528 = vadd.xlane.f32.xlu0 %v1527
          %v1529 = vpop.xlane.xlu0 %1528
          %v1530 = vsel %vm1385, %v1426, 0.0
          %1531 = vadd.xlane.f32.xlu0 %v1530
          %v1532 = vpop.xlane.xlu0 %1531
          %v1533 = vsel %vm1385, %v1427, 0.0
          %1534 = vadd.xlane.f32.xlu0 %v1533
          %v1535 = vpop.xlane.xlu0 %1534
          %v1536 = vsel %vm1385, %v1428, 0.0
          %1537 = vadd.xlane.f32.xlu0 %v1536
          %v1538 = vpop.xlane.xlu0 %1537
          %v1539 = vsel %vm1385, %v1429, 0.0
          %1540 = vadd.xlane.f32.xlu0 %v1539
          %v1541 = vpop.xlane.xlu0 %1540
          %v1542 = vsel %vm1385, %v1430, 0.0
          %1543 = vadd.xlane.f32.xlu0 %v1542
          %v1544 = vpop.xlane.xlu0 %1543
          %v1545 = vsel %vm1385, %v1431, 0.0
          %1546 = vadd.xlane.f32.xlu0 %v1545
          %v1547 = vpop.xlane.xlu0 %1546
          %v1548 = vsel %vm1385, %v1432, 0.0
          %1549 = vadd.xlane.f32.xlu0 %v1548
          %v1550 = vpop.xlane.xlu0 %1549
          %v1551 = vsel %vm1385, %v1433, 0.0
          %1552 = vadd.xlane.f32.xlu0 %v1551
          %v1553 = vpop.xlane.xlu0 %1552
          %v1554 = vsel %vm1385, %v1434, 0.0
          %1555 = vadd.xlane.f32.xlu0 %v1554
          %v1556 = vpop.xlane.xlu0 %1555
          %v1557 = vsel %vm1385, %v1435, 0.0
          %1558 = vadd.xlane.f32.xlu0 %v1557
          %v1559 = vpop.xlane.xlu0 %1558
          %v1560 = vsel %vm1385, %v1436, 0.0
          %1561 = vadd.xlane.f32.xlu0 %v1560
          %v1562 = vpop.xlane.xlu0 %1561
          %v1563 = vsel %vm1385, %v1437, 0.0
          %1564 = vadd.xlane.f32.xlu0 %v1563
          %v1565 = vpop.xlane.xlu0 %1564
          %v1566 = vsel %vm1385, %v1438, 0.0
          %1567 = vadd.xlane.f32.xlu0 %v1566
          %v1568 = vpop.xlane.xlu0 %1567
          %v1569 = vsel %vm1385, %v1439, 0.0
          %1570 = vadd.xlane.f32.xlu0 %v1569
          %v1571 = vpop.xlane.xlu0 %1570
          %v1572 = vsel %vm1385, %v1440, 0.0
          %1573 = vadd.xlane.f32.xlu0 %v1572
          %v1574 = vpop.xlane.xlu0 %1573
          %v1575 = vsel %vm1385, %v1441, 0.0
          %1576 = vadd.xlane.f32.xlu0 %v1575
          %v1577 = vpop.xlane.xlu0 %1576
          %v1578 = vsel %vm1385, %v1442, 0.0
          %1579 = vadd.xlane.f32.xlu0 %v1578
          %v1580 = vpop.xlane.xlu0 %1579
          %v1581 = vsel %vm1385, %v1443, 0.0
          %1582 = vadd.xlane.f32.xlu0 %v1581
          %v1583 = vpop.xlane.xlu0 %1582
          %v1584 = vsel %vm1385, %v1444, 0.0
          %1585 = vadd.xlane.f32.xlu0 %v1584
          %v1586 = vpop.xlane.xlu0 %1585
          %v1587 = vsel %vm1385, %v1445, 0.0
          %1588 = vadd.xlane.f32.xlu0 %v1587
          %v1589 = vpop.xlane.xlu0 %1588
          %v1590 = vsel %vm1385, %v1446, 0.0
          %1591 = vadd.xlane.f32.xlu0 %v1590
          %v1592 = vpop.xlane.xlu0 %1591
          %v1593 = vsel %vm1385, %v1447, 0.0
          %1594 = vadd.xlane.f32.xlu0 %v1593
          %v1595 = vpop.xlane.xlu0 %1594
          %v1596 = vsel %vm1385, %v1448, 0.0
          %1597 = vadd.xlane.f32.xlu0 %v1596
          %v1598 = vpop.xlane.xlu0 %1597
          %v1599 = vsel %vm1385, %v1449, 0.0
          %1600 = vadd.xlane.f32.xlu0 %v1599
          %v1601 = vpop.xlane.xlu0 %1600
          %v1602 = vsel %vm1385, %v1450, 0.0
          %1603 = vadd.xlane.f32.xlu0 %v1602
          %v1604 = vpop.xlane.xlu0 %1603
          %v1605 = vsel %vm1385, %v1451, 0.0
          %1606 = vadd.xlane.f32.xlu0 %v1605
          %v1607 = vpop.xlane.xlu0 %1606
          %v1608 = vsel %vm1385, %v1452, 0.0
          %1609 = vadd.xlane.f32.xlu0 %v1608
          %v1610 = vpop.xlane.xlu0 %1609
          %v1611 = vsel %vm1385, %v1453, 0.0
          %1612 = vadd.xlane.f32.xlu0 %v1611
          %v1613 = vpop.xlane.xlu0 %1612
          %v1614 = vadd.f32 %v1486, %v1520
          %v1615 = vadd.f32 %v1487, %v1523
          %v1616 = vadd.f32 %v1488, %v1526
          %v1617 = vadd.f32 %v1489, %v1529
          %v1618 = vadd.f32 %v1490, %v1532
          %v1619 = vadd.f32 %v1491, %v1535
          %v1620 = vadd.f32 %v1492, %v1538
          %v1621 = vadd.f32 %v1493, %v1541
          %v1622 = vadd.f32 %v1494, %v1544
          %v1623 = vadd.f32 %v1495, %v1547
          %v1624 = vadd.f32 %v1496, %v1550
          %v1625 = vadd.f32 %v1497, %v1553
          %v1626 = vadd.f32 %v1498, %v1556
          %v1627 = vadd.f32 %v1499, %v1559
          %v1628 = vadd.f32 %v1500, %v1562
          %v1629 = vadd.f32 %v1501, %v1565
          %v1630 = vadd.f32 %v1502, %v1568
          %v1631 = vadd.f32 %v1503, %v1571
          %v1632 = vadd.f32 %v1504, %v1574
          %v1633 = vadd.f32 %v1505, %v1577
          %v1634 = vadd.f32 %v1506, %v1580
          %v1635 = vadd.f32 %v1507, %v1583
          %v1636 = vadd.f32 %v1508, %v1586
          %v1637 = vadd.f32 %v1509, %v1589
          %v1638 = vadd.f32 %v1510, %v1592
          %v1639 = vadd.f32 %v1511, %v1595
          %v1640 = vadd.f32 %v1512, %v1598
          %v1641 = vadd.f32 %v1513, %v1601
          %v1642 = vadd.f32 %v1514, %v1604
          %v1643 = vadd.f32 %v1515, %v1607
          %v1644 = vadd.f32 %v1516, %v1610
          %v1645 = vadd.f32 %v1517, %v1613
          %vm1646 = vcmask 7168
          %1647 = vst.msk [vmem:[#allocation3] sm:$0xff] %vm1646, %v1614
          %1648 = vst.msk [vmem:[#allocation3 + $0x8] sm:$0xff] %vm1646, %v1615
          %1649 = vst.msk [vmem:[#allocation3 + $0x10] sm:$0xff] %vm1646, %v1616
          %1650 = vst.msk [vmem:[#allocation3 + $0x18] sm:$0xff] %vm1646, %v1617
          %1651 = vst.msk [vmem:[#allocation3 + $0x20] sm:$0xff] %vm1646, %v1618
          %1652 = vst.msk [vmem:[#allocation3 + $0x28] sm:$0xff] %vm1646, %v1619
          %1653 = vst.msk [vmem:[#allocation3 + $0x30] sm:$0xff] %vm1646, %v1620
          %1654 = vst.msk [vmem:[#allocation3 + $0x38] sm:$0xff] %vm1646, %v1621
          %1655 = vst.msk [vmem:[#allocation3 + $0x40] sm:$0xff] %vm1646, %v1622
          %1656 = vst.msk [vmem:[#allocation3 + $0x48] sm:$0xff] %vm1646, %v1623
          %1657 = vst.msk [vmem:[#allocation3 + $0x50] sm:$0xff] %vm1646, %v1624
          %1658 = vst.msk [vmem:[#allocation3 + $0x58] sm:$0xff] %vm1646, %v1625
          %1659 = vst.msk [vmem:[#allocation3 + $0x60] sm:$0xff] %vm1646, %v1626
          %1660 = vst.msk [vmem:[#allocation3 + $0x68] sm:$0xff] %vm1646, %v1627
          %1661 = vst.msk [vmem:[#allocation3 + $0x70] sm:$0xff] %vm1646, %v1628
          %1662 = vst.msk [vmem:[#allocation3 + $0x78] sm:$0xff] %vm1646, %v1629
          %1663 = vst.msk [vmem:[#allocation3 + $0x80] sm:$0xff] %vm1646, %v1630
          %1664 = vst.msk [vmem:[#allocation3 + $0x88] sm:$0xff] %vm1646, %v1631
          %1665 = vst.msk [vmem:[#allocation3 + $0x90] sm:$0xff] %vm1646, %v1632
          %1666 = vst.msk [vmem:[#allocation3 + $0x98] sm:$0xff] %vm1646, %v1633
          %1667 = vst.msk [vmem:[#allocation3 + $0xa0] sm:$0xff] %vm1646, %v1634
          %1668 = vst.msk [vmem:[#allocation3 + $0xa8] sm:$0xff] %vm1646, %v1635
          %1669 = vst.msk [vmem:[#allocation3 + $0xb0] sm:$0xff] %vm1646, %v1636
          %1670 = vst.msk [vmem:[#allocation3 + $0xb8] sm:$0xff] %vm1646, %v1637
          %1671 = vst.msk [vmem:[#allocation3 + $0xc0] sm:$0xff] %vm1646, %v1638
          %1672 = vst.msk [vmem:[#allocation3 + $0xc8] sm:$0xff] %vm1646, %v1639
          %1673 = vst.msk [vmem:[#allocation3 + $0xd0] sm:$0xff] %vm1646, %v1640
          %1674 = vst.msk [vmem:[#allocation3 + $0xd8] sm:$0xff] %vm1646, %v1641
          %1675 = vst.msk [vmem:[#allocation3 + $0xe0] sm:$0xff] %vm1646, %v1642
          %1676 = vst.msk [vmem:[#allocation3 + $0xe8] sm:$0xff] %vm1646, %v1643
          %1677 = vst.msk [vmem:[#allocation3 + $0xf0] sm:$0xff] %vm1646, %v1644
          %1678 = vst.msk [vmem:[#allocation3 + $0xf8] sm:$0xff] %vm1646, %v1645
          %v1679 = vld [vmem:[#allocation4] sm:$0xff]
          %v1680 = vld [vmem:[#allocation4 + $0x8] sm:$0xff]
          %v1681 = vld [vmem:[#allocation4 + $0x10] sm:$0xff]
          %v1682 = vld [vmem:[#allocation4 + $0x18] sm:$0xff]
          %v1683 = vld [vmem:[#allocation4 + $0x20] sm:$0xff]
          %v1684 = vld [vmem:[#allocation4 + $0x28] sm:$0xff]
          %v1685 = vld [vmem:[#allocation4 + $0x30] sm:$0xff]
          %v1686 = vld [vmem:[#allocation4 + $0x38] sm:$0xff]
          %v1687 = vld [vmem:[#allocation4 + $0x40] sm:$0xff]
          %v1688 = vld [vmem:[#allocation4 + $0x48] sm:$0xff]
          %v1689 = vld [vmem:[#allocation4 + $0x50] sm:$0xff]
          %v1690 = vld [vmem:[#allocation4 + $0x58] sm:$0xff]
          %v1691 = vld [vmem:[#allocation4 + $0x60] sm:$0xff]
          %v1692 = vld [vmem:[#allocation4 + $0x68] sm:$0xff]
          %v1693 = vld [vmem:[#allocation4 + $0x70] sm:$0xff]
          %v1694 = vld [vmem:[#allocation4 + $0x78] sm:$0xff]
          %v1695 = vld [vmem:[#allocation4 + $0x80] sm:$0xff]
          %v1696 = vld [vmem:[#allocation4 + $0x88] sm:$0xff]
          %v1697 = vld [vmem:[#allocation4 + $0x90] sm:$0xff]
          %v1698 = vld [vmem:[#allocation4 + $0x98] sm:$0xff]
          %v1699 = vld [vmem:[#allocation4 + $0xa0] sm:$0xff]
          %v1700 = vld [vmem:[#allocation4 + $0xa8] sm:$0xff]
          %v1701 = vld [vmem:[#allocation4 + $0xb0] sm:$0xff]
          %v1702 = vld [vmem:[#allocation4 + $0xb8] sm:$0xff]
          %v1703 = vld [vmem:[#allocation4 + $0xc0] sm:$0xff]
          %v1704 = vld [vmem:[#allocation4 + $0xc8] sm:$0xff]
          %v1705 = vld [vmem:[#allocation4 + $0xd0] sm:$0xff]
          %v1706 = vld [vmem:[#allocation4 + $0xd8] sm:$0xff]
          %v1707 = vld [vmem:[#allocation4 + $0xe0] sm:$0xff]
          %v1708 = vld [vmem:[#allocation4 + $0xe8] sm:$0xff]
          %v1709 = vld [vmem:[#allocation4 + $0xf0] sm:$0xff]
          %v1710 = vld [vmem:[#allocation4 + $0xf8] sm:$0xff]
          %v1711 = vmul.f32 %v1422, %v1422
          %v1712 = vmul.f32 %v1423, %v1423
          %v1713 = vmul.f32 %v1424, %v1424
          %v1714 = vmul.f32 %v1425, %v1425
          %v1715 = vmul.f32 %v1426, %v1426
          %v1716 = vmul.f32 %v1427, %v1427
          %v1717 = vmul.f32 %v1428, %v1428
          %v1718 = vmul.f32 %v1429, %v1429
          %v1719 = vmul.f32 %v1430, %v1430
          %v1720 = vmul.f32 %v1431, %v1431
          %v1721 = vmul.f32 %v1432, %v1432
          %v1722 = vmul.f32 %v1433, %v1433
          %v1723 = vmul.f32 %v1434, %v1434
          %v1724 = vmul.f32 %v1435, %v1435
          %v1725 = vmul.f32 %v1436, %v1436
          %v1726 = vmul.f32 %v1437, %v1437
          %v1727 = vmul.f32 %v1438, %v1438
          %v1728 = vmul.f32 %v1439, %v1439
          %v1729 = vmul.f32 %v1440, %v1440
          %v1730 = vmul.f32 %v1441, %v1441
          %v1731 = vmul.f32 %v1442, %v1442
          %v1732 = vmul.f32 %v1443, %v1443
          %v1733 = vmul.f32 %v1444, %v1444
          %v1734 = vmul.f32 %v1445, %v1445
          %v1735 = vmul.f32 %v1446, %v1446
          %v1736 = vmul.f32 %v1447, %v1447
          %v1737 = vmul.f32 %v1448, %v1448
          %v1738 = vmul.f32 %v1449, %v1449
          %v1739 = vmul.f32 %v1450, %v1450
          %v1740 = vmul.f32 %v1451, %v1451
          %v1741 = vmul.f32 %v1452, %v1452
          %v1742 = vmul.f32 %v1453, %v1453
          %v1743 = vsel %vm1385, %v1711, 0.0
          %1744 = vadd.xlane.f32.xlu0 %v1743
          %v1745 = vpop.xlane.xlu0 %1744
          %v1746 = vsel %vm1385, %v1712, 0.0
          %1747 = vadd.xlane.f32.xlu0 %v1746
          %v1748 = vpop.xlane.xlu0 %1747
          %v1749 = vsel %vm1385, %v1713, 0.0
          %1750 = vadd.xlane.f32.xlu0 %v1749
          %v1751 = vpop.xlane.xlu0 %1750
          %v1752 = vsel %vm1385, %v1714, 0.0
          %1753 = vadd.xlane.f32.xlu0 %v1752
          %v1754 = vpop.xlane.xlu0 %1753
          %v1755 = vsel %vm1385, %v1715, 0.0
          %1756 = vadd.xlane.f32.xlu0 %v1755
          %v1757 = vpop.xlane.xlu0 %1756
          %v1758 = vsel %vm1385, %v1716, 0.0
          %1759 = vadd.xlane.f32.xlu0 %v1758
          %v1760 = vpop.xlane.xlu0 %1759
          %v1761 = vsel %vm1385, %v1717, 0.0
          %1762 = vadd.xlane.f32.xlu0 %v1761
          %v1763 = vpop.xlane.xlu0 %1762
          %v1764 = vsel %vm1385, %v1718, 0.0
          %1765 = vadd.xlane.f32.xlu0 %v1764
          %v1766 = vpop.xlane.xlu0 %1765
          %v1767 = vsel %vm1385, %v1719, 0.0
          %1768 = vadd.xlane.f32.xlu0 %v1767
          %v1769 = vpop.xlane.xlu0 %1768
          %v1770 = vsel %vm1385, %v1720, 0.0
          %1771 = vadd.xlane.f32.xlu0 %v1770
          %v1772 = vpop.xlane.xlu0 %1771
          %v1773 = vsel %vm1385, %v1721, 0.0
          %1774 = vadd.xlane.f32.xlu0 %v1773
          %v1775 = vpop.xlane.xlu0 %1774
          %v1776 = vsel %vm1385, %v1722, 0.0
          %1777 = vadd.xlane.f32.xlu0 %v1776
          %v1778 = vpop.xlane.xlu0 %1777
          %v1779 = vsel %vm1385, %v1723, 0.0
          %1780 = vadd.xlane.f32.xlu0 %v1779
          %v1781 = vpop.xlane.xlu0 %1780
          %v1782 = vsel %vm1385, %v1724, 0.0
          %1783 = vadd.xlane.f32.xlu0 %v1782
          %v1784 = vpop.xlane.xlu0 %1783
          %v1785 = vsel %vm1385, %v1725, 0.0
          %1786 = vadd.xlane.f32.xlu0 %v1785
          %v1787 = vpop.xlane.xlu0 %1786
          %v1788 = vsel %vm1385, %v1726, 0.0
          %1789 = vadd.xlane.f32.xlu0 %v1788
          %v1790 = vpop.xlane.xlu0 %1789
          %v1791 = vsel %vm1385, %v1727, 0.0
          %1792 = vadd.xlane.f32.xlu0 %v1791
          %v1793 = vpop.xlane.xlu0 %1792
          %v1794 = vsel %vm1385, %v1728, 0.0
          %1795 = vadd.xlane.f32.xlu0 %v1794
          %v1796 = vpop.xlane.xlu0 %1795
          %v1797 = vsel %vm1385, %v1729, 0.0
          %1798 = vadd.xlane.f32.xlu0 %v1797
          %v1799 = vpop.xlane.xlu0 %1798
          %v1800 = vsel %vm1385, %v1730, 0.0
          %1801 = vadd.xlane.f32.xlu0 %v1800
          %v1802 = vpop.xlane.xlu0 %1801
          %v1803 = vsel %vm1385, %v1731, 0.0
          %1804 = vadd.xlane.f32.xlu0 %v1803
          %v1805 = vpop.xlane.xlu0 %1804
          %v1806 = vsel %vm1385, %v1732, 0.0
          %1807 = vadd.xlane.f32.xlu0 %v1806
          %v1808 = vpop.xlane.xlu0 %1807
          %v1809 = vsel %vm1385, %v1733, 0.0
          %1810 = vadd.xlane.f32.xlu0 %v1809
          %v1811 = vpop.xlane.xlu0 %1810
          %v1812 = vsel %vm1385, %v1734, 0.0
          %1813 = vadd.xlane.f32.xlu0 %v1812
          %v1814 = vpop.xlane.xlu0 %1813
          %v1815 = vsel %vm1385, %v1735, 0.0
          %1816 = vadd.xlane.f32.xlu0 %v1815
          %v1817 = vpop.xlane.xlu0 %1816
          %v1818 = vsel %vm1385, %v1736, 0.0
          %1819 = vadd.xlane.f32.xlu0 %v1818
          %v1820 = vpop.xlane.xlu0 %1819
          %v1821 = vsel %vm1385, %v1737, 0.0
          %1822 = vadd.xlane.f32.xlu0 %v1821
          %v1823 = vpop.xlane.xlu0 %1822
          %v1824 = vsel %vm1385, %v1738, 0.0
          %1825 = vadd.xlane.f32.xlu0 %v1824
          %v1826 = vpop.xlane.xlu0 %1825
          %v1827 = vsel %vm1385, %v1739, 0.0
          %1828 = vadd.xlane.f32.xlu0 %v1827
          %v1829 = vpop.xlane.xlu0 %1828
          %v1830 = vsel %vm1385, %v1740, 0.0
          %1831 = vadd.xlane.f32.xlu0 %v1830
          %v1832 = vpop.xlane.xlu0 %1831
          %v1833 = vsel %vm1385, %v1741, 0.0
          %1834 = vadd.xlane.f32.xlu0 %v1833
          %v1835 = vpop.xlane.xlu0 %1834
          %v1836 = vsel %vm1385, %v1742, 0.0
          %1837 = vadd.xlane.f32.xlu0 %v1836
          %v1838 = vpop.xlane.xlu0 %1837
          %v1839 = vadd.f32 %v1679, %v1745
          %v1840 = vadd.f32 %v1680, %v1748
          %v1841 = vadd.f32 %v1681, %v1751
          %v1842 = vadd.f32 %v1682, %v1754
          %v1843 = vadd.f32 %v1683, %v1757
          %v1844 = vadd.f32 %v1684, %v1760
          %v1845 = vadd.f32 %v1685, %v1763
          %v1846 = vadd.f32 %v1686, %v1766
          %v1847 = vadd.f32 %v1687, %v1769
          %v1848 = vadd.f32 %v1688, %v1772
          %v1849 = vadd.f32 %v1689, %v1775
          %v1850 = vadd.f32 %v1690, %v1778
          %v1851 = vadd.f32 %v1691, %v1781
          %v1852 = vadd.f32 %v1692, %v1784
          %v1853 = vadd.f32 %v1693, %v1787
          %v1854 = vadd.f32 %v1694, %v1790
          %v1855 = vadd.f32 %v1695, %v1793
          %v1856 = vadd.f32 %v1696, %v1796
          %v1857 = vadd.f32 %v1697, %v1799
          %v1858 = vadd.f32 %v1698, %v1802
          %v1859 = vadd.f32 %v1699, %v1805
          %v1860 = vadd.f32 %v1700, %v1808
          %v1861 = vadd.f32 %v1701, %v1811
          %v1862 = vadd.f32 %v1702, %v1814
          %v1863 = vadd.f32 %v1703, %v1817
          %v1864 = vadd.f32 %v1704, %v1820
          %v1865 = vadd.f32 %v1705, %v1823
          %v1866 = vadd.f32 %v1706, %v1826
          %v1867 = vadd.f32 %v1707, %v1829
          %v1868 = vadd.f32 %v1708, %v1832
          %v1869 = vadd.f32 %v1709, %v1835
          %v1870 = vadd.f32 %v1710, %v1838
          %1871 = vst.msk [vmem:[#allocation4] sm:$0xff] %vm1646, %v1839
          %1872 = vst.msk [vmem:[#allocation4 + $0x8] sm:$0xff] %vm1646, %v1840
          %1873 = vst.msk [vmem:[#allocation4 + $0x10] sm:$0xff] %vm1646, %v1841
          %1874 = vst.msk [vmem:[#allocation4 + $0x18] sm:$0xff] %vm1646, %v1842
          %1875 = vst.msk [vmem:[#allocation4 + $0x20] sm:$0xff] %vm1646, %v1843
          %1876 = vst.msk [vmem:[#allocation4 + $0x28] sm:$0xff] %vm1646, %v1844
          %1877 = vst.msk [vmem:[#allocation4 + $0x30] sm:$0xff] %vm1646, %v1845
          %1878 = vst.msk [vmem:[#allocation4 + $0x38] sm:$0xff] %vm1646, %v1846
          %1879 = vst.msk [vmem:[#allocation4 + $0x40] sm:$0xff] %vm1646, %v1847
          %1880 = vst.msk [vmem:[#allocation4 + $0x48] sm:$0xff] %vm1646, %v1848
          %1881 = vst.msk [vmem:[#allocation4 + $0x50] sm:$0xff] %vm1646, %v1849
          %1882 = vst.msk [vmem:[#allocation4 + $0x58] sm:$0xff] %vm1646, %v1850
          %1883 = vst.msk [vmem:[#allocation4 + $0x60] sm:$0xff] %vm1646, %v1851
          %1884 = vst.msk [vmem:[#allocation4 + $0x68] sm:$0xff] %vm1646, %v1852
          %1885 = vst.msk [vmem:[#allocation4 + $0x70] sm:$0xff] %vm1646, %v1853
          %1886 = vst.msk [vmem:[#allocation4 + $0x78] sm:$0xff] %vm1646, %v1854
          %1887 = vst.msk [vmem:[#allocation4 + $0x80] sm:$0xff] %vm1646, %v1855
          %1888 = vst.msk [vmem:[#allocation4 + $0x88] sm:$0xff] %vm1646, %v1856
          %1889 = vst.msk [vmem:[#allocation4 + $0x90] sm:$0xff] %vm1646, %v1857
          %1890 = vst.msk [vmem:[#allocation4 + $0x98] sm:$0xff] %vm1646, %v1858
          %1891 = vst.msk [vmem:[#allocation4 + $0xa0] sm:$0xff] %vm1646, %v1859
          %1892 = vst.msk [vmem:[#allocation4 + $0xa8] sm:$0xff] %vm1646, %v1860
          %1893 = vst.msk [vmem:[#allocation4 + $0xb0] sm:$0xff] %vm1646, %v1861
          %1894 = vst.msk [vmem:[#allocation4 + $0xb8] sm:$0xff] %vm1646, %v1862
          %1895 = vst.msk [vmem:[#allocation4 + $0xc0] sm:$0xff] %vm1646, %v1863
          %1896 = vst.msk [vmem:[#allocation4 + $0xc8] sm:$0xff] %vm1646, %v1864
          %1897 = vst.msk [vmem:[#allocation4 + $0xd0] sm:$0xff] %vm1646, %v1865
          %1898 = vst.msk [vmem:[#allocation4 + $0xd8] sm:$0xff] %vm1646, %v1866
          %1899 = vst.msk [vmem:[#allocation4 + $0xe0] sm:$0xff] %vm1646, %v1867
          %1900 = vst.msk [vmem:[#allocation4 + $0xe8] sm:$0xff] %vm1646, %v1868
          %1901 = vst.msk [vmem:[#allocation4 + $0xf0] sm:$0xff] %vm1646, %v1869
          %1902 = vst.msk [vmem:[#allocation4 + $0xf8] sm:$0xff] %vm1646, %v1870
        $region71: #{fused_mul_conv_bn.2} parent=54 // pred_fallthru
          _
        %p1903 = pnand %p570, %p1418
        %p1904 = pneg %p1903
        // Predicated region
        $region72: #{fused_mul_conv_bn.2} parent=54 // pred_check
          _
        $region73: #{fused_mul_conv_bn.2} parent=54 // pred_check_branch
          %1906 = sbr.rel (%p1903) target = $region75
        $region74: #{fused_mul_conv_bn.2} parent=54 // pred_region
          %v1907 = vld [vmem:[#allocation3] sm:$0xff]
          %v1908 = vld [vmem:[#allocation3 + $0x8] sm:$0xff]
          %v1909 = vld [vmem:[#allocation3 + $0x10] sm:$0xff]
          %v1910 = vld [vmem:[#allocation3 + $0x18] sm:$0xff]
          %v1911 = vld [vmem:[#allocation3 + $0x20] sm:$0xff]
          %v1912 = vld [vmem:[#allocation3 + $0x28] sm:$0xff]
          %v1913 = vld [vmem:[#allocation3 + $0x30] sm:$0xff]
          %v1914 = vld [vmem:[#allocation3 + $0x38] sm:$0xff]
          %v1915 = vld [vmem:[#allocation3 + $0x40] sm:$0xff]
          %v1916 = vld [vmem:[#allocation3 + $0x48] sm:$0xff]
          %v1917 = vld [vmem:[#allocation3 + $0x50] sm:$0xff]
          %v1918 = vld [vmem:[#allocation3 + $0x58] sm:$0xff]
          %v1919 = vld [vmem:[#allocation3 + $0x60] sm:$0xff]
          %v1920 = vld [vmem:[#allocation3 + $0x68] sm:$0xff]
          %v1921 = vld [vmem:[#allocation3 + $0x70] sm:$0xff]
          %v1922 = vld [vmem:[#allocation3 + $0x78] sm:$0xff]
          %v1923 = vld [vmem:[#allocation3 + $0x80] sm:$0xff]
          %v1924 = vld [vmem:[#allocation3 + $0x88] sm:$0xff]
          %v1925 = vld [vmem:[#allocation3 + $0x90] sm:$0xff]
          %v1926 = vld [vmem:[#allocation3 + $0x98] sm:$0xff]
          %v1927 = vld [vmem:[#allocation3 + $0xa0] sm:$0xff]
          %v1928 = vld [vmem:[#allocation3 + $0xa8] sm:$0xff]
          %v1929 = vld [vmem:[#allocation3 + $0xb0] sm:$0xff]
          %v1930 = vld [vmem:[#allocation3 + $0xb8] sm:$0xff]
          %v1931 = vld [vmem:[#allocation3 + $0xc0] sm:$0xff]
          %v1932 = vld [vmem:[#allocation3 + $0xc8] sm:$0xff]
          %v1933 = vld [vmem:[#allocation3 + $0xd0] sm:$0xff]
          %v1934 = vld [vmem:[#allocation3 + $0xd8] sm:$0xff]
          %v1935 = vld [vmem:[#allocation3 + $0xe0] sm:$0xff]
          %v1936 = vld [vmem:[#allocation3 + $0xe8] sm:$0xff]
          %v1937 = vld [vmem:[#allocation3 + $0xf0] sm:$0xff]
          %v1938 = vld [vmem:[#allocation3 + $0xf8] sm:$0xff]
          %v1939 = vmul.f32 %v1907, 0.020408163
          %v1940 = vmul.f32 %v1908, 0.020408163
          %v1941 = vmul.f32 %v1909, 0.020408163
          %v1942 = vmul.f32 %v1910, 0.020408163
          %v1943 = vmul.f32 %v1911, 0.020408163
          %v1944 = vmul.f32 %v1912, 0.020408163
          %v1945 = vmul.f32 %v1913, 0.020408163
          %v1946 = vmul.f32 %v1914, 0.020408163
          %v1947 = vmul.f32 %v1915, 0.020408163
          %v1948 = vmul.f32 %v1916, 0.020408163
          %v1949 = vmul.f32 %v1917, 0.020408163
          %v1950 = vmul.f32 %v1918, 0.020408163
          %v1951 = vmul.f32 %v1919, 0.020408163
          %v1952 = vmul.f32 %v1920, 0.020408163
          %v1953 = vmul.f32 %v1921, 0.020408163
          %v1954 = vmul.f32 %v1922, 0.020408163
          %v1955 = vmul.f32 %v1923, 0.020408163
          %v1956 = vmul.f32 %v1924, 0.020408163
          %v1957 = vmul.f32 %v1925, 0.020408163
          %v1958 = vmul.f32 %v1926, 0.020408163
          %v1959 = vmul.f32 %v1927, 0.020408163
          %v1960 = vmul.f32 %v1928, 0.020408163
          %v1961 = vmul.f32 %v1929, 0.020408163
          %v1962 = vmul.f32 %v1930, 0.020408163
          %v1963 = vmul.f32 %v1931, 0.020408163
          %v1964 = vmul.f32 %v1932, 0.020408163
          %v1965 = vmul.f32 %v1933, 0.020408163
          %v1966 = vmul.f32 %v1934, 0.020408163
          %v1967 = vmul.f32 %v1935, 0.020408163
          %v1968 = vmul.f32 %v1936, 0.020408163
          %v1969 = vmul.f32 %v1937, 0.020408163
          %v1970 = vmul.f32 %v1938, 0.020408163
          %v1971 = vld [vmem:[#allocation4] sm:$0xff]
          %v1972 = vld [vmem:[#allocation4 + $0x8] sm:$0xff]
          %v1973 = vld [vmem:[#allocation4 + $0x10] sm:$0xff]
          %v1974 = vld [vmem:[#allocation4 + $0x18] sm:$0xff]
          %v1975 = vld [vmem:[#allocation4 + $0x20] sm:$0xff]
          %v1976 = vld [vmem:[#allocation4 + $0x28] sm:$0xff]
          %v1977 = vld [vmem:[#allocation4 + $0x30] sm:$0xff]
          %v1978 = vld [vmem:[#allocation4 + $0x38] sm:$0xff]
          %v1979 = vld [vmem:[#allocation4 + $0x40] sm:$0xff]
          %v1980 = vld [vmem:[#allocation4 + $0x48] sm:$0xff]
          %v1981 = vld [vmem:[#allocation4 + $0x50] sm:$0xff]
          %v1982 = vld [vmem:[#allocation4 + $0x58] sm:$0xff]
          %v1983 = vld [vmem:[#allocation4 + $0x60] sm:$0xff]
          %v1984 = vld [vmem:[#allocation4 + $0x68] sm:$0xff]
          %v1985 = vld [vmem:[#allocation4 + $0x70] sm:$0xff]
          %v1986 = vld [vmem:[#allocation4 + $0x78] sm:$0xff]
          %v1987 = vld [vmem:[#allocation4 + $0x80] sm:$0xff]
          %v1988 = vld [vmem:[#allocation4 + $0x88] sm:$0xff]
          %v1989 = vld [vmem:[#allocation4 + $0x90] sm:$0xff]
          %v1990 = vld [vmem:[#allocation4 + $0x98] sm:$0xff]
          %v1991 = vld [vmem:[#allocation4 + $0xa0] sm:$0xff]
          %v1992 = vld [vmem:[#allocation4 + $0xa8] sm:$0xff]
          %v1993 = vld [vmem:[#allocation4 + $0xb0] sm:$0xff]
          %v1994 = vld [vmem:[#allocation4 + $0xb8] sm:$0xff]
          %v1995 = vld [vmem:[#allocation4 + $0xc0] sm:$0xff]
          %v1996 = vld [vmem:[#allocation4 + $0xc8] sm:$0xff]
          %v1997 = vld [vmem:[#allocation4 + $0xd0] sm:$0xff]
          %v1998 = vld [vmem:[#allocation4 + $0xd8] sm:$0xff]
          %v1999 = vld [vmem:[#allocation4 + $0xe0] sm:$0xff]
          %v2000 = vld [vmem:[#allocation4 + $0xe8] sm:$0xff]
          %v2001 = vld [vmem:[#allocation4 + $0xf0] sm:$0xff]
          %v2002 = vld [vmem:[#allocation4 + $0xf8] sm:$0xff]
          %v2003 = vmul.f32 %v1971, 0.020408163
          %v2004 = vmul.f32 %v1972, 0.020408163
          %v2005 = vmul.f32 %v1973, 0.020408163
          %v2006 = vmul.f32 %v1974, 0.020408163
          %v2007 = vmul.f32 %v1975, 0.020408163
          %v2008 = vmul.f32 %v1976, 0.020408163
          %v2009 = vmul.f32 %v1977, 0.020408163
          %v2010 = vmul.f32 %v1978, 0.020408163
          %v2011 = vmul.f32 %v1979, 0.020408163
          %v2012 = vmul.f32 %v1980, 0.020408163
          %v2013 = vmul.f32 %v1981, 0.020408163
          %v2014 = vmul.f32 %v1982, 0.020408163
          %v2015 = vmul.f32 %v1983, 0.020408163
          %v2016 = vmul.f32 %v1984, 0.020408163
          %v2017 = vmul.f32 %v1985, 0.020408163
          %v2018 = vmul.f32 %v1986, 0.020408163
          %v2019 = vmul.f32 %v1987, 0.020408163
          %v2020 = vmul.f32 %v1988, 0.020408163
          %v2021 = vmul.f32 %v1989, 0.020408163
          %v2022 = vmul.f32 %v1990, 0.020408163
          %v2023 = vmul.f32 %v1991, 0.020408163
          %v2024 = vmul.f32 %v1992, 0.020408163
          %v2025 = vmul.f32 %v1993, 0.020408163
          %v2026 = vmul.f32 %v1994, 0.020408163
          %v2027 = vmul.f32 %v1995, 0.020408163
          %v2028 = vmul.f32 %v1996, 0.020408163
          %v2029 = vmul.f32 %v1997, 0.020408163
          %v2030 = vmul.f32 %v1998, 0.020408163
          %v2031 = vmul.f32 %v1999, 0.020408163
          %v2032 = vmul.f32 %v2000, 0.020408163
          %v2033 = vmul.f32 %v2001, 0.020408163
          %v2034 = vmul.f32 %v2002, 0.020408163
          %v2035 = vmul.f32 %v1939, %v1939
          %v2036 = vmul.f32 %v1940, %v1940
          %v2037 = vmul.f32 %v1941, %v1941
          %v2038 = vmul.f32 %v1942, %v1942
          %v2039 = vmul.f32 %v1943, %v1943
          %v2040 = vmul.f32 %v1944, %v1944
          %v2041 = vmul.f32 %v1945, %v1945
          %v2042 = vmul.f32 %v1946, %v1946
          %v2043 = vmul.f32 %v1947, %v1947
          %v2044 = vmul.f32 %v1948, %v1948
          %v2045 = vmul.f32 %v1949, %v1949
          %v2046 = vmul.f32 %v1950, %v1950
          %v2047 = vmul.f32 %v1951, %v1951
          %v2048 = vmul.f32 %v1952, %v1952
          %v2049 = vmul.f32 %v1953, %v1953
          %v2050 = vmul.f32 %v1954, %v1954
          %v2051 = vmul.f32 %v1955, %v1955
          %v2052 = vmul.f32 %v1956, %v1956
          %v2053 = vmul.f32 %v1957, %v1957
          %v2054 = vmul.f32 %v1958, %v1958
          %v2055 = vmul.f32 %v1959, %v1959
          %v2056 = vmul.f32 %v1960, %v1960
          %v2057 = vmul.f32 %v1961, %v1961
          %v2058 = vmul.f32 %v1962, %v1962
          %v2059 = vmul.f32 %v1963, %v1963
          %v2060 = vmul.f32 %v1964, %v1964
          %v2061 = vmul.f32 %v1965, %v1965
          %v2062 = vmul.f32 %v1966, %v1966
          %v2063 = vmul.f32 %v1967, %v1967
          %v2064 = vmul.f32 %v1968, %v1968
          %v2065 = vmul.f32 %v1969, %v1969
          %v2066 = vmul.f32 %v1970, %v1970
          %v2067 = vsub.f32 %v2003, %v2035
          %v2068 = vsub.f32 %v2004, %v2036
          %v2069 = vsub.f32 %v2005, %v2037
          %v2070 = vsub.f32 %v2006, %v2038
          %v2071 = vsub.f32 %v2007, %v2039
          %v2072 = vsub.f32 %v2008, %v2040
          %v2073 = vsub.f32 %v2009, %v2041
          %v2074 = vsub.f32 %v2010, %v2042
          %v2075 = vsub.f32 %v2011, %v2043
          %v2076 = vsub.f32 %v2012, %v2044
          %v2077 = vsub.f32 %v2013, %v2045
          %v2078 = vsub.f32 %v2014, %v2046
          %v2079 = vsub.f32 %v2015, %v2047
          %v2080 = vsub.f32 %v2016, %v2048
          %v2081 = vsub.f32 %v2017, %v2049
          %v2082 = vsub.f32 %v2018, %v2050
          %v2083 = vsub.f32 %v2019, %v2051
          %v2084 = vsub.f32 %v2020, %v2052
          %v2085 = vsub.f32 %v2021, %v2053
          %v2086 = vsub.f32 %v2022, %v2054
          %v2087 = vsub.f32 %v2023, %v2055
          %v2088 = vsub.f32 %v2024, %v2056
          %v2089 = vsub.f32 %v2025, %v2057
          %v2090 = vsub.f32 %v2026, %v2058
          %v2091 = vsub.f32 %v2027, %v2059
          %v2092 = vsub.f32 %v2028, %v2060
          %v2093 = vsub.f32 %v2029, %v2061
          %v2094 = vsub.f32 %v2030, %v2062
          %v2095 = vsub.f32 %v2031, %v2063
          %v2096 = vsub.f32 %v2032, %v2064
          %v2097 = vsub.f32 %v2033, %v2065
          %v2098 = vsub.f32 %v2034, %v2066
          %v2099 = vld [vmem:[%s2] sm:$0xff]
          %v2100 = vld [vmem:[%s2 + $0x8] sm:$0xff]
          %v2101 = vld [vmem:[%s2 + $0x10] sm:$0xff]
          %v2102 = vld [vmem:[%s2 + $0x18] sm:$0xff]
          %v2103 = vld [vmem:[%s2 + $0x20] sm:$0xff]
          %v2104 = vld [vmem:[%s2 + $0x28] sm:$0xff]
          %v2105 = vld [vmem:[%s2 + $0x30] sm:$0xff]
          %v2106 = vld [vmem:[%s2 + $0x38] sm:$0xff]
          %v2107 = vld [vmem:[%s2 + $0x40] sm:$0xff]
          %v2108 = vld [vmem:[%s2 + $0x48] sm:$0xff]
          %v2109 = vld [vmem:[%s2 + $0x50] sm:$0xff]
          %v2110 = vld [vmem:[%s2 + $0x58] sm:$0xff]
          %v2111 = vld [vmem:[%s2 + $0x60] sm:$0xff]
          %v2112 = vld [vmem:[%s2 + $0x68] sm:$0xff]
          %v2113 = vld [vmem:[%s2 + $0x70] sm:$0xff]
          %v2114 = vld [vmem:[%s2 + $0x78] sm:$0xff]
          %v2115 = vld [vmem:[%s2 + $0x80] sm:$0xff]
          %v2116 = vld [vmem:[%s2 + $0x88] sm:$0xff]
          %v2117 = vld [vmem:[%s2 + $0x90] sm:$0xff]
          %v2118 = vld [vmem:[%s2 + $0x98] sm:$0xff]
          %v2119 = vld [vmem:[%s2 + $0xa0] sm:$0xff]
          %v2120 = vld [vmem:[%s2 + $0xa8] sm:$0xff]
          %v2121 = vld [vmem:[%s2 + $0xb0] sm:$0xff]
          %v2122 = vld [vmem:[%s2 + $0xb8] sm:$0xff]
          %v2123 = vld [vmem:[%s2 + $0xc0] sm:$0xff]
          %v2124 = vld [vmem:[%s2 + $0xc8] sm:$0xff]
          %v2125 = vld [vmem:[%s2 + $0xd0] sm:$0xff]
          %v2126 = vld [vmem:[%s2 + $0xd8] sm:$0xff]
          %v2127 = vld [vmem:[%s2 + $0xe0] sm:$0xff]
          %v2128 = vld [vmem:[%s2 + $0xe8] sm:$0xff]
          %v2129 = vld [vmem:[%s2 + $0xf0] sm:$0xff]
          %v2130 = vld [vmem:[%s2 + $0xf8] sm:$0xff]
          %v2131 = vadd.f32 %v2067, 0.001
          %v2132 = vadd.f32 %v2068, 0.001
          %v2133 = vadd.f32 %v2069, 0.001
          %v2134 = vadd.f32 %v2070, 0.001
          %v2135 = vadd.f32 %v2071, 0.001
          %v2136 = vadd.f32 %v2072, 0.001
          %v2137 = vadd.f32 %v2073, 0.001
          %v2138 = vadd.f32 %v2074, 0.001
          %v2139 = vadd.f32 %v2075, 0.001
          %v2140 = vadd.f32 %v2076, 0.001
          %v2141 = vadd.f32 %v2077, 0.001
          %v2142 = vadd.f32 %v2078, 0.001
          %v2143 = vadd.f32 %v2079, 0.001
          %v2144 = vadd.f32 %v2080, 0.001
          %v2145 = vadd.f32 %v2081, 0.001
          %v2146 = vadd.f32 %v2082, 0.001
          %v2147 = vadd.f32 %v2083, 0.001
          %v2148 = vadd.f32 %v2084, 0.001
          %v2149 = vadd.f32 %v2085, 0.001
          %v2150 = vadd.f32 %v2086, 0.001
          %v2151 = vadd.f32 %v2087, 0.001
          %v2152 = vadd.f32 %v2088, 0.001
          %v2153 = vadd.f32 %v2089, 0.001
          %v2154 = vadd.f32 %v2090, 0.001
          %v2155 = vadd.f32 %v2091, 0.001
          %v2156 = vadd.f32 %v2092, 0.001
          %v2157 = vadd.f32 %v2093, 0.001
          %v2158 = vadd.f32 %v2094, 0.001
          %v2159 = vadd.f32 %v2095, 0.001
          %v2160 = vadd.f32 %v2096, 0.001
          %v2161 = vadd.f32 %v2097, 0.001
          %v2162 = vadd.f32 %v2098, 0.001
          %v2163 = vrsqrt.pop %v2131
          %v2164 = vmul.f32 %v2163, %v2131
          %v2165 = vmul.f32 %v2164, %v2163
          %v2166 = vmul.f32 0.5, %v2165
          %v2167 = vsub.f32 1.5, %v2166
          %v2168 = vmul.f32 %v2163, %v2167
          %vm2169 = vweird.f32 %v2131
          %vm2170 = vweird.f32 %v2163
          %vm2171 = vmor %vm2169, %vm2170
          %v2172 = vsel %vm2171, %v2163, %v2168
          %v2173 = vrsqrt.pop %v2132
          %v2174 = vmul.f32 %v2173, %v2132
          %v2175 = vmul.f32 %v2174, %v2173
          %v2176 = vmul.f32 0.5, %v2175
          %v2177 = vsub.f32 1.5, %v2176
          %v2178 = vmul.f32 %v2173, %v2177
          %vm2179 = vweird.f32 %v2132
          %vm2180 = vweird.f32 %v2173
          %vm2181 = vmor %vm2179, %vm2180
          %v2182 = vsel %vm2181, %v2173, %v2178
          %v2183 = vrsqrt.pop %v2133
          %v2184 = vmul.f32 %v2183, %v2133
          %v2185 = vmul.f32 %v2184, %v2183
          %v2186 = vmul.f32 0.5, %v2185
          %v2187 = vsub.f32 1.5, %v2186
          %v2188 = vmul.f32 %v2183, %v2187
          %vm2189 = vweird.f32 %v2133
          %vm2190 = vweird.f32 %v2183
          %vm2191 = vmor %vm2189, %vm2190
          %v2192 = vsel %vm2191, %v2183, %v2188
          %v2193 = vrsqrt.pop %v2134
          %v2194 = vmul.f32 %v2193, %v2134
          %v2195 = vmul.f32 %v2194, %v2193
          %v2196 = vmul.f32 0.5, %v2195
          %v2197 = vsub.f32 1.5, %v2196
          %v2198 = vmul.f32 %v2193, %v2197
          %vm2199 = vweird.f32 %v2134
          %vm2200 = vweird.f32 %v2193
          %vm2201 = vmor %vm2199, %vm2200
          %v2202 = vsel %vm2201, %v2193, %v2198
          %v2203 = vrsqrt.pop %v2135
          %v2204 = vmul.f32 %v2203, %v2135
          %v2205 = vmul.f32 %v2204, %v2203
          %v2206 = vmul.f32 0.5, %v2205
          %v2207 = vsub.f32 1.5, %v2206
          %v2208 = vmul.f32 %v2203, %v2207
          %vm2209 = vweird.f32 %v2135
          %vm2210 = vweird.f32 %v2203
          %vm2211 = vmor %vm2209, %vm2210
          %v2212 = vsel %vm2211, %v2203, %v2208
          %v2213 = vrsqrt.pop %v2136
          %v2214 = vmul.f32 %v2213, %v2136
          %v2215 = vmul.f32 %v2214, %v2213
          %v2216 = vmul.f32 0.5, %v2215
          %v2217 = vsub.f32 1.5, %v2216
          %v2218 = vmul.f32 %v2213, %v2217
          %vm2219 = vweird.f32 %v2136
          %vm2220 = vweird.f32 %v2213
          %vm2221 = vmor %vm2219, %vm2220
          %v2222 = vsel %vm2221, %v2213, %v2218
          %v2223 = vrsqrt.pop %v2137
          %v2224 = vmul.f32 %v2223, %v2137
          %v2225 = vmul.f32 %v2224, %v2223
          %v2226 = vmul.f32 0.5, %v2225
          %v2227 = vsub.f32 1.5, %v2226
          %v2228 = vmul.f32 %v2223, %v2227
          %vm2229 = vweird.f32 %v2137
          %vm2230 = vweird.f32 %v2223
          %vm2231 = vmor %vm2229, %vm2230
          %v2232 = vsel %vm2231, %v2223, %v2228
          %v2233 = vrsqrt.pop %v2138
          %v2234 = vmul.f32 %v2233, %v2138
          %v2235 = vmul.f32 %v2234, %v2233
          %v2236 = vmul.f32 0.5, %v2235
          %v2237 = vsub.f32 1.5, %v2236
          %v2238 = vmul.f32 %v2233, %v2237
          %vm2239 = vweird.f32 %v2138
          %vm2240 = vweird.f32 %v2233
          %vm2241 = vmor %vm2239, %vm2240
          %v2242 = vsel %vm2241, %v2233, %v2238
          %v2243 = vrsqrt.pop %v2139
          %v2244 = vmul.f32 %v2243, %v2139
          %v2245 = vmul.f32 %v2244, %v2243
          %v2246 = vmul.f32 0.5, %v2245
          %v2247 = vsub.f32 1.5, %v2246
          %v2248 = vmul.f32 %v2243, %v2247
          %vm2249 = vweird.f32 %v2139
          %vm2250 = vweird.f32 %v2243
          %vm2251 = vmor %vm2249, %vm2250
          %v2252 = vsel %vm2251, %v2243, %v2248
          %v2253 = vrsqrt.pop %v2140
          %v2254 = vmul.f32 %v2253, %v2140
          %v2255 = vmul.f32 %v2254, %v2253
          %v2256 = vmul.f32 0.5, %v2255
          %v2257 = vsub.f32 1.5, %v2256
          %v2258 = vmul.f32 %v2253, %v2257
          %vm2259 = vweird.f32 %v2140
          %vm2260 = vweird.f32 %v2253
          %vm2261 = vmor %vm2259, %vm2260
          %v2262 = vsel %vm2261, %v2253, %v2258
          %v2263 = vrsqrt.pop %v2141
          %v2264 = vmul.f32 %v2263, %v2141
          %v2265 = vmul.f32 %v2264, %v2263
          %v2266 = vmul.f32 0.5, %v2265
          %v2267 = vsub.f32 1.5, %v2266
          %v2268 = vmul.f32 %v2263, %v2267
          %vm2269 = vweird.f32 %v2141
          %vm2270 = vweird.f32 %v2263
          %vm2271 = vmor %vm2269, %vm2270
          %v2272 = vsel %vm2271, %v2263, %v2268
          %v2273 = vrsqrt.pop %v2142
          %v2274 = vmul.f32 %v2273, %v2142
          %v2275 = vmul.f32 %v2274, %v2273
          %v2276 = vmul.f32 0.5, %v2275
          %v2277 = vsub.f32 1.5, %v2276
          %v2278 = vmul.f32 %v2273, %v2277
          %vm2279 = vweird.f32 %v2142
          %vm2280 = vweird.f32 %v2273
          %vm2281 = vmor %vm2279, %vm2280
          %v2282 = vsel %vm2281, %v2273, %v2278
          %v2283 = vrsqrt.pop %v2143
          %v2284 = vmul.f32 %v2283, %v2143
          %v2285 = vmul.f32 %v2284, %v2283
          %v2286 = vmul.f32 0.5, %v2285
          %v2287 = vsub.f32 1.5, %v2286
          %v2288 = vmul.f32 %v2283, %v2287
          %vm2289 = vweird.f32 %v2143
          %vm2290 = vweird.f32 %v2283
          %vm2291 = vmor %vm2289, %vm2290
          %v2292 = vsel %vm2291, %v2283, %v2288
          %v2293 = vrsqrt.pop %v2144
          %v2294 = vmul.f32 %v2293, %v2144
          %v2295 = vmul.f32 %v2294, %v2293
          %v2296 = vmul.f32 0.5, %v2295
          %v2297 = vsub.f32 1.5, %v2296
          %v2298 = vmul.f32 %v2293, %v2297
          %vm2299 = vweird.f32 %v2144
          %vm2300 = vweird.f32 %v2293
          %vm2301 = vmor %vm2299, %vm2300
          %v2302 = vsel %vm2301, %v2293, %v2298
          %v2303 = vrsqrt.pop %v2145
          %v2304 = vmul.f32 %v2303, %v2145
          %v2305 = vmul.f32 %v2304, %v2303
          %v2306 = vmul.f32 0.5, %v2305
          %v2307 = vsub.f32 1.5, %v2306
          %v2308 = vmul.f32 %v2303, %v2307
          %vm2309 = vweird.f32 %v2145
          %vm2310 = vweird.f32 %v2303
          %vm2311 = vmor %vm2309, %vm2310
          %v2312 = vsel %vm2311, %v2303, %v2308
          %v2313 = vrsqrt.pop %v2146
          %v2314 = vmul.f32 %v2313, %v2146
          %v2315 = vmul.f32 %v2314, %v2313
          %v2316 = vmul.f32 0.5, %v2315
          %v2317 = vsub.f32 1.5, %v2316
          %v2318 = vmul.f32 %v2313, %v2317
          %vm2319 = vweird.f32 %v2146
          %vm2320 = vweird.f32 %v2313
          %vm2321 = vmor %vm2319, %vm2320
          %v2322 = vsel %vm2321, %v2313, %v2318
          %v2323 = vrsqrt.pop %v2147
          %v2324 = vmul.f32 %v2323, %v2147
          %v2325 = vmul.f32 %v2324, %v2323
          %v2326 = vmul.f32 0.5, %v2325
          %v2327 = vsub.f32 1.5, %v2326
          %v2328 = vmul.f32 %v2323, %v2327
          %vm2329 = vweird.f32 %v2147
          %vm2330 = vweird.f32 %v2323
          %vm2331 = vmor %vm2329, %vm2330
          %v2332 = vsel %vm2331, %v2323, %v2328
          %v2333 = vrsqrt.pop %v2148
          %v2334 = vmul.f32 %v2333, %v2148
          %v2335 = vmul.f32 %v2334, %v2333
          %v2336 = vmul.f32 0.5, %v2335
          %v2337 = vsub.f32 1.5, %v2336
          %v2338 = vmul.f32 %v2333, %v2337
          %vm2339 = vweird.f32 %v2148
          %vm2340 = vweird.f32 %v2333
          %vm2341 = vmor %vm2339, %vm2340
          %v2342 = vsel %vm2341, %v2333, %v2338
          %v2343 = vrsqrt.pop %v2149
          %v2344 = vmul.f32 %v2343, %v2149
          %v2345 = vmul.f32 %v2344, %v2343
          %v2346 = vmul.f32 0.5, %v2345
          %v2347 = vsub.f32 1.5, %v2346
          %v2348 = vmul.f32 %v2343, %v2347
          %vm2349 = vweird.f32 %v2149
          %vm2350 = vweird.f32 %v2343
          %vm2351 = vmor %vm2349, %vm2350
          %v2352 = vsel %vm2351, %v2343, %v2348
          %v2353 = vrsqrt.pop %v2150
          %v2354 = vmul.f32 %v2353, %v2150
          %v2355 = vmul.f32 %v2354, %v2353
          %v2356 = vmul.f32 0.5, %v2355
          %v2357 = vsub.f32 1.5, %v2356
          %v2358 = vmul.f32 %v2353, %v2357
          %vm2359 = vweird.f32 %v2150
          %vm2360 = vweird.f32 %v2353
          %vm2361 = vmor %vm2359, %vm2360
          %v2362 = vsel %vm2361, %v2353, %v2358
          %v2363 = vrsqrt.pop %v2151
          %v2364 = vmul.f32 %v2363, %v2151
          %v2365 = vmul.f32 %v2364, %v2363
          %v2366 = vmul.f32 0.5, %v2365
          %v2367 = vsub.f32 1.5, %v2366
          %v2368 = vmul.f32 %v2363, %v2367
          %vm2369 = vweird.f32 %v2151
          %vm2370 = vweird.f32 %v2363
          %vm2371 = vmor %vm2369, %vm2370
          %v2372 = vsel %vm2371, %v2363, %v2368
          %v2373 = vrsqrt.pop %v2152
          %v2374 = vmul.f32 %v2373, %v2152
          %v2375 = vmul.f32 %v2374, %v2373
          %v2376 = vmul.f32 0.5, %v2375
          %v2377 = vsub.f32 1.5, %v2376
          %v2378 = vmul.f32 %v2373, %v2377
          %vm2379 = vweird.f32 %v2152
          %vm2380 = vweird.f32 %v2373
          %vm2381 = vmor %vm2379, %vm2380
          %v2382 = vsel %vm2381, %v2373, %v2378
          %v2383 = vrsqrt.pop %v2153
          %v2384 = vmul.f32 %v2383, %v2153
          %v2385 = vmul.f32 %v2384, %v2383
          %v2386 = vmul.f32 0.5, %v2385
          %v2387 = vsub.f32 1.5, %v2386
          %v2388 = vmul.f32 %v2383, %v2387
          %vm2389 = vweird.f32 %v2153
          %vm2390 = vweird.f32 %v2383
          %vm2391 = vmor %vm2389, %vm2390
          %v2392 = vsel %vm2391, %v2383, %v2388
          %v2393 = vrsqrt.pop %v2154
          %v2394 = vmul.f32 %v2393, %v2154
          %v2395 = vmul.f32 %v2394, %v2393
          %v2396 = vmul.f32 0.5, %v2395
          %v2397 = vsub.f32 1.5, %v2396
          %v2398 = vmul.f32 %v2393, %v2397
          %vm2399 = vweird.f32 %v2154
          %vm2400 = vweird.f32 %v2393
          %vm2401 = vmor %vm2399, %vm2400
          %v2402 = vsel %vm2401, %v2393, %v2398
          %v2403 = vrsqrt.pop %v2155
          %v2404 = vmul.f32 %v2403, %v2155
          %v2405 = vmul.f32 %v2404, %v2403
          %v2406 = vmul.f32 0.5, %v2405
          %v2407 = vsub.f32 1.5, %v2406
          %v2408 = vmul.f32 %v2403, %v2407
          %vm2409 = vweird.f32 %v2155
          %vm2410 = vweird.f32 %v2403
          %vm2411 = vmor %vm2409, %vm2410
          %v2412 = vsel %vm2411, %v2403, %v2408
          %v2413 = vrsqrt.pop %v2156
          %v2414 = vmul.f32 %v2413, %v2156
          %v2415 = vmul.f32 %v2414, %v2413
          %v2416 = vmul.f32 0.5, %v2415
          %v2417 = vsub.f32 1.5, %v2416
          %v2418 = vmul.f32 %v2413, %v2417
          %vm2419 = vweird.f32 %v2156
          %vm2420 = vweird.f32 %v2413
          %vm2421 = vmor %vm2419, %vm2420
          %v2422 = vsel %vm2421, %v2413, %v2418
          %v2423 = vrsqrt.pop %v2157
          %v2424 = vmul.f32 %v2423, %v2157
          %v2425 = vmul.f32 %v2424, %v2423
          %v2426 = vmul.f32 0.5, %v2425
          %v2427 = vsub.f32 1.5, %v2426
          %v2428 = vmul.f32 %v2423, %v2427
          %vm2429 = vweird.f32 %v2157
          %vm2430 = vweird.f32 %v2423
          %vm2431 = vmor %vm2429, %vm2430
          %v2432 = vsel %vm2431, %v2423, %v2428
          %v2433 = vrsqrt.pop %v2158
          %v2434 = vmul.f32 %v2433, %v2158
          %v2435 = vmul.f32 %v2434, %v2433
          %v2436 = vmul.f32 0.5, %v2435
          %v2437 = vsub.f32 1.5, %v2436
          %v2438 = vmul.f32 %v2433, %v2437
          %vm2439 = vweird.f32 %v2158
          %vm2440 = vweird.f32 %v2433
          %vm2441 = vmor %vm2439, %vm2440
          %v2442 = vsel %vm2441, %v2433, %v2438
          %v2443 = vrsqrt.pop %v2159
          %v2444 = vmul.f32 %v2443, %v2159
          %v2445 = vmul.f32 %v2444, %v2443
          %v2446 = vmul.f32 0.5, %v2445
          %v2447 = vsub.f32 1.5, %v2446
          %v2448 = vmul.f32 %v2443, %v2447
          %vm2449 = vweird.f32 %v2159
          %vm2450 = vweird.f32 %v2443
          %vm2451 = vmor %vm2449, %vm2450
          %v2452 = vsel %vm2451, %v2443, %v2448
          %v2453 = vrsqrt.pop %v2160
          %v2454 = vmul.f32 %v2453, %v2160
          %v2455 = vmul.f32 %v2454, %v2453
          %v2456 = vmul.f32 0.5, %v2455
          %v2457 = vsub.f32 1.5, %v2456
          %v2458 = vmul.f32 %v2453, %v2457
          %vm2459 = vweird.f32 %v2160
          %vm2460 = vweird.f32 %v2453
          %vm2461 = vmor %vm2459, %vm2460
          %v2462 = vsel %vm2461, %v2453, %v2458
          %v2463 = vrsqrt.pop %v2161
          %v2464 = vmul.f32 %v2463, %v2161
          %v2465 = vmul.f32 %v2464, %v2463
          %v2466 = vmul.f32 0.5, %v2465
          %v2467 = vsub.f32 1.5, %v2466
          %v2468 = vmul.f32 %v2463, %v2467
          %vm2469 = vweird.f32 %v2161
          %vm2470 = vweird.f32 %v2463
          %vm2471 = vmor %vm2469, %vm2470
          %v2472 = vsel %vm2471, %v2463, %v2468
          %v2473 = vrsqrt.pop %v2162
          %v2474 = vmul.f32 %v2473, %v2162
          %v2475 = vmul.f32 %v2474, %v2473
          %v2476 = vmul.f32 0.5, %v2475
          %v2477 = vsub.f32 1.5, %v2476
          %v2478 = vmul.f32 %v2473, %v2477
          %vm2479 = vweird.f32 %v2162
          %vm2480 = vweird.f32 %v2473
          %vm2481 = vmor %vm2479, %vm2480
          %v2482 = vsel %vm2481, %v2473, %v2478
          %v2483 = vmul.f32 %v2099, %v2172
          %v2484 = vmul.f32 %v2100, %v2182
          %v2485 = vmul.f32 %v2101, %v2192
          %v2486 = vmul.f32 %v2102, %v2202
          %v2487 = vmul.f32 %v2103, %v2212
          %v2488 = vmul.f32 %v2104, %v2222
          %v2489 = vmul.f32 %v2105, %v2232
          %v2490 = vmul.f32 %v2106, %v2242
          %v2491 = vmul.f32 %v2107, %v2252
          %v2492 = vmul.f32 %v2108, %v2262
          %v2493 = vmul.f32 %v2109, %v2272
          %v2494 = vmul.f32 %v2110, %v2282
          %v2495 = vmul.f32 %v2111, %v2292
          %v2496 = vmul.f32 %v2112, %v2302
          %v2497 = vmul.f32 %v2113, %v2312
          %v2498 = vmul.f32 %v2114, %v2322
          %v2499 = vmul.f32 %v2115, %v2332
          %v2500 = vmul.f32 %v2116, %v2342
          %v2501 = vmul.f32 %v2117, %v2352
          %v2502 = vmul.f32 %v2118, %v2362
          %v2503 = vmul.f32 %v2119, %v2372
          %v2504 = vmul.f32 %v2120, %v2382
          %v2505 = vmul.f32 %v2121, %v2392
          %v2506 = vmul.f32 %v2122, %v2402
          %v2507 = vmul.f32 %v2123, %v2412
          %v2508 = vmul.f32 %v2124, %v2422
          %v2509 = vmul.f32 %v2125, %v2432
          %v2510 = vmul.f32 %v2126, %v2442
          %v2511 = vmul.f32 %v2127, %v2452
          %v2512 = vmul.f32 %v2128, %v2462
          %v2513 = vmul.f32 %v2129, %v2472
          %v2514 = vmul.f32 %v2130, %v2482
          %vm2515 = vcmask 7168
          %2516 = vst.msk [vmem:[%s5] sm:$0xff] %vm2515, %v2483
          %2517 = vst.msk [vmem:[%s5 + $0x8] sm:$0xff] %vm2515, %v2484
          %2518 = vst.msk [vmem:[%s5 + $0x10] sm:$0xff] %vm2515, %v2485
          %2519 = vst.msk [vmem:[%s5 + $0x18] sm:$0xff] %vm2515, %v2486
          %2520 = vst.msk [vmem:[%s5 + $0x20] sm:$0xff] %vm2515, %v2487
          %2521 = vst.msk [vmem:[%s5 + $0x28] sm:$0xff] %vm2515, %v2488
          %2522 = vst.msk [vmem:[%s5 + $0x30] sm:$0xff] %vm2515, %v2489
          %2523 = vst.msk [vmem:[%s5 + $0x38] sm:$0xff] %vm2515, %v2490
          %2524 = vst.msk [vmem:[%s5 + $0x40] sm:$0xff] %vm2515, %v2491
          %2525 = vst.msk [vmem:[%s5 + $0x48] sm:$0xff] %vm2515, %v2492
          %2526 = vst.msk [vmem:[%s5 + $0x50] sm:$0xff] %vm2515, %v2493
          %2527 = vst.msk [vmem:[%s5 + $0x58] sm:$0xff] %vm2515, %v2494
          %2528 = vst.msk [vmem:[%s5 + $0x60] sm:$0xff] %vm2515, %v2495
          %2529 = vst.msk [vmem:[%s5 + $0x68] sm:$0xff] %vm2515, %v2496
          %2530 = vst.msk [vmem:[%s5 + $0x70] sm:$0xff] %vm2515, %v2497
          %2531 = vst.msk [vmem:[%s5 + $0x78] sm:$0xff] %vm2515, %v2498
          %2532 = vst.msk [vmem:[%s5 + $0x80] sm:$0xff] %vm2515, %v2499
          %2533 = vst.msk [vmem:[%s5 + $0x88] sm:$0xff] %vm2515, %v2500
          %2534 = vst.msk [vmem:[%s5 + $0x90] sm:$0xff] %vm2515, %v2501
          %2535 = vst.msk [vmem:[%s5 + $0x98] sm:$0xff] %vm2515, %v2502
          %2536 = vst.msk [vmem:[%s5 + $0xa0] sm:$0xff] %vm2515, %v2503
          %2537 = vst.msk [vmem:[%s5 + $0xa8] sm:$0xff] %vm2515, %v2504
          %2538 = vst.msk [vmem:[%s5 + $0xb0] sm:$0xff] %vm2515, %v2505
          %2539 = vst.msk [vmem:[%s5 + $0xb8] sm:$0xff] %vm2515, %v2506
          %2540 = vst.msk [vmem:[%s5 + $0xc0] sm:$0xff] %vm2515, %v2507
          %2541 = vst.msk [vmem:[%s5 + $0xc8] sm:$0xff] %vm2515, %v2508
          %2542 = vst.msk [vmem:[%s5 + $0xd0] sm:$0xff] %vm2515, %v2509
          %2543 = vst.msk [vmem:[%s5 + $0xd8] sm:$0xff] %vm2515, %v2510
          %2544 = vst.msk [vmem:[%s5 + $0xe0] sm:$0xff] %vm2515, %v2511
          %2545 = vst.msk [vmem:[%s5 + $0xe8] sm:$0xff] %vm2515, %v2512
          %2546 = vst.msk [vmem:[%s5 + $0xf0] sm:$0xff] %vm2515, %v2513
          %2547 = vst.msk [vmem:[%s5 + $0xf8] sm:$0xff] %vm2515, %v2514
          %v2548 = vld [vmem:[%s3] sm:$0xff]
          %v2549 = vld [vmem:[%s3 + $0x8] sm:$0xff]
          %v2550 = vld [vmem:[%s3 + $0x10] sm:$0xff]
          %v2551 = vld [vmem:[%s3 + $0x18] sm:$0xff]
          %v2552 = vld [vmem:[%s3 + $0x20] sm:$0xff]
          %v2553 = vld [vmem:[%s3 + $0x28] sm:$0xff]
          %v2554 = vld [vmem:[%s3 + $0x30] sm:$0xff]
          %v2555 = vld [vmem:[%s3 + $0x38] sm:$0xff]
          %v2556 = vld [vmem:[%s3 + $0x40] sm:$0xff]
          %v2557 = vld [vmem:[%s3 + $0x48] sm:$0xff]
          %v2558 = vld [vmem:[%s3 + $0x50] sm:$0xff]
          %v2559 = vld [vmem:[%s3 + $0x58] sm:$0xff]
          %v2560 = vld [vmem:[%s3 + $0x60] sm:$0xff]
          %v2561 = vld [vmem:[%s3 + $0x68] sm:$0xff]
          %v2562 = vld [vmem:[%s3 + $0x70] sm:$0xff]
          %v2563 = vld [vmem:[%s3 + $0x78] sm:$0xff]
          %v2564 = vld [vmem:[%s3 + $0x80] sm:$0xff]
          %v2565 = vld [vmem:[%s3 + $0x88] sm:$0xff]
          %v2566 = vld [vmem:[%s3 + $0x90] sm:$0xff]
          %v2567 = vld [vmem:[%s3 + $0x98] sm:$0xff]
          %v2568 = vld [vmem:[%s3 + $0xa0] sm:$0xff]
          %v2569 = vld [vmem:[%s3 + $0xa8] sm:$0xff]
          %v2570 = vld [vmem:[%s3 + $0xb0] sm:$0xff]
          %v2571 = vld [vmem:[%s3 + $0xb8] sm:$0xff]
          %v2572 = vld [vmem:[%s3 + $0xc0] sm:$0xff]
          %v2573 = vld [vmem:[%s3 + $0xc8] sm:$0xff]
          %v2574 = vld [vmem:[%s3 + $0xd0] sm:$0xff]
          %v2575 = vld [vmem:[%s3 + $0xd8] sm:$0xff]
          %v2576 = vld [vmem:[%s3 + $0xe0] sm:$0xff]
          %v2577 = vld [vmem:[%s3 + $0xe8] sm:$0xff]
          %v2578 = vld [vmem:[%s3 + $0xf0] sm:$0xff]
          %v2579 = vld [vmem:[%s3 + $0xf8] sm:$0xff]
          %v2580 = vmul.f32 %v1939, %v2483
          %v2581 = vmul.f32 %v1940, %v2484
          %v2582 = vmul.f32 %v1941, %v2485
          %v2583 = vmul.f32 %v1942, %v2486
          %v2584 = vmul.f32 %v1943, %v2487
          %v2585 = vmul.f32 %v1944, %v2488
          %v2586 = vmul.f32 %v1945, %v2489
          %v2587 = vmul.f32 %v1946, %v2490
          %v2588 = vmul.f32 %v1947, %v2491
          %v2589 = vmul.f32 %v1948, %v2492
          %v2590 = vmul.f32 %v1949, %v2493
          %v2591 = vmul.f32 %v1950, %v2494
          %v2592 = vmul.f32 %v1951, %v2495
          %v2593 = vmul.f32 %v1952, %v2496
          %v2594 = vmul.f32 %v1953, %v2497
          %v2595 = vmul.f32 %v1954, %v2498
          %v2596 = vmul.f32 %v1955, %v2499
          %v2597 = vmul.f32 %v1956, %v2500
          %v2598 = vmul.f32 %v1957, %v2501
          %v2599 = vmul.f32 %v1958, %v2502
          %v2600 = vmul.f32 %v1959, %v2503
          %v2601 = vmul.f32 %v1960, %v2504
          %v2602 = vmul.f32 %v1961, %v2505
          %v2603 = vmul.f32 %v1962, %v2506
          %v2604 = vmul.f32 %v1963, %v2507
          %v2605 = vmul.f32 %v1964, %v2508
          %v2606 = vmul.f32 %v1965, %v2509
          %v2607 = vmul.f32 %v1966, %v2510
          %v2608 = vmul.f32 %v1967, %v2511
          %v2609 = vmul.f32 %v1968, %v2512
          %v2610 = vmul.f32 %v1969, %v2513
          %v2611 = vmul.f32 %v1970, %v2514
          %v2612 = vsub.f32 %v2548, %v2580
          %v2613 = vsub.f32 %v2549, %v2581
          %v2614 = vsub.f32 %v2550, %v2582
          %v2615 = vsub.f32 %v2551, %v2583
          %v2616 = vsub.f32 %v2552, %v2584
          %v2617 = vsub.f32 %v2553, %v2585
          %v2618 = vsub.f32 %v2554, %v2586
          %v2619 = vsub.f32 %v2555, %v2587
          %v2620 = vsub.f32 %v2556, %v2588
          %v2621 = vsub.f32 %v2557, %v2589
          %v2622 = vsub.f32 %v2558, %v2590
          %v2623 = vsub.f32 %v2559, %v2591
          %v2624 = vsub.f32 %v2560, %v2592
          %v2625 = vsub.f32 %v2561, %v2593
          %v2626 = vsub.f32 %v2562, %v2594
          %v2627 = vsub.f32 %v2563, %v2595
          %v2628 = vsub.f32 %v2564, %v2596
          %v2629 = vsub.f32 %v2565, %v2597
          %v2630 = vsub.f32 %v2566, %v2598
          %v2631 = vsub.f32 %v2567, %v2599
          %v2632 = vsub.f32 %v2568, %v2600
          %v2633 = vsub.f32 %v2569, %v2601
          %v2634 = vsub.f32 %v2570, %v2602
          %v2635 = vsub.f32 %v2571, %v2603
          %v2636 = vsub.f32 %v2572, %v2604
          %v2637 = vsub.f32 %v2573, %v2605
          %v2638 = vsub.f32 %v2574, %v2606
          %v2639 = vsub.f32 %v2575, %v2607
          %v2640 = vsub.f32 %v2576, %v2608
          %v2641 = vsub.f32 %v2577, %v2609
          %v2642 = vsub.f32 %v2578, %v2610
          %v2643 = vsub.f32 %v2579, %v2611
          %2644 = vst.msk [vmem:[%s6] sm:$0xff] %vm2515, %v2612
          %2645 = vst.msk [vmem:[%s6 + $0x8] sm:$0xff] %vm2515, %v2613
          %2646 = vst.msk [vmem:[%s6 + $0x10] sm:$0xff] %vm2515, %v2614
          %2647 = vst.msk [vmem:[%s6 + $0x18] sm:$0xff] %vm2515, %v2615
          %2648 = vst.msk [vmem:[%s6 + $0x20] sm:$0xff] %vm2515, %v2616
          %2649 = vst.msk [vmem:[%s6 + $0x28] sm:$0xff] %vm2515, %v2617
          %2650 = vst.msk [vmem:[%s6 + $0x30] sm:$0xff] %vm2515, %v2618
          %2651 = vst.msk [vmem:[%s6 + $0x38] sm:$0xff] %vm2515, %v2619
          %2652 = vst.msk [vmem:[%s6 + $0x40] sm:$0xff] %vm2515, %v2620
          %2653 = vst.msk [vmem:[%s6 + $0x48] sm:$0xff] %vm2515, %v2621
          %2654 = vst.msk [vmem:[%s6 + $0x50] sm:$0xff] %vm2515, %v2622
          %2655 = vst.msk [vmem:[%s6 + $0x58] sm:$0xff] %vm2515, %v2623
          %2656 = vst.msk [vmem:[%s6 + $0x60] sm:$0xff] %vm2515, %v2624
          %2657 = vst.msk [vmem:[%s6 + $0x68] sm:$0xff] %vm2515, %v2625
          %2658 = vst.msk [vmem:[%s6 + $0x70] sm:$0xff] %vm2515, %v2626
          %2659 = vst.msk [vmem:[%s6 + $0x78] sm:$0xff] %vm2515, %v2627
          %2660 = vst.msk [vmem:[%s6 + $0x80] sm:$0xff] %vm2515, %v2628
          %2661 = vst.msk [vmem:[%s6 + $0x88] sm:$0xff] %vm2515, %v2629
          %2662 = vst.msk [vmem:[%s6 + $0x90] sm:$0xff] %vm2515, %v2630
          %2663 = vst.msk [vmem:[%s6 + $0x98] sm:$0xff] %vm2515, %v2631
          %2664 = vst.msk [vmem:[%s6 + $0xa0] sm:$0xff] %vm2515, %v2632
          %2665 = vst.msk [vmem:[%s6 + $0xa8] sm:$0xff] %vm2515, %v2633
          %2666 = vst.msk [vmem:[%s6 + $0xb0] sm:$0xff] %vm2515, %v2634
          %2667 = vst.msk [vmem:[%s6 + $0xb8] sm:$0xff] %vm2515, %v2635
          %2668 = vst.msk [vmem:[%s6 + $0xc0] sm:$0xff] %vm2515, %v2636
          %2669 = vst.msk [vmem:[%s6 + $0xc8] sm:$0xff] %vm2515, %v2637
          %2670 = vst.msk [vmem:[%s6 + $0xd0] sm:$0xff] %vm2515, %v2638
          %2671 = vst.msk [vmem:[%s6 + $0xd8] sm:$0xff] %vm2515, %v2639
          %2672 = vst.msk [vmem:[%s6 + $0xe0] sm:$0xff] %vm2515, %v2640
          %2673 = vst.msk [vmem:[%s6 + $0xe8] sm:$0xff] %vm2515, %v2641
          %2674 = vst.msk [vmem:[%s6 + $0xf0] sm:$0xff] %vm2515, %v2642
          %2675 = vst.msk [vmem:[%s6 + $0xf8] sm:$0xff] %vm2515, %v2643
        $region75: #{fused_mul_conv_bn.2} parent=54 // pred_fallthru
          _
        %p2676 = scmp.lt.s32.totalorder %s22, 0
        %s2677 = scalar_select %p2676, %s22, 0
        %s2678 = smul.addr %s2677, 32
        %s2679 = smul.addr %s2678, 8
        %s2680 = scalar_lea.vmem %s4, %s2679
        // Predicated region
        $region76: #{fused_mul_conv_bn.2} parent=54 // pred_check
          %p2681 = pneg %p144
        $region77: #{fused_mul_conv_bn.2} parent=54 // pred_check_branch
          %2683 = sbr.rel (%p2681) target = $region79
        $region78: #{fused_mul_conv_bn.2} parent=54 // pred_region
          _
        $region79: #{fused_mul_conv_bn.2} parent=54 // pred_fallthru
          _
        // Predicated region
        $region80: #{fused_mul_conv_bn.2} parent=54 // pred_check
          %p2684 = pneg %p165
        $region81: #{fused_mul_conv_bn.2} parent=54 // pred_check_branch
          %2686 = sbr.rel (%p2684) target = $region83
        $region82: #{fused_mul_conv_bn.2} parent=54 // pred_region
          _
        $region83: #{fused_mul_conv_bn.2} parent=54 // pred_fallthru
          _
        // Predicated region
        $region84: #{fused_mul_conv_bn.2} parent=54 // pred_check
          %p2687 = pneg %p186
        $region85: #{fused_mul_conv_bn.2} parent=54 // pred_check_branch
          %2689 = sbr.rel (%p2687) target = $region87
        $region86: #{fused_mul_conv_bn.2} parent=54 // pred_region
          _
        $region87: #{fused_mul_conv_bn.2} parent=54 // pred_fallthru
          _
        // Predicated region
        $region88: #{fused_mul_conv_bn.2} parent=54 // pred_check
          %p2690 = pneg %p144
        $region89: #{fused_mul_conv_bn.2} parent=54 // pred_check_branch
          %2692 = sbr.rel (%p2690) target = $region91
        $region90: #{fused_mul_conv_bn.2} parent=54 // pred_region
          %p2693 = scmp.lt.s32.totalorder %s22, 0
          %s2694 = scalar_select %p2693, %s22, 0
          %s2695 = smul.addr %s2694, 32
          %s2696 = smul.addr %s2695, 8
          %s2697 = scalar_lea.vmem %s4, %s2696
        $region91: #{fused_mul_conv_bn.2} parent=54 // pred_fallthru
          _
        // Predicated region
        $region92: #{fused_mul_conv_bn.2} parent=54 // pred_check
          %p2698 = pneg %p165
        $region93: #{fused_mul_conv_bn.2} parent=54 // pred_check_branch
          %2700 = sbr.rel (%p2698) target = $region95
        $region94: #{fused_mul_conv_bn.2} parent=54 // pred_region
          _
        $region95: #{fused_mul_conv_bn.2} parent=54 // pred_fallthru
          _
        // Predicated region
        $region96: #{fused_mul_conv_bn.2} parent=54 // pred_check
          %p2701 = pneg %p186
        $region97: #{fused_mul_conv_bn.2} parent=54 // pred_check_branch
          %2703 = sbr.rel (%p2701) target = $region99
        $region98: #{fused_mul_conv_bn.2} parent=54 // pred_region
          _
        $region99: #{fused_mul_conv_bn.2} parent=54 // pred_fallthru
          _
      $region55: #{fused_mul_conv_bn.2} parent=5 // pred_fallthru
        _
      %p2704 = scmp.le.s32.totalorder 2, %s13
      // Predicated region
      $region100: #{fused_mul_conv_bn.2} parent=5 // pred_check
        %p2705 = pneg %p2704
      $region101: #{fused_mul_conv_bn.2} parent=5 // pred_check_branch
        %2707 = sbr.rel (%p2705) target = $region103
      $region102: #{fused_mul_conv_bn.2} parent=5 // pred_region
        %s2708 = ssub.s32 %s13, 2
      $region103: #{fused_mul_conv_bn.2} parent=5 // pred_fallthru
        _
    $region6: #{fused_mul_conv_bn.2} parent=1 // loop_footer
      %s17 = sadd.s32 1, %s13
    $region7: #{fused_mul_conv_bn.2} parent=1 // loop_footer_branch
      %12 = sbr.rel target = $region3
    $region8: #{fused_mul_conv_bn.2} parent=1 // loop_exit
      _

</llo_original>
